<compile_context>
chip_gen: v7x
topology: tpu7x:2x2x1
jax: 0.10.0
libtpu: 0.0.40
codegen_flags: <defaults>
</compile_context>

<pallas_src>
import numpy as np
import jax
import jax.numpy as jnp
from jax.experimental import pallas as pl
from jax.experimental.pallas import tpu as pltpu


def _round_up(x, m):
    return (x + m - 1) // m * m


def _fold_bn(gamma, beta, mean, var, eps=1e-5):
    scale = gamma / jnp.sqrt(var + eps)
    bias = beta - mean * scale
    return scale, bias


def _make_block_kernel(n_q, tm, margin, rel, cin, cout, k_pad, p_pad, l_total,
                       compute_dtype):
    """Fused BasicBlock kernel; every shape constant is baked in (static)."""
    w_slab = tm + 2 * margin        # lane width of the aligned per-tile slab
    k = 27 * cin                    # true contraction depth (27 taps x Cin)
    tail = l_total - margin - p_pad  # right margin width (== margin)

    def stacked_windows(slab):
        # slab: (cin, w_slab) f32 covering flat-padded positions
        # [q0 - margin, q0 + tm + margin).  The window for tap offset r is
        # slab[:, margin + r : margin + r + tm]; build it with a static XLU
        # roll (left-rotate by margin + r, jnp.roll semantics) followed by a
        # lane-aligned [:, :tm] slice, then stack all taps on the sublane axis
        # to form the single K-stacked matmul operand.
        wins = []
        for r in rel:
            shift = (-(margin + r)) % w_slab          # static
            wins.append(pltpu.roll(slab, shift=shift, axis=1)[:, :tm])
        if k_pad > k:                                  # zero rows pad K
            wins.append(jnp.zeros((k_pad - k, tm), jnp.float32))
        return jnp.concatenate(wins, axis=0).astype(compute_dtype)

    def kernel(x_ref, w1_ref, b1_ref, w2_ref, b2_ref, m_ref, o_ref, h_ref):
        # Zero ONLY the halo margins of h (they double as conv2's zero
        # padding); the interior [margin, margin + p_pad) is fully overwritten
        # by the masked conv1 stores below, every grid step.
        h_ref[:, 0:margin] = jnp.zeros((cout, margin), jnp.float32)
        h_ref[:, margin + p_pad:l_total] = jnp.zeros((cout, tail), jnp.float32)

        # hoisted loop invariants (JAX does not CSE broadcast_in_dim)
        w1 = w1_ref[...]
        w2 = w2_ref[...]
        b1 = jnp.broadcast_to(b1_ref[...], (cout, tm))
        b2 = jnp.broadcast_to(b2_ref[...], (cout, tm))

        # ---------- conv1 + bn1 (scale folded) + relu -> h interior ----------
        # TODO(synk): switch the unrolled qi loops to lax.fori_loop with pl.ds
        # offsets plus D-plane halo tiling once n_q / the volume grows (needed
        # for realistic ResNet sizes, especially on v7x's 64 MiB VMEM).
        for qi in range(n_q):
            q0 = qi * tm                                    # 128-aligned
            slab = x_ref[0, :, q0:q0 + w_slab]              # aligned slab load
            patches = stacked_windows(slab)                 # (k_pad, tm)
            acc = jnp.dot(w1, patches, preferred_element_type=jnp.float32)
            # mask zeroes garbage computed at padded border positions so they
            # act as conv2's zero padding
            y = jnp.maximum(acc + b1, 0.0) * m_ref[:, q0:q0 + tm]
            h_ref[:, margin + q0:margin + q0 + tm] = y

        # ------ conv2 + bn2 (scale folded) + identity residual + relu --------
        for qi in range(n_q):
            q0 = qi * tm
            slab = h_ref[:, q0:q0 + w_slab]
            patches = stacked_windows(slab)
            acc = jnp.dot(w2, patches, preferred_element_type=jnp.float32)
            y = acc + b2 + x_ref[0, :, margin + q0:margin + q0 + tm]
            o_ref[0, :, q0:q0 + tm] = jnp.maximum(y, 0.0)

    return kernel


def basic_block_forward(x_ncdhw, params, stride=1, dilation=1, tm_max=256,
                        compute_dtype=jnp.float32):
    """BasicBlock.forward with downsample=None (requires stride==1, Cin==Cout)."""
    if stride != 1:
        raise NotImplementedError(
            "downsample=None requires stride==1 for the identity residual "
            "(matches the PyTorch module's shape constraints).")
    # TODO(synk): training-mode BatchNorm3d (batch statistics) is not
    # implemented; inference-mode BN with running stats is folded into the
    # conv weights and a per-channel bias.

    w1, g1, b1, m1, v1 = (params[k] for k in ("w1", "g1", "b1", "m1", "v1"))
    w2, g2, b2, m2, v2 = (params[k] for k in ("w2", "g2", "b2", "m2", "v2"))

    N, C, D, H, W = x_ncdhw.shape
    Cout = w1.shape[0]
    assert Cout == C and w2.shape[0] == C, \
        "identity residual requires inplanes == planes"

    dil = dilation
    Dp, Hp, Wp = D + 2 * dil, H + 2 * dil, W + 2 * dil
    P = Dp * Hp * Wp                         # flat padded spatial size
    M0 = dil * (Hp * Wp + Wp + 1)            # max |tap offset| in flat coords
    MARGIN = _round_up(M0, 128)              # lane-aligned halo on both sides
    TM = min(_round_up(tm_max, 128), _round_up(P, 128))    # lane tile (>=128)
    P_pad = _round_up(P, TM)
    L = MARGIN + P_pad + MARGIN
    n_q = P_pad // TM

    K = 27 * C
    K_pad = _round_up(K, 16)                 # sublane-pack friendly (bf16/f32)

    # ---- fold BN scale into the weights; flatten taps to (Cout, 27*C) -------
    scale1, bias1 = _fold_bn(g1, b1, m1, v1)
    scale2, bias2 = _fold_bn(g2, b2, m2, v2)
    # (Cout, Cin, kd, kh, kw) -> (27, Cout, Cin), t = kd*9 + kh*3 + kw
    w1_taps = jnp.transpose(w1, (2, 3, 4, 0, 1)).reshape(27, Cout, C)
    w2_taps = jnp.transpose(w2, (2, 3, 4, 0, 1)).reshape(27, Cout, C)
    w1_taps = w1_taps * scale1[None, :, None]
    w2_taps = w2_taps * scale2[None, :, None]
    # (27, Cout, C) -> (Cout, 27*C) matching the (27*C, TM) stacked operand
    w1_flat = jnp.transpose(w1_taps, (1, 0, 2)).reshape(Cout, K)
    w2_flat = jnp.transpose(w2_taps, (1, 0, 2)).reshape(Cout, K)
    w1_flat = jnp.pad(w1_flat, ((0, 0), (0, K_pad - K))).astype(compute_dtype)
    w2_flat = jnp.pad(w2_flat, ((0, 0), (0, K_pad - K))).astype(compute_dtype)
    b1_col = bias1.reshape(Cout, 1).astype(jnp.float32)
    b2_col = bias2.reshape(Cout, 1).astype(jnp.float32)

    # ---- flat-padded input: channels on sublanes, flat spatial on lanes -----
    xp = jnp.pad(x_ncdhw, ((0, 0), (0, 0),
                           (dil, dil), (dil, dil), (dil, dil)))
    x_ext = jnp.pad(xp.reshape(N, C, P).astype(jnp.float32),
                    ((0, 0), (0, 0), (MARGIN, L - MARGIN - P)))

    # interior mask: 1 where a flat-padded position is a real output voxel
    interior = jnp.zeros((Dp, Hp, Wp), jnp.float32)
    interior = interior.at[dil:dil + D, dil:dil + H, dil:dil + W].set(1.0)
    mask = jnp.pad(interior.reshape(1, P), ((0, 0), (0, P_pad - P)))

    # static tap offsets (kd, kh, kw row-major — matches the weight reshape)
    rel = [((kd - 1) * Hp * Wp + (kh - 1) * Wp + (kw - 1)) * dil
           for kd in range(3) for kh in range(3) for kw in range(3)]

    kernel = _make_block_kernel(n_q, TM, MARGIN, rel, C, Cout, K_pad, P_pad,
                                L, compute_dtype)

    flops = 2 * (2 * 27 * C * Cout * P_pad) * N
    w_bytes = (w1_flat.size + w2_flat.size) * jnp.dtype(compute_dtype).itemsize
    bytes_accessed = int(4 * (x_ext.size + mask.size + N * Cout * P_pad
                              + 2 * Cout) + w_bytes)

    # explicit scoped-VMEM budget (matters once volumes grow, esp. on v7x)
    need = 4 * (2 * C * L + 2 * Cout * P_pad + Cout * L + K_pad * TM
                + P_pad + 2 * Cout) + 2 * w_bytes
    vmem_limit = int(min(max(32 * 1024 * 1024, 2 * need), 64 * 1024 * 1024))

    out_flat = pl.pallas_call(
        kernel,
        out_shape=jax.ShapeDtypeStruct((N, Cout, P_pad), jnp.float32),
        grid=(N,),
        in_specs=[
            pl.BlockSpec((1, C, L), lambda n: (n, 0, 0)),      # x (flat padded)
            pl.BlockSpec((Cout, K_pad), lambda n: (0, 0)),     # w1 (BN folded)
            pl.BlockSpec((Cout, 1), lambda n: (0, 0)),         # bias1
            pl.BlockSpec((Cout, K_pad), lambda n: (0, 0)),     # w2 (BN folded)
            pl.BlockSpec((Cout, 1), lambda n: (0, 0)),         # bias2
            pl.BlockSpec((1, P_pad), lambda n: (0, 0)),        # interior mask
        ],
        out_specs=pl.BlockSpec((1, Cout, P_pad), lambda n: (n, 0, 0)),
        scratch_shapes=[pltpu.VMEM((Cout, L), jnp.float32)],   # intermediate h
        compiler_params=pltpu.CompilerParams(
            dimension_semantics=("parallel",),
            vmem_limit_bytes=vmem_limit),
        cost_estimate=pl.CostEstimate(
            flops=flops, transcendentals=0, bytes_accessed=bytes_accessed),
    )(x_ext, w1_flat, b1_col, w2_flat, b2_col, mask)

    # flat padded coords -> NCDHW (drop tile tail and the padded ring)
    out = out_flat[:, :, :P].reshape(N, Cout, Dp, Hp, Wp)
    return out[:, :, dil:dil + D, dil:dil + H, dil:dil + W]


# ----------------------------- pure-JAX reference ----------------------------

def _ref_forward(x, params, stride=1, dilation=1, eps=1e-5):
    def conv(inp, w, s):
        return jax.lax.conv_general_dilated(
            inp, w, window_strides=(s, s, s),
            padding=[(dilation, dilation)] * 3,
            rhs_dilation=(dilation, dilation, dilation),
            dimension_numbers=("NCDHW", "OIDHW", "NCDHW"),
            precision=jax.lax.Precision.HIGHEST)

    def bn(inp, g, b, m, v):
        sh = (1, -1, 1, 1, 1)
        return (inp - m.reshape(sh)) / jnp.sqrt(v.reshape(sh) + eps) \
            * g.reshape(sh) + b.reshape(sh)

    out = conv(x, params["w1"], stride)
    out = bn(out, params["g1"], params["b1"], params["m1"], params["v1"])
    out = jnp.maximum(out, 0.0)
    out = conv(out, params["w2"], 1)
    out = bn(out, params["g2"], params["b2"], params["m2"], params["v2"])
    out = out + x
    return jnp.maximum(out, 0.0)


# ------------------------------------ main ------------------------------------

if __name__ == "__main__":
    N, C, D, H, W = 2, 8, 8, 8, 8            # inplanes == planes == 8
    stride, dilation = 1, 1

    key = jax.random.PRNGKey(0)
    ks = jax.random.split(key, 11)

    params = {
        "w1": jax.random.normal(ks[0], (C, C, 3, 3, 3), jnp.float32) * 0.1,
        "g1": jax.random.uniform(ks[1], (C,), jnp.float32, 0.5, 1.5),
        "b1": jax.random.normal(ks[2], (C,), jnp.float32) * 0.1,
        "m1": jax.random.normal(ks[3], (C,), jnp.float32) * 0.1,
        "v1": jax.random.uniform(ks[4], (C,), jnp.float32, 0.5, 1.5),
        "w2": jax.random.normal(ks[5], (C, C, 3, 3, 3), jnp.float32) * 0.1,
        "g2": jax.random.uniform(ks[6], (C,), jnp.float32, 0.5, 1.5),
        "b2": jax.random.normal(ks[7], (C,), jnp.float32) * 0.1,
        "m2": jax.random.normal(ks[8], (C,), jnp.float32) * 0.1,
        "v2": jax.random.uniform(ks[9], (C,), jnp.float32, 0.5, 1.5),
    }
    x = jax.random.normal(ks[10], (N, C, D, H, W), jnp.float32)

    fwd = jax.jit(lambda xx: basic_block_forward(xx, params, stride, dilation))
    out = jax.block_until_ready(fwd(x))

    ref = jax.block_until_ready(_ref_forward(x, params, stride, dilation))
    np.testing.assert_allclose(np.asarray(out), np.asarray(ref),
                               rtol=2e-2, atol=2e-2)

    assert out.shape == (N, C, D, H, W)
    print("KERNEL_OK")
</pallas_src>

<mosaic_0001>
module attributes {stable_mosaic.version = 11 : i64} {
  func.func @kernel(%arg0: i32, %arg1: memref<1x8x1280xf32, #tpu.memory_space<vmem>>, %arg2: memref<8x224xf32, #tpu.memory_space<vmem>>, %arg3: memref<8x1xf32, #tpu.memory_space<vmem>>, %arg4: memref<8x224xf32, #tpu.memory_space<vmem>>, %arg5: memref<8x1xf32, #tpu.memory_space<vmem>>, %arg6: memref<1x1024xf32, #tpu.memory_space<vmem>>, %arg7: memref<1x8x1024xf32, #tpu.memory_space<vmem>>, %arg8: memref<8x1280xf32, #tpu.memory_space<vmem>>) attributes {dimension_semantics = [#tpu.dimension_semantics<parallel>], iteration_bounds = array<i64: 2>, scalar_prefetch = 0 : i64, scratch_operands = 1 : i64, tpu.core_type = #tpu.core_type<tc>, window_params = [{transform_indices = @transform_0, window_bounds = array<i64: 1, 8, 1280>}, {pipeline_mode = #tpu.pipeline_mode<synchronous>, transform_indices = @transform_1, window_bounds = array<i64: 8, 224>}, {pipeline_mode = #tpu.pipeline_mode<synchronous>, transform_indices = @transform_2, window_bounds = array<i64: 8, 1>}, {pipeline_mode = #tpu.pipeline_mode<synchronous>, transform_indices = @transform_3, window_bounds = array<i64: 8, 224>}, {pipeline_mode = #tpu.pipeline_mode<synchronous>, transform_indices = @transform_4, window_bounds = array<i64: 8, 1>}, {pipeline_mode = #tpu.pipeline_mode<synchronous>, transform_indices = @transform_5, window_bounds = array<i64: 1, 1024>}, {transform_indices = @transform_6, window_bounds = array<i64: 1, 8, 1024>}]} {
    %cst = arith.constant 0.000000e+00 : f32
    %0 = vector.broadcast %cst : f32 to vector<8x128xf32>
    %c0 = arith.constant 0 : index
    %c0_0 = arith.constant 0 : index
    %1 = vector.load %arg8[%c0, %c0_0] : memref<8x1280xf32, #tpu.memory_space<vmem>>, vector<8x128xf32>
    tpu.vector_store %arg8[%c0, %c0_0], %0 {strides = array<i32>} : memref<8x1280xf32, #tpu.memory_space<vmem>>, vector<8x128xf32>,
    %cst_1 = arith.constant 0.000000e+00 : f32
    %2 = vector.broadcast %cst_1 : f32 to vector<8x128xf32>
    %c0_2 = arith.constant 0 : index
    %c1152 = arith.constant 1152 : index
    %3 = vector.load %arg8[%c0_2, %c1152] : memref<8x1280xf32, #tpu.memory_space<vmem>>, vector<8x128xf32>
    tpu.vector_store %arg8[%c0_2, %c1152], %2 {strides = array<i32>} : memref<8x1280xf32, #tpu.memory_space<vmem>>, vector<8x128xf32>,
    %c0_3 = arith.constant 0 : index
    %c0_4 = arith.constant 0 : index
    %4 = vector.load %arg2[%c0_3, %c0_4] : memref<8x224xf32, #tpu.memory_space<vmem>>, vector<8x224xf32>
    %c0_5 = arith.constant 0 : index
    %c0_6 = arith.constant 0 : index
    %5 = vector.load %arg4[%c0_5, %c0_6] : memref<8x224xf32, #tpu.memory_space<vmem>>, vector<8x224xf32>
    %c0_7 = arith.constant 0 : index
    %c0_8 = arith.constant 0 : index
    %6 = vector.load %arg3[%c0_7, %c0_8] : memref<8x1xf32, #tpu.memory_space<vmem>>, vector<8x1xf32>
    %7 = vector.shape_cast %6 : vector<8x1xf32> to vector<8x1xf32>
    %8 = vector.broadcast %7 : vector<8x1xf32> to vector<8x256xf32>
    %c0_9 = arith.constant 0 : index
    %c0_10 = arith.constant 0 : index
    %9 = vector.load %arg5[%c0_9, %c0_10] : memref<8x1xf32, #tpu.memory_space<vmem>>, vector<8x1xf32>
    %10 = vector.shape_cast %9 : vector<8x1xf32> to vector<8x1xf32>
    %11 = vector.broadcast %10 : vector<8x1xf32> to vector<8x256xf32>
    %c0_11 = arith.constant 0 : index
    %c0_12 = arith.constant 0 : index
    %c0_13 = arith.constant 0 : index
    %12 = vector.load %arg1[%c0_11, %c0_12, %c0_13] : memref<1x8x1280xf32, #tpu.memory_space<vmem>>, vector<1x8x512xf32>
    %13 = vector.shape_cast %12 : vector<1x8x512xf32> to vector<8x512xf32>
    %c495_i32 = arith.constant 495 : i32
    %14 = tpu.dynamic_rotate %13 by %c495_i32 dim 1 : vector<8x512xf32>, i32 -> vector<8x512xf32>
    %15 = vector.extract_strided_slice %14 {offsets = [0, 0], sizes = [8, 256], strides = [1, 1]} : vector<8x512xf32> to vector<8x256xf32>
    %c494_i32 = arith.constant 494 : i32
    %16 = tpu.dynamic_rotate %13 by %c494_i32 dim 1 : vector<8x512xf32>, i32 -> vector<8x512xf32>
    %17 = vector.extract_strided_slice %16 {offsets = [0, 0], sizes = [8, 256], strides = [1, 1]} : vector<8x512xf32> to vector<8x256xf32>
    %c493_i32 = arith.constant 493 : i32
    %18 = tpu.dynamic_rotate %13 by %c493_i32 dim 1 : vector<8x512xf32>, i32 -> vector<8x512xf32>
    %19 = vector.extract_strided_slice %18 {offsets = [0, 0], sizes = [8, 256], strides = [1, 1]} : vector<8x512xf32> to vector<8x256xf32>
    %c485_i32 = arith.constant 485 : i32
    %20 = tpu.dynamic_rotate %13 by %c485_i32 dim 1 : vector<8x512xf32>, i32 -> vector<8x512xf32>
    %21 = vector.extract_strided_slice %20 {offsets = [0, 0], sizes = [8, 256], strides = [1, 1]} : vector<8x512xf32> to vector<8x256xf32>
    %c484_i32 = arith.constant 484 : i32
    %22 = tpu.dynamic_rotate %13 by %c484_i32 dim 1 : vector<8x512xf32>, i32 -> vector<8x512xf32>
    %23 = vector.extract_strided_slice %22 {offsets = [0, 0], sizes = [8, 256], strides = [1, 1]} : vector<8x512xf32> to vector<8x256xf32>
    %c483_i32 = arith.constant 483 : i32
    %24 = tpu.dynamic_rotate %13 by %c483_i32 dim 1 : vector<8x512xf32>, i32 -> vector<8x512xf32>
    %25 = vector.extract_strided_slice %24 {offsets = [0, 0], sizes = [8, 256], strides = [1, 1]} : vector<8x512xf32> to vector<8x256xf32>
    %c475_i32 = arith.constant 475 : i32
    %26 = tpu.dynamic_rotate %13 by %c475_i32 dim 1 : vector<8x512xf32>, i32 -> vector<8x512xf32>
    %27 = vector.extract_strided_slice %26 {offsets = [0, 0], sizes = [8, 256], strides = [1, 1]} : vector<8x512xf32> to vector<8x256xf32>
    %c474_i32 = arith.constant 474 : i32
    %28 = tpu.dynamic_rotate %13 by %c474_i32 dim 1 : vector<8x512xf32>, i32 -> vector<8x512xf32>
    %29 = vector.extract_strided_slice %28 {offsets = [0, 0], sizes = [8, 256], strides = [1, 1]} : vector<8x512xf32> to vector<8x256xf32>
    %c473_i32 = arith.constant 473 : i32
    %30 = tpu.dynamic_rotate %13 by %c473_i32 dim 1 : vector<8x512xf32>, i32 -> vector<8x512xf32>
    %31 = vector.extract_strided_slice %30 {offsets = [0, 0], sizes = [8, 256], strides = [1, 1]} : vector<8x512xf32> to vector<8x256xf32>
    %c395_i32 = arith.constant 395 : i32
    %32 = tpu.dynamic_rotate %13 by %c395_i32 dim 1 : vector<8x512xf32>, i32 -> vector<8x512xf32>
    %33 = vector.extract_strided_slice %32 {offsets = [0, 0], sizes = [8, 256], strides = [1, 1]} : vector<8x512xf32> to vector<8x256xf32>
    %c394_i32 = arith.constant 394 : i32
    %34 = tpu.dynamic_rotate %13 by %c394_i32 dim 1 : vector<8x512xf32>, i32 -> vector<8x512xf32>
    %35 = vector.extract_strided_slice %34 {offsets = [0, 0], sizes = [8, 256], strides = [1, 1]} : vector<8x512xf32> to vector<8x256xf32>
    %c393_i32 = arith.constant 393 : i32
    %36 = tpu.dynamic_rotate %13 by %c393_i32 dim 1 : vector<8x512xf32>, i32 -> vector<8x512xf32>
    %37 = vector.extract_strided_slice %36 {offsets = [0, 0], sizes = [8, 256], strides = [1, 1]} : vector<8x512xf32> to vector<8x256xf32>
    %c385_i32 = arith.constant 385 : i32
    %38 = tpu.dynamic_rotate %13 by %c385_i32 dim 1 : vector<8x512xf32>, i32 -> vector<8x512xf32>
    %39 = vector.extract_strided_slice %38 {offsets = [0, 0], sizes = [8, 256], strides = [1, 1]} : vector<8x512xf32> to vector<8x256xf32>
    %c384_i32 = arith.constant 384 : i32
    %40 = tpu.dynamic_rotate %13 by %c384_i32 dim 1 : vector<8x512xf32>, i32 -> vector<8x512xf32>
    %41 = vector.extract_strided_slice %40 {offsets = [0, 0], sizes = [8, 256], strides = [1, 1]} : vector<8x512xf32> to vector<8x256xf32>
    %c383_i32 = arith.constant 383 : i32
    %42 = tpu.dynamic_rotate %13 by %c383_i32 dim 1 : vector<8x512xf32>, i32 -> vector<8x512xf32>
    %43 = vector.extract_strided_slice %42 {offsets = [0, 0], sizes = [8, 256], strides = [1, 1]} : vector<8x512xf32> to vector<8x256xf32>
    %c375_i32 = arith.constant 375 : i32
    %44 = tpu.dynamic_rotate %13 by %c375_i32 dim 1 : vector<8x512xf32>, i32 -> vector<8x512xf32>
    %45 = vector.extract_strided_slice %44 {offsets = [0, 0], sizes = [8, 256], strides = [1, 1]} : vector<8x512xf32> to vector<8x256xf32>
    %c374_i32 = arith.constant 374 : i32
    %46 = tpu.dynamic_rotate %13 by %c374_i32 dim 1 : vector<8x512xf32>, i32 -> vector<8x512xf32>
    %47 = vector.extract_strided_slice %46 {offsets = [0, 0], sizes = [8, 256], strides = [1, 1]} : vector<8x512xf32> to vector<8x256xf32>
    %c373_i32 = arith.constant 373 : i32
    %48 = tpu.dynamic_rotate %13 by %c373_i32 dim 1 : vector<8x512xf32>, i32 -> vector<8x512xf32>
    %49 = vector.extract_strided_slice %48 {offsets = [0, 0], sizes = [8, 256], strides = [1, 1]} : vector<8x512xf32> to vector<8x256xf32>
    %c295_i32 = arith.constant 295 : i32
    %50 = tpu.dynamic_rotate %13 by %c295_i32 dim 1 : vector<8x512xf32>, i32 -> vector<8x512xf32>
    %51 = vector.extract_strided_slice %50 {offsets = [0, 0], sizes = [8, 256], strides = [1, 1]} : vector<8x512xf32> to vector<8x256xf32>
    %c294_i32 = arith.constant 294 : i32
    %52 = tpu.dynamic_rotate %13 by %c294_i32 dim 1 : vector<8x512xf32>, i32 -> vector<8x512xf32>
    %53 = vector.extract_strided_slice %52 {offsets = [0, 0], sizes = [8, 256], strides = [1, 1]} : vector<8x512xf32> to vector<8x256xf32>
    %c293_i32 = arith.constant 293 : i32
    %54 = tpu.dynamic_rotate %13 by %c293_i32 dim 1 : vector<8x512xf32>, i32 -> vector<8x512xf32>
    %55 = vector.extract_strided_slice %54 {offsets = [0, 0], sizes = [8, 256], strides = [1, 1]} : vector<8x512xf32> to vector<8x256xf32>
    %c285_i32 = arith.constant 285 : i32
    %56 = tpu.dynamic_rotate %13 by %c285_i32 dim 1 : vector<8x512xf32>, i32 -> vector<8x512xf32>
    %57 = vector.extract_strided_slice %56 {offsets = [0, 0], sizes = [8, 256], strides = [1, 1]} : vector<8x512xf32> to vector<8x256xf32>
    %c284_i32 = arith.constant 284 : i32
    %58 = tpu.dynamic_rotate %13 by %c284_i32 dim 1 : vector<8x512xf32>, i32 -> vector<8x512xf32>
    %59 = vector.extract_strided_slice %58 {offsets = [0, 0], sizes = [8, 256], strides = [1, 1]} : vector<8x512xf32> to vector<8x256xf32>
    %c283_i32 = arith.constant 283 : i32
    %60 = tpu.dynamic_rotate %13 by %c283_i32 dim 1 : vector<8x512xf32>, i32 -> vector<8x512xf32>
    %61 = vector.extract_strided_slice %60 {offsets = [0, 0], sizes = [8, 256], strides = [1, 1]} : vector<8x512xf32> to vector<8x256xf32>
    %c275_i32 = arith.constant 275 : i32
    %62 = tpu.dynamic_rotate %13 by %c275_i32 dim 1 : vector<8x512xf32>, i32 -> vector<8x512xf32>
    %63 = vector.extract_strided_slice %62 {offsets = [0, 0], sizes = [8, 256], strides = [1, 1]} : vector<8x512xf32> to vector<8x256xf32>
    %c274_i32 = arith.constant 274 : i32
    %64 = tpu.dynamic_rotate %13 by %c274_i32 dim 1 : vector<8x512xf32>, i32 -> vector<8x512xf32>
    %65 = vector.extract_strided_slice %64 {offsets = [0, 0], sizes = [8, 256], strides = [1, 1]} : vector<8x512xf32> to vector<8x256xf32>
    %c273_i32 = arith.constant 273 : i32
    %66 = tpu.dynamic_rotate %13 by %c273_i32 dim 1 : vector<8x512xf32>, i32 -> vector<8x512xf32>
    %67 = vector.extract_strided_slice %66 {offsets = [0, 0], sizes = [8, 256], strides = [1, 1]} : vector<8x512xf32> to vector<8x256xf32>
    %cst_14 = arith.constant 0.000000e+00 : f32
    %68 = vector.broadcast %cst_14 : f32 to vector<8x256xf32>
    %69 = tpu.concatenate %15, %17, %19, %21, %23, %25, %27, %29, %31, %33, %35, %37, %39, %41, %43, %45 in 0 : vector<8x256xf32>, vector<8x256xf32>, vector<8x256xf32>, vector<8x256xf32>, vector<8x256xf32>, vector<8x256xf32>, vector<8x256xf32>, vector<8x256xf32>, vector<8x256xf32>, vector<8x256xf32>, vector<8x256xf32>, vector<8x256xf32>, vector<8x256xf32>, vector<8x256xf32>, vector<8x256xf32>, vector<8x256xf32> -> vector<128x256xf32>
    %70 = tpu.concatenate %47, %49, %51, %53, %55, %57, %59, %61, %63, %65, %67, %68 in 0 : vector<8x256xf32>, vector<8x256xf32>, vector<8x256xf32>, vector<8x256xf32>, vector<8x256xf32>, vector<8x256xf32>, vector<8x256xf32>, vector<8x256xf32>, vector<8x256xf32>, vector<8x256xf32>, vector<8x256xf32>, vector<8x256xf32> -> vector<96x256xf32>
    %71 = tpu.concatenate %69, %70 in 0 : vector<128x256xf32>, vector<96x256xf32> -> vector<224x256xf32>
    %cst_15 = arith.constant dense<0.000000e+00> : vector<8x256xf32>
    %72 = tpu.matmul %4, %71, %cst_15 {dimension_numbers = #tpu.dot_dimension_numbers<[1], [0], [0], [1], [0, 0, 1, 1], [], []>} : vector<8x224xf32>, vector<224x256xf32>, vector<8x256xf32> -> vector<8x256xf32>
    %73 = arith.addf %72, %8 : vector<8x256xf32>
    %cst_16 = arith.constant 0.000000e+00 : f32
    %74 = vector.broadcast %cst_16 : f32 to vector<8x256xf32>
    %75 = arith.maximumf %73, %74 : vector<8x256xf32>
    %c0_17 = arith.constant 0 : index
    %c0_18 = arith.constant 0 : index
    %76 = vector.load %arg6[%c0_17, %c0_18] : memref<1x1024xf32, #tpu.memory_space<vmem>>, vector<1x256xf32>
    %77 = vector.broadcast %76 : vector<1x256xf32> to vector<8x256xf32>
    %78 = arith.mulf %75, %77 : vector<8x256xf32>
    %c0_19 = arith.constant 0 : index
    %c128 = arith.constant 128 : index
    %79 = vector.load %arg8[%c0_19, %c128] : memref<8x1280xf32, #tpu.memory_space<vmem>>, vector<8x256xf32>
    tpu.vector_store %arg8[%c0_19, %c128], %78 {strides = array<i32>} : memref<8x1280xf32, #tpu.memory_space<vmem>>, vector<8x256xf32>,
    %c0_20 = arith.constant 0 : index
    %c0_21 = arith.constant 0 : index
    %c256 = arith.constant 256 : index
    %80 = vector.load %arg1[%c0_20, %c0_21, %c256] : memref<1x8x1280xf32, #tpu.memory_space<vmem>>, vector<1x8x512xf32>
    %81 = vector.shape_cast %80 : vector<1x8x512xf32> to vector<8x512xf32>
    %c495_i32_22 = arith.constant 495 : i32
    %82 = tpu.dynamic_rotate %81 by %c495_i32_22 dim 1 : vector<8x512xf32>, i32 -> vector<8x512xf32>
    %83 = vector.extract_strided_slice %82 {offsets = [0, 0], sizes = [8, 256], strides = [1, 1]} : vector<8x512xf32> to vector<8x256xf32>
    %c494_i32_23 = arith.constant 494 : i32
    %84 = tpu.dynamic_rotate %81 by %c494_i32_23 dim 1 : vector<8x512xf32>, i32 -> vector<8x512xf32>
    %85 = vector.extract_strided_slice %84 {offsets = [0, 0], sizes = [8, 256], strides = [1, 1]} : vector<8x512xf32> to vector<8x256xf32>
    %c493_i32_24 = arith.constant 493 : i32
    %86 = tpu.dynamic_rotate %81 by %c493_i32_24 dim 1 : vector<8x512xf32>, i32 -> vector<8x512xf32>
    %87 = vector.extract_strided_slice %86 {offsets = [0, 0], sizes = [8, 256], strides = [1, 1]} : vector<8x512xf32> to vector<8x256xf32>
    %c485_i32_25 = arith.constant 485 : i32
    %88 = tpu.dynamic_rotate %81 by %c485_i32_25 dim 1 : vector<8x512xf32>, i32 -> vector<8x512xf32>
    %89 = vector.extract_strided_slice %88 {offsets = [0, 0], sizes = [8, 256], strides = [1, 1]} : vector<8x512xf32> to vector<8x256xf32>
    %c484_i32_26 = arith.constant 484 : i32
    %90 = tpu.dynamic_rotate %81 by %c484_i32_26 dim 1 : vector<8x512xf32>, i32 -> vector<8x512xf32>
    %91 = vector.extract_strided_slice %90 {offsets = [0, 0], sizes = [8, 256], strides = [1, 1]} : vector<8x512xf32> to vector<8x256xf32>
    %c483_i32_27 = arith.constant 483 : i32
    %92 = tpu.dynamic_rotate %81 by %c483_i32_27 dim 1 : vector<8x512xf32>, i32 -> vector<8x512xf32>
    %93 = vector.extract_strided_slice %92 {offsets = [0, 0], sizes = [8, 256], strides = [1, 1]} : vector<8x512xf32> to vector<8x256xf32>
    %c475_i32_28 = arith.constant 475 : i32
    %94 = tpu.dynamic_rotate %81 by %c475_i32_28 dim 1 : vector<8x512xf32>, i32 -> vector<8x512xf32>
    %95 = vector.extract_strided_slice %94 {offsets = [0, 0], sizes = [8, 256], strides = [1, 1]} : vector<8x512xf32> to vector<8x256xf32>
    %c474_i32_29 = arith.constant 474 : i32
    %96 = tpu.dynamic_rotate %81 by %c474_i32_29 dim 1 : vector<8x512xf32>, i32 -> vector<8x512xf32>
    %97 = vector.extract_strided_slice %96 {offsets = [0, 0], sizes = [8, 256], strides = [1, 1]} : vector<8x512xf32> to vector<8x256xf32>
    %c473_i32_30 = arith.constant 473 : i32
    %98 = tpu.dynamic_rotate %81 by %c473_i32_30 dim 1 : vector<8x512xf32>, i32 -> vector<8x512xf32>
    %99 = vector.extract_strided_slice %98 {offsets = [0, 0], sizes = [8, 256], strides = [1, 1]} : vector<8x512xf32> to vector<8x256xf32>
    %c395_i32_31 = arith.constant 395 : i32
    %100 = tpu.dynamic_rotate %81 by %c395_i32_31 dim 1 : vector<8x512xf32>, i32 -> vector<8x512xf32>
    %101 = vector.extract_strided_slice %100 {offsets = [0, 0], sizes = [8, 256], strides = [1, 1]} : vector<8x512xf32> to vector<8x256xf32>
    %c394_i32_32 = arith.constant 394 : i32
    %102 = tpu.dynamic_rotate %81 by %c394_i32_32 dim 1 : vector<8x512xf32>, i32 -> vector<8x512xf32>
    %103 = vector.extract_strided_slice %102 {offsets = [0, 0], sizes = [8, 256], strides = [1, 1]} : vector<8x512xf32> to vector<8x256xf32>
    %c393_i32_33 = arith.constant 393 : i32
    %104 = tpu.dynamic_rotate %81 by %c393_i32_33 dim 1 : vector<8x512xf32>, i32 -> vector<8x512xf32>
    %105 = vector.extract_strided_slice %104 {offsets = [0, 0], sizes = [8, 256], strides = [1, 1]} : vector<8x512xf32> to vector<8x256xf32>
    %c385_i32_34 = arith.constant 385 : i32
    %106 = tpu.dynamic_rotate %81 by %c385_i32_34 dim 1 : vector<8x512xf32>, i32 -> vector<8x512xf32>
    %107 = vector.extract_strided_slice %106 {offsets = [0, 0], sizes = [8, 256], strides = [1, 1]} : vector<8x512xf32> to vector<8x256xf32>
    %c384_i32_35 = arith.constant 384 : i32
    %108 = tpu.dynamic_rotate %81 by %c384_i32_35 dim 1 : vector<8x512xf32>, i32 -> vector<8x512xf32>
    %109 = vector.extract_strided_slice %108 {offsets = [0, 0], sizes = [8, 256], strides = [1, 1]} : vector<8x512xf32> to vector<8x256xf32>
    %c383_i32_36 = arith.constant 383 : i32
    %110 = tpu.dynamic_rotate %81 by %c383_i32_36 dim 1 : vector<8x512xf32>, i32 -> vector<8x512xf32>
    %111 = vector.extract_strided_slice %110 {offsets = [0, 0], sizes = [8, 256], strides = [1, 1]} : vector<8x512xf32> to vector<8x256xf32>
    %c375_i32_37 = arith.constant 375 : i32
    %112 = tpu.dynamic_rotate %81 by %c375_i32_37 dim 1 : vector<8x512xf32>, i32 -> vector<8x512xf32>
    %113 = vector.extract_strided_slice %112 {offsets = [0, 0], sizes = [8, 256], strides = [1, 1]} : vector<8x512xf32> to vector<8x256xf32>
    %c374_i32_38 = arith.constant 374 : i32
    %114 = tpu.dynamic_rotate %81 by %c374_i32_38 dim 1 : vector<8x512xf32>, i32 -> vector<8x512xf32>
    %115 = vector.extract_strided_slice %114 {offsets = [0, 0], sizes = [8, 256], strides = [1, 1]} : vector<8x512xf32> to vector<8x256xf32>
    %c373_i32_39 = arith.constant 373 : i32
    %116 = tpu.dynamic_rotate %81 by %c373_i32_39 dim 1 : vector<8x512xf32>, i32 -> vector<8x512xf32>
    %117 = vector.extract_strided_slice %116 {offsets = [0, 0], sizes = [8, 256], strides = [1, 1]} : vector<8x512xf32> to vector<8x256xf32>
    %c295_i32_40 = arith.constant 295 : i32
    %118 = tpu.dynamic_rotate %81 by %c295_i32_40 dim 1 : vector<8x512xf32>, i32 -> vector<8x512xf32>
    %119 = vector.extract_strided_slice %118 {offsets = [0, 0], sizes = [8, 256], strides = [1, 1]} : vector<8x512xf32> to vector<8x256xf32>
    %c294_i32_41 = arith.constant 294 : i32
    %120 = tpu.dynamic_rotate %81 by %c294_i32_41 dim 1 : vector<8x512xf32>, i32 -> vector<8x512xf32>
    %121 = vector.extract_strided_slice %120 {offsets = [0, 0], sizes = [8, 256], strides = [1, 1]} : vector<8x512xf32> to vector<8x256xf32>
    %c293_i32_42 = arith.constant 293 : i32
    %122 = tpu.dynamic_rotate %81 by %c293_i32_42 dim 1 : vector<8x512xf32>, i32 -> vector<8x512xf32>
    %123 = vector.extract_strided_slice %122 {offsets = [0, 0], sizes = [8, 256], strides = [1, 1]} : vector<8x512xf32> to vector<8x256xf32>
    %c285_i32_43 = arith.constant 285 : i32
    %124 = tpu.dynamic_rotate %81 by %c285_i32_43 dim 1 : vector<8x512xf32>, i32 -> vector<8x512xf32>
    %125 = vector.extract_strided_slice %124 {offsets = [0, 0], sizes = [8, 256], strides = [1, 1]} : vector<8x512xf32> to vector<8x256xf32>
    %c284_i32_44 = arith.constant 284 : i32
    %126 = tpu.dynamic_rotate %81 by %c284_i32_44 dim 1 : vector<8x512xf32>, i32 -> vector<8x512xf32>
    %127 = vector.extract_strided_slice %126 {offsets = [0, 0], sizes = [8, 256], strides = [1, 1]} : vector<8x512xf32> to vector<8x256xf32>
    %c283_i32_45 = arith.constant 283 : i32
    %128 = tpu.dynamic_rotate %81 by %c283_i32_45 dim 1 : vector<8x512xf32>, i32 -> vector<8x512xf32>
    %129 = vector.extract_strided_slice %128 {offsets = [0, 0], sizes = [8, 256], strides = [1, 1]} : vector<8x512xf32> to vector<8x256xf32>
    %c275_i32_46 = arith.constant 275 : i32
    %130 = tpu.dynamic_rotate %81 by %c275_i32_46 dim 1 : vector<8x512xf32>, i32 -> vector<8x512xf32>
    %131 = vector.extract_strided_slice %130 {offsets = [0, 0], sizes = [8, 256], strides = [1, 1]} : vector<8x512xf32> to vector<8x256xf32>
    %c274_i32_47 = arith.constant 274 : i32
    %132 = tpu.dynamic_rotate %81 by %c274_i32_47 dim 1 : vector<8x512xf32>, i32 -> vector<8x512xf32>
    %133 = vector.extract_strided_slice %132 {offsets = [0, 0], sizes = [8, 256], strides = [1, 1]} : vector<8x512xf32> to vector<8x256xf32>
    %c273_i32_48 = arith.constant 273 : i32
    %134 = tpu.dynamic_rotate %81 by %c273_i32_48 dim 1 : vector<8x512xf32>, i32 -> vector<8x512xf32>
    %135 = vector.extract_strided_slice %134 {offsets = [0, 0], sizes = [8, 256], strides = [1, 1]} : vector<8x512xf32> to vector<8x256xf32>
    %cst_49 = arith.constant 0.000000e+00 : f32
    %136 = vector.broadcast %cst_49 : f32 to vector<8x256xf32>
    %137 = tpu.concatenate %83, %85, %87, %89, %91, %93, %95, %97, %99, %101, %103, %105, %107, %109, %111, %113 in 0 : vector<8x256xf32>, vector<8x256xf32>, vector<8x256xf32>, vector<8x256xf32>, vector<8x256xf32>, vector<8x256xf32>, vector<8x256xf32>, vector<8x256xf32>, vector<8x256xf32>, vector<8x256xf32>, vector<8x256xf32>, vector<8x256xf32>, vector<8x256xf32>, vector<8x256xf32>, vector<8x256xf32>, vector<8x256xf32> -> vector<128x256xf32>
    %138 = tpu.concatenate %115, %117, %119, %121, %123, %125, %127, %129, %131, %133, %135, %136 in 0 : vector<8x256xf32>, vector<8x256xf32>, vector<8x256xf32>, vector<8x256xf32>, vector<8x256xf32>, vector<8x256xf32>, vector<8x256xf32>, vector<8x256xf32>, vector<8x256xf32>, vector<8x256xf32>, vector<8x256xf32>, vector<8x256xf32> -> vector<96x256xf32>
    %139 = tpu.concatenate %137, %138 in 0 : vector<128x256xf32>, vector<96x256xf32> -> vector<224x256xf32>
    %cst_50 = arith.constant dense<0.000000e+00> : vector<8x256xf32>
    %140 = tpu.matmul %4, %139, %cst_50 {dimension_numbers = #tpu.dot_dimension_numbers<[1], [0], [0], [1], [0, 0, 1, 1], [], []>} : vector<8x224xf32>, vector<224x256xf32>, vector<8x256xf32> -> vector<8x256xf32>
    %141 = arith.addf %140, %8 : vector<8x256xf32>
    %cst_51 = arith.constant 0.000000e+00 : f32
    %142 = vector.broadcast %cst_51 : f32 to vector<8x256xf32>
    %143 = arith.maximumf %141, %142 : vector<8x256xf32>
    %c0_52 = arith.constant 0 : index
    %c256_53 = arith.constant 256 : index
    %144 = vector.load %arg6[%c0_52, %c256_53] : memref<1x1024xf32, #tpu.memory_space<vmem>>, vector<1x256xf32>
    %145 = vector.broadcast %144 : vector<1x256xf32> to vector<8x256xf32>
    %146 = arith.mulf %143, %145 : vector<8x256xf32>
    %c0_54 = arith.constant 0 : index
    %c384 = arith.constant 384 : index
    %147 = vector.load %arg8[%c0_54, %c384] : memref<8x1280xf32, #tpu.memory_space<vmem>>, vector<8x256xf32>
    tpu.vector_store %arg8[%c0_54, %c384], %146 {strides = array<i32>} : memref<8x1280xf32, #tpu.memory_space<vmem>>, vector<8x256xf32>,
    %c0_55 = arith.constant 0 : index
    %c0_56 = arith.constant 0 : index
    %c512 = arith.constant 512 : index
    %148 = vector.load %arg1[%c0_55, %c0_56, %c512] : memref<1x8x1280xf32, #tpu.memory_space<vmem>>, vector<1x8x512xf32>
    %149 = vector.shape_cast %148 : vector<1x8x512xf32> to vector<8x512xf32>
    %c495_i32_57 = arith.constant 495 : i32
    %150 = tpu.dynamic_rotate %149 by %c495_i32_57 dim 1 : vector<8x512xf32>, i32 -> vector<8x512xf32>
    %151 = vector.extract_strided_slice %150 {offsets = [0, 0], sizes = [8, 256], strides = [1, 1]} : vector<8x512xf32> to vector<8x256xf32>
    %c494_i32_58 = arith.constant 494 : i32
    %152 = tpu.dynamic_rotate %149 by %c494_i32_58 dim 1 : vector<8x512xf32>, i32 -> vector<8x512xf32>
    %153 = vector.extract_strided_slice %152 {offsets = [0, 0], sizes = [8, 256], strides = [1, 1]} : vector<8x512xf32> to vector<8x256xf32>
    %c493_i32_59 = arith.constant 493 : i32
    %154 = tpu.dynamic_rotate %149 by %c493_i32_59 dim 1 : vector<8x512xf32>, i32 -> vector<8x512xf32>
    %155 = vector.extract_strided_slice %154 {offsets = [0, 0], sizes = [8, 256], strides = [1, 1]} : vector<8x512xf32> to vector<8x256xf32>
    %c485_i32_60 = arith.constant 485 : i32
    %156 = tpu.dynamic_rotate %149 by %c485_i32_60 dim 1 : vector<8x512xf32>, i32 -> vector<8x512xf32>
    %157 = vector.extract_strided_slice %156 {offsets = [0, 0], sizes = [8, 256], strides = [1, 1]} : vector<8x512xf32> to vector<8x256xf32>
    %c484_i32_61 = arith.constant 484 : i32
    %158 = tpu.dynamic_rotate %149 by %c484_i32_61 dim 1 : vector<8x512xf32>, i32 -> vector<8x512xf32>
    %159 = vector.extract_strided_slice %158 {offsets = [0, 0], sizes = [8, 256], strides = [1, 1]} : vector<8x512xf32> to vector<8x256xf32>
    %c483_i32_62 = arith.constant 483 : i32
    %160 = tpu.dynamic_rotate %149 by %c483_i32_62 dim 1 : vector<8x512xf32>, i32 -> vector<8x512xf32>
    %161 = vector.extract_strided_slice %160 {offsets = [0, 0], sizes = [8, 256], strides = [1, 1]} : vector<8x512xf32> to vector<8x256xf32>
    %c475_i32_63 = arith.constant 475 : i32
    %162 = tpu.dynamic_rotate %149 by %c475_i32_63 dim 1 : vector<8x512xf32>, i32 -> vector<8x512xf32>
    %163 = vector.extract_strided_slice %162 {offsets = [0, 0], sizes = [8, 256], strides = [1, 1]} : vector<8x512xf32> to vector<8x256xf32>
    %c474_i32_64 = arith.constant 474 : i32
    %164 = tpu.dynamic_rotate %149 by %c474_i32_64 dim 1 : vector<8x512xf32>, i32 -> vector<8x512xf32>
    %165 = vector.extract_strided_slice %164 {offsets = [0, 0], sizes = [8, 256], strides = [1, 1]} : vector<8x512xf32> to vector<8x256xf32>
    %c473_i32_65 = arith.constant 473 : i32
    %166 = tpu.dynamic_rotate %149 by %c473_i32_65 dim 1 : vector<8x512xf32>, i32 -> vector<8x512xf32>
    %167 = vector.extract_strided_slice %166 {offsets = [0, 0], sizes = [8, 256], strides = [1, 1]} : vector<8x512xf32> to vector<8x256xf32>
    %c395_i32_66 = arith.constant 395 : i32
    %168 = tpu.dynamic_rotate %149 by %c395_i32_66 dim 1 : vector<8x512xf32>, i32 -> vector<8x512xf32>
    %169 = vector.extract_strided_slice %168 {offsets = [0, 0], sizes = [8, 256], strides = [1, 1]} : vector<8x512xf32> to vector<8x256xf32>
    %c394_i32_67 = arith.constant 394 : i32
    %170 = tpu.dynamic_rotate %149 by %c394_i32_67 dim 1 : vector<8x512xf32>, i32 -> vector<8x512xf32>
    %171 = vector.extract_strided_slice %170 {offsets = [0, 0], sizes = [8, 256], strides = [1, 1]} : vector<8x512xf32> to vector<8x256xf32>
    %c393_i32_68 = arith.constant 393 : i32
    %172 = tpu.dynamic_rotate %149 by %c393_i32_68 dim 1 : vector<8x512xf32>, i32 -> vector<8x512xf32>
    %173 = vector.extract_strided_slice %172 {offsets = [0, 0], sizes = [8, 256], strides = [1, 1]} : vector<8x512xf32> to vector<8x256xf32>
    %c385_i32_69 = arith.constant 385 : i32
    %174 = tpu.dynamic_rotate %149 by %c385_i32_69 dim 1 : vector<8x512xf32>, i32 -> vector<8x512xf32>
    %175 = vector.extract_strided_slice %174 {offsets = [0, 0], sizes = [8, 256], strides = [1, 1]} : vector<8x512xf32> to vector<8x256xf32>
    %c384_i32_70 = arith.constant 384 : i32
    %176 = tpu.dynamic_rotate %149 by %c384_i32_70 dim 1 : vector<8x512xf32>, i32 -> vector<8x512xf32>
    %177 = vector.extract_strided_slice %176 {offsets = [0, 0], sizes = [8, 256], strides = [1, 1]} : vector<8x512xf32> to vector<8x256xf32>
    %c383_i32_71 = arith.constant 383 : i32
    %178 = tpu.dynamic_rotate %149 by %c383_i32_71 dim 1 : vector<8x512xf32>, i32 -> vector<8x512xf32>
    %179 = vector.extract_strided_slice %178 {offsets = [0, 0], sizes = [8, 256], strides = [1, 1]} : vector<8x512xf32> to vector<8x256xf32>
    %c375_i32_72 = arith.constant 375 : i32
    %180 = tpu.dynamic_rotate %149 by %c375_i32_72 dim 1 : vector<8x512xf32>, i32 -> vector<8x512xf32>
    %181 = vector.extract_strided_slice %180 {offsets = [0, 0], sizes = [8, 256], strides = [1, 1]} : vector<8x512xf32> to vector<8x256xf32>
    %c374_i32_73 = arith.constant 374 : i32
    %182 = tpu.dynamic_rotate %149 by %c374_i32_73 dim 1 : vector<8x512xf32>, i32 -> vector<8x512xf32>
    %183 = vector.extract_strided_slice %182 {offsets = [0, 0], sizes = [8, 256], strides = [1, 1]} : vector<8x512xf32> to vector<8x256xf32>
    %c373_i32_74 = arith.constant 373 : i32
    %184 = tpu.dynamic_rotate %149 by %c373_i32_74 dim 1 : vector<8x512xf32>, i32 -> vector<8x512xf32>
    %185 = vector.extract_strided_slice %184 {offsets = [0, 0], sizes = [8, 256], strides = [1, 1]} : vector<8x512xf32> to vector<8x256xf32>
    %c295_i32_75 = arith.constant 295 : i32
    %186 = tpu.dynamic_rotate %149 by %c295_i32_75 dim 1 : vector<8x512xf32>, i32 -> vector<8x512xf32>
    %187 = vector.extract_strided_slice %186 {offsets = [0, 0], sizes = [8, 256], strides = [1, 1]} : vector<8x512xf32> to vector<8x256xf32>
    %c294_i32_76 = arith.constant 294 : i32
    %188 = tpu.dynamic_rotate %149 by %c294_i32_76 dim 1 : vector<8x512xf32>, i32 -> vector<8x512xf32>
    %189 = vector.extract_strided_slice %188 {offsets = [0, 0], sizes = [8, 256], strides = [1, 1]} : vector<8x512xf32> to vector<8x256xf32>
    %c293_i32_77 = arith.constant 293 : i32
    %190 = tpu.dynamic_rotate %149 by %c293_i32_77 dim 1 : vector<8x512xf32>, i32 -> vector<8x512xf32>
    %191 = vector.extract_strided_slice %190 {offsets = [0, 0], sizes = [8, 256], strides = [1, 1]} : vector<8x512xf32> to vector<8x256xf32>
    %c285_i32_78 = arith.constant 285 : i32
    %192 = tpu.dynamic_rotate %149 by %c285_i32_78 dim 1 : vector<8x512xf32>, i32 -> vector<8x512xf32>
    %193 = vector.extract_strided_slice %192 {offsets = [0, 0], sizes = [8, 256], strides = [1, 1]} : vector<8x512xf32> to vector<8x256xf32>
    %c284_i32_79 = arith.constant 284 : i32
    %194 = tpu.dynamic_rotate %149 by %c284_i32_79 dim 1 : vector<8x512xf32>, i32 -> vector<8x512xf32>
    %195 = vector.extract_strided_slice %194 {offsets = [0, 0], sizes = [8, 256], strides = [1, 1]} : vector<8x512xf32> to vector<8x256xf32>
    %c283_i32_80 = arith.constant 283 : i32
    %196 = tpu.dynamic_rotate %149 by %c283_i32_80 dim 1 : vector<8x512xf32>, i32 -> vector<8x512xf32>
    %197 = vector.extract_strided_slice %196 {offsets = [0, 0], sizes = [8, 256], strides = [1, 1]} : vector<8x512xf32> to vector<8x256xf32>
    %c275_i32_81 = arith.constant 275 : i32
    %198 = tpu.dynamic_rotate %149 by %c275_i32_81 dim 1 : vector<8x512xf32>, i32 -> vector<8x512xf32>
    %199 = vector.extract_strided_slice %198 {offsets = [0, 0], sizes = [8, 256], strides = [1, 1]} : vector<8x512xf32> to vector<8x256xf32>
    %c274_i32_82 = arith.constant 274 : i32
    %200 = tpu.dynamic_rotate %149 by %c274_i32_82 dim 1 : vector<8x512xf32>, i32 -> vector<8x512xf32>
    %201 = vector.extract_strided_slice %200 {offsets = [0, 0], sizes = [8, 256], strides = [1, 1]} : vector<8x512xf32> to vector<8x256xf32>
    %c273_i32_83 = arith.constant 273 : i32
    %202 = tpu.dynamic_rotate %149 by %c273_i32_83 dim 1 : vector<8x512xf32>, i32 -> vector<8x512xf32>
    %203 = vector.extract_strided_slice %202 {offsets = [0, 0], sizes = [8, 256], strides = [1, 1]} : vector<8x512xf32> to vector<8x256xf32>
    %cst_84 = arith.constant 0.000000e+00 : f32
    %204 = vector.broadcast %cst_84 : f32 to vector<8x256xf32>
    %205 = tpu.concatenate %151, %153, %155, %157, %159, %161, %163, %165, %167, %169, %171, %173, %175, %177, %179, %181 in 0 : vector<8x256xf32>, vector<8x256xf32>, vector<8x256xf32>, vector<8x256xf32>, vector<8x256xf32>, vector<8x256xf32>, vector<8x256xf32>, vector<8x256xf32>, vector<8x256xf32>, vector<8x256xf32>, vector<8x256xf32>, vector<8x256xf32>, vector<8x256xf32>, vector<8x256xf32>, vector<8x256xf32>, vector<8x256xf32> -> vector<128x256xf32>
    %206 = tpu.concatenate %183, %185, %187, %189, %191, %193, %195, %197, %199, %201, %203, %204 in 0 : vector<8x256xf32>, vector<8x256xf32>, vector<8x256xf32>, vector<8x256xf32>, vector<8x256xf32>, vector<8x256xf32>, vector<8x256xf32>, vector<8x256xf32>, vector<8x256xf32>, vector<8x256xf32>, vector<8x256xf32>, vector<8x256xf32> -> vector<96x256xf32>
    %207 = tpu.concatenate %205, %206 in 0 : vector<128x256xf32>, vector<96x256xf32> -> vector<224x256xf32>
    %cst_85 = arith.constant dense<0.000000e+00> : vector<8x256xf32>
    %208 = tpu.matmul %4, %207, %cst_85 {dimension_numbers = #tpu.dot_dimension_numbers<[1], [0], [0], [1], [0, 0, 1, 1], [], []>} : vector<8x224xf32>, vector<224x256xf32>, vector<8x256xf32> -> vector<8x256xf32>
    %209 = arith.addf %208, %8 : vector<8x256xf32>
    %cst_86 = arith.constant 0.000000e+00 : f32
    %210 = vector.broadcast %cst_86 : f32 to vector<8x256xf32>
    %211 = arith.maximumf %209, %210 : vector<8x256xf32>
    %c0_87 = arith.constant 0 : index
    %c512_88 = arith.constant 512 : index
    %212 = vector.load %arg6[%c0_87, %c512_88] : memref<1x1024xf32, #tpu.memory_space<vmem>>, vector<1x256xf32>
    %213 = vector.broadcast %212 : vector<1x256xf32> to vector<8x256xf32>
    %214 = arith.mulf %211, %213 : vector<8x256xf32>
    %c0_89 = arith.constant 0 : index
    %c640 = arith.constant 640 : index
    %215 = vector.load %arg8[%c0_89, %c640] : memref<8x1280xf32, #tpu.memory_space<vmem>>, vector<8x256xf32>
    tpu.vector_store %arg8[%c0_89, %c640], %214 {strides = array<i32>} : memref<8x1280xf32, #tpu.memory_space<vmem>>, vector<8x256xf32>,
    %c0_90 = arith.constant 0 : index
    %c0_91 = arith.constant 0 : index
    %c768 = arith.constant 768 : index
    %216 = vector.load %arg1[%c0_90, %c0_91, %c768] : memref<1x8x1280xf32, #tpu.memory_space<vmem>>, vector<1x8x512xf32>
    %217 = vector.shape_cast %216 : vector<1x8x512xf32> to vector<8x512xf32>
    %c495_i32_92 = arith.constant 495 : i32
    %218 = tpu.dynamic_rotate %217 by %c495_i32_92 dim 1 : vector<8x512xf32>, i32 -> vector<8x512xf32>
    %219 = vector.extract_strided_slice %218 {offsets = [0, 0], sizes = [8, 256], strides = [1, 1]} : vector<8x512xf32> to vector<8x256xf32>
    %c494_i32_93 = arith.constant 494 : i32
    %220 = tpu.dynamic_rotate %217 by %c494_i32_93 dim 1 : vector<8x512xf32>, i32 -> vector<8x512xf32>
    %221 = vector.extract_strided_slice %220 {offsets = [0, 0], sizes = [8, 256], strides = [1, 1]} : vector<8x512xf32> to vector<8x256xf32>
    %c493_i32_94 = arith.constant 493 : i32
    %222 = tpu.dynamic_rotate %217 by %c493_i32_94 dim 1 : vector<8x512xf32>, i32 -> vector<8x512xf32>
    %223 = vector.extract_strided_slice %222 {offsets = [0, 0], sizes = [8, 256], strides = [1, 1]} : vector<8x512xf32> to vector<8x256xf32>
    %c485_i32_95 = arith.constant 485 : i32
    %224 = tpu.dynamic_rotate %217 by %c485_i32_95 dim 1 : vector<8x512xf32>, i32 -> vector<8x512xf32>
    %225 = vector.extract_strided_slice %224 {offsets = [0, 0], sizes = [8, 256], strides = [1, 1]} : vector<8x512xf32> to vector<8x256xf32>
    %c484_i32_96 = arith.constant 484 : i32
    %226 = tpu.dynamic_rotate %217 by %c484_i32_96 dim 1 : vector<8x512xf32>, i32 -> vector<8x512xf32>
    %227 = vector.extract_strided_slice %226 {offsets = [0, 0], sizes = [8, 256], strides = [1, 1]} : vector<8x512xf32> to vector<8x256xf32>
    %c483_i32_97 = arith.constant 483 : i32
    %228 = tpu.dynamic_rotate %217 by %c483_i32_97 dim 1 : vector<8x512xf32>, i32 -> vector<8x512xf32>
    %229 = vector.extract_strided_slice %228 {offsets = [0, 0], sizes = [8, 256], strides = [1, 1]} : vector<8x512xf32> to vector<8x256xf32>
    %c475_i32_98 = arith.constant 475 : i32
    %230 = tpu.dynamic_rotate %217 by %c475_i32_98 dim 1 : vector<8x512xf32>, i32 -> vector<8x512xf32>
    %231 = vector.extract_strided_slice %230 {offsets = [0, 0], sizes = [8, 256], strides = [1, 1]} : vector<8x512xf32> to vector<8x256xf32>
    %c474_i32_99 = arith.constant 474 : i32
    %232 = tpu.dynamic_rotate %217 by %c474_i32_99 dim 1 : vector<8x512xf32>, i32 -> vector<8x512xf32>
    %233 = vector.extract_strided_slice %232 {offsets = [0, 0], sizes = [8, 256], strides = [1, 1]} : vector<8x512xf32> to vector<8x256xf32>
    %c473_i32_100 = arith.constant 473 : i32
    %234 = tpu.dynamic_rotate %217 by %c473_i32_100 dim 1 : vector<8x512xf32>, i32 -> vector<8x512xf32>
    %235 = vector.extract_strided_slice %234 {offsets = [0, 0], sizes = [8, 256], strides = [1, 1]} : vector<8x512xf32> to vector<8x256xf32>
    %c395_i32_101 = arith.constant 395 : i32
    %236 = tpu.dynamic_rotate %217 by %c395_i32_101 dim 1 : vector<8x512xf32>, i32 -> vector<8x512xf32>
    %237 = vector.extract_strided_slice %236 {offsets = [0, 0], sizes = [8, 256], strides = [1, 1]} : vector<8x512xf32> to vector<8x256xf32>
    %c394_i32_102 = arith.constant 394 : i32
    %238 = tpu.dynamic_rotate %217 by %c394_i32_102 dim 1 : vector<8x512xf32>, i32 -> vector<8x512xf32>
    %239 = vector.extract_strided_slice %238 {offsets = [0, 0], sizes = [8, 256], strides = [1, 1]} : vector<8x512xf32> to vector<8x256xf32>
    %c393_i32_103 = arith.constant 393 : i32
    %240 = tpu.dynamic_rotate %217 by %c393_i32_103 dim 1 : vector<8x512xf32>, i32 -> vector<8x512xf32>
    %241 = vector.extract_strided_slice %240 {offsets = [0, 0], sizes = [8, 256], strides = [1, 1]} : vector<8x512xf32> to vector<8x256xf32>
    %c385_i32_104 = arith.constant 385 : i32
    %242 = tpu.dynamic_rotate %217 by %c385_i32_104 dim 1 : vector<8x512xf32>, i32 -> vector<8x512xf32>
    %243 = vector.extract_strided_slice %242 {offsets = [0, 0], sizes = [8, 256], strides = [1, 1]} : vector<8x512xf32> to vector<8x256xf32>
    %c384_i32_105 = arith.constant 384 : i32
    %244 = tpu.dynamic_rotate %217 by %c384_i32_105 dim 1 : vector<8x512xf32>, i32 -> vector<8x512xf32>
    %245 = vector.extract_strided_slice %244 {offsets = [0, 0], sizes = [8, 256], strides = [1, 1]} : vector<8x512xf32> to vector<8x256xf32>
    %c383_i32_106 = arith.constant 383 : i32
    %246 = tpu.dynamic_rotate %217 by %c383_i32_106 dim 1 : vector<8x512xf32>, i32 -> vector<8x512xf32>
    %247 = vector.extract_strided_slice %246 {offsets = [0, 0], sizes = [8, 256], strides = [1, 1]} : vector<8x512xf32> to vector<8x256xf32>
    %c375_i32_107 = arith.constant 375 : i32
    %248 = tpu.dynamic_rotate %217 by %c375_i32_107 dim 1 : vector<8x512xf32>, i32 -> vector<8x512xf32>
    %249 = vector.extract_strided_slice %248 {offsets = [0, 0], sizes = [8, 256], strides = [1, 1]} : vector<8x512xf32> to vector<8x256xf32>
    %c374_i32_108 = arith.constant 374 : i32
    %250 = tpu.dynamic_rotate %217 by %c374_i32_108 dim 1 : vector<8x512xf32>, i32 -> vector<8x512xf32>
    %251 = vector.extract_strided_slice %250 {offsets = [0, 0], sizes = [8, 256], strides = [1, 1]} : vector<8x512xf32> to vector<8x256xf32>
    %c373_i32_109 = arith.constant 373 : i32
    %252 = tpu.dynamic_rotate %217 by %c373_i32_109 dim 1 : vector<8x512xf32>, i32 -> vector<8x512xf32>
    %253 = vector.extract_strided_slice %252 {offsets = [0, 0], sizes = [8, 256], strides = [1, 1]} : vector<8x512xf32> to vector<8x256xf32>
    %c295_i32_110 = arith.constant 295 : i32
    %254 = tpu.dynamic_rotate %217 by %c295_i32_110 dim 1 : vector<8x512xf32>, i32 -> vector<8x512xf32>
    %255 = vector.extract_strided_slice %254 {offsets = [0, 0], sizes = [8, 256], strides = [1, 1]} : vector<8x512xf32> to vector<8x256xf32>
    %c294_i32_111 = arith.constant 294 : i32
    %256 = tpu.dynamic_rotate %217 by %c294_i32_111 dim 1 : vector<8x512xf32>, i32 -> vector<8x512xf32>
    %257 = vector.extract_strided_slice %256 {offsets = [0, 0], sizes = [8, 256], strides = [1, 1]} : vector<8x512xf32> to vector<8x256xf32>
    %c293_i32_112 = arith.constant 293 : i32
    %258 = tpu.dynamic_rotate %217 by %c293_i32_112 dim 1 : vector<8x512xf32>, i32 -> vector<8x512xf32>
    %259 = vector.extract_strided_slice %258 {offsets = [0, 0], sizes = [8, 256], strides = [1, 1]} : vector<8x512xf32> to vector<8x256xf32>
    %c285_i32_113 = arith.constant 285 : i32
    %260 = tpu.dynamic_rotate %217 by %c285_i32_113 dim 1 : vector<8x512xf32>, i32 -> vector<8x512xf32>
    %261 = vector.extract_strided_slice %260 {offsets = [0, 0], sizes = [8, 256], strides = [1, 1]} : vector<8x512xf32> to vector<8x256xf32>
    %c284_i32_114 = arith.constant 284 : i32
    %262 = tpu.dynamic_rotate %217 by %c284_i32_114 dim 1 : vector<8x512xf32>, i32 -> vector<8x512xf32>
    %263 = vector.extract_strided_slice %262 {offsets = [0, 0], sizes = [8, 256], strides = [1, 1]} : vector<8x512xf32> to vector<8x256xf32>
    %c283_i32_115 = arith.constant 283 : i32
    %264 = tpu.dynamic_rotate %217 by %c283_i32_115 dim 1 : vector<8x512xf32>, i32 -> vector<8x512xf32>
    %265 = vector.extract_strided_slice %264 {offsets = [0, 0], sizes = [8, 256], strides = [1, 1]} : vector<8x512xf32> to vector<8x256xf32>
    %c275_i32_116 = arith.constant 275 : i32
    %266 = tpu.dynamic_rotate %217 by %c275_i32_116 dim 1 : vector<8x512xf32>, i32 -> vector<8x512xf32>
    %267 = vector.extract_strided_slice %266 {offsets = [0, 0], sizes = [8, 256], strides = [1, 1]} : vector<8x512xf32> to vector<8x256xf32>
    %c274_i32_117 = arith.constant 274 : i32
    %268 = tpu.dynamic_rotate %217 by %c274_i32_117 dim 1 : vector<8x512xf32>, i32 -> vector<8x512xf32>
    %269 = vector.extract_strided_slice %268 {offsets = [0, 0], sizes = [8, 256], strides = [1, 1]} : vector<8x512xf32> to vector<8x256xf32>
    %c273_i32_118 = arith.constant 273 : i32
    %270 = tpu.dynamic_rotate %217 by %c273_i32_118 dim 1 : vector<8x512xf32>, i32 -> vector<8x512xf32>
    %271 = vector.extract_strided_slice %270 {offsets = [0, 0], sizes = [8, 256], strides = [1, 1]} : vector<8x512xf32> to vector<8x256xf32>
    %cst_119 = arith.constant 0.000000e+00 : f32
    %272 = vector.broadcast %cst_119 : f32 to vector<8x256xf32>
    %273 = tpu.concatenate %219, %221, %223, %225, %227, %229, %231, %233, %235, %237, %239, %241, %243, %245, %247, %249 in 0 : vector<8x256xf32>, vector<8x256xf32>, vector<8x256xf32>, vector<8x256xf32>, vector<8x256xf32>, vector<8x256xf32>, vector<8x256xf32>, vector<8x256xf32>, vector<8x256xf32>, vector<8x256xf32>, vector<8x256xf32>, vector<8x256xf32>, vector<8x256xf32>, vector<8x256xf32>, vector<8x256xf32>, vector<8x256xf32> -> vector<128x256xf32>
    %274 = tpu.concatenate %251, %253, %255, %257, %259, %261, %263, %265, %267, %269, %271, %272 in 0 : vector<8x256xf32>, vector<8x256xf32>, vector<8x256xf32>, vector<8x256xf32>, vector<8x256xf32>, vector<8x256xf32>, vector<8x256xf32>, vector<8x256xf32>, vector<8x256xf32>, vector<8x256xf32>, vector<8x256xf32>, vector<8x256xf32> -> vector<96x256xf32>
    %275 = tpu.concatenate %273, %274 in 0 : vector<128x256xf32>, vector<96x256xf32> -> vector<224x256xf32>
    %cst_120 = arith.constant dense<0.000000e+00> : vector<8x256xf32>
    %276 = tpu.matmul %4, %275, %cst_120 {dimension_numbers = #tpu.dot_dimension_numbers<[1], [0], [0], [1], [0, 0, 1, 1], [], []>} : vector<8x224xf32>, vector<224x256xf32>, vector<8x256xf32> -> vector<8x256xf32>
    %277 = arith.addf %276, %8 : vector<8x256xf32>
    %cst_121 = arith.constant 0.000000e+00 : f32
    %278 = vector.broadcast %cst_121 : f32 to vector<8x256xf32>
    %279 = arith.maximumf %277, %278 : vector<8x256xf32>
    %c0_122 = arith.constant 0 : index
    %c768_123 = arith.constant 768 : index
    %280 = vector.load %arg6[%c0_122, %c768_123] : memref<1x1024xf32, #tpu.memory_space<vmem>>, vector<1x256xf32>
    %281 = vector.broadcast %280 : vector<1x256xf32> to vector<8x256xf32>
    %282 = arith.mulf %279, %281 : vector<8x256xf32>
    %c0_124 = arith.constant 0 : index
    %c896 = arith.constant 896 : index
    %283 = vector.load %arg8[%c0_124, %c896] : memref<8x1280xf32, #tpu.memory_space<vmem>>, vector<8x256xf32>
    tpu.vector_store %arg8[%c0_124, %c896], %282 {strides = array<i32>} : memref<8x1280xf32, #tpu.memory_space<vmem>>, vector<8x256xf32>,
    %c0_125 = arith.constant 0 : index
    %c0_126 = arith.constant 0 : index
    %284 = vector.load %arg8[%c0_125, %c0_126] : memref<8x1280xf32, #tpu.memory_space<vmem>>, vector<8x512xf32>
    %c495_i32_127 = arith.constant 495 : i32
    %285 = tpu.dynamic_rotate %284 by %c495_i32_127 dim 1 : vector<8x512xf32>, i32 -> vector<8x512xf32>
    %286 = vector.extract_strided_slice %285 {offsets = [0, 0], sizes = [8, 256], strides = [1, 1]} : vector<8x512xf32> to vector<8x256xf32>
    %c494_i32_128 = arith.constant 494 : i32
    %287 = tpu.dynamic_rotate %284 by %c494_i32_128 dim 1 : vector<8x512xf32>, i32 -> vector<8x512xf32>
    %288 = vector.extract_strided_slice %287 {offsets = [0, 0], sizes = [8, 256], strides = [1, 1]} : vector<8x512xf32> to vector<8x256xf32>
    %c493_i32_129 = arith.constant 493 : i32
    %289 = tpu.dynamic_rotate %284 by %c493_i32_129 dim 1 : vector<8x512xf32>, i32 -> vector<8x512xf32>
    %290 = vector.extract_strided_slice %289 {offsets = [0, 0], sizes = [8, 256], strides = [1, 1]} : vector<8x512xf32> to vector<8x256xf32>
    %c485_i32_130 = arith.constant 485 : i32
    %291 = tpu.dynamic_rotate %284 by %c485_i32_130 dim 1 : vector<8x512xf32>, i32 -> vector<8x512xf32>
    %292 = vector.extract_strided_slice %291 {offsets = [0, 0], sizes = [8, 256], strides = [1, 1]} : vector<8x512xf32> to vector<8x256xf32>
    %c484_i32_131 = arith.constant 484 : i32
    %293 = tpu.dynamic_rotate %284 by %c484_i32_131 dim 1 : vector<8x512xf32>, i32 -> vector<8x512xf32>
    %294 = vector.extract_strided_slice %293 {offsets = [0, 0], sizes = [8, 256], strides = [1, 1]} : vector<8x512xf32> to vector<8x256xf32>
    %c483_i32_132 = arith.constant 483 : i32
    %295 = tpu.dynamic_rotate %284 by %c483_i32_132 dim 1 : vector<8x512xf32>, i32 -> vector<8x512xf32>
    %296 = vector.extract_strided_slice %295 {offsets = [0, 0], sizes = [8, 256], strides = [1, 1]} : vector<8x512xf32> to vector<8x256xf32>
    %c475_i32_133 = arith.constant 475 : i32
    %297 = tpu.dynamic_rotate %284 by %c475_i32_133 dim 1 : vector<8x512xf32>, i32 -> vector<8x512xf32>
    %298 = vector.extract_strided_slice %297 {offsets = [0, 0], sizes = [8, 256], strides = [1, 1]} : vector<8x512xf32> to vector<8x256xf32>
    %c474_i32_134 = arith.constant 474 : i32
    %299 = tpu.dynamic_rotate %284 by %c474_i32_134 dim 1 : vector<8x512xf32>, i32 -> vector<8x512xf32>
    %300 = vector.extract_strided_slice %299 {offsets = [0, 0], sizes = [8, 256], strides = [1, 1]} : vector<8x512xf32> to vector<8x256xf32>
    %c473_i32_135 = arith.constant 473 : i32
    %301 = tpu.dynamic_rotate %284 by %c473_i32_135 dim 1 : vector<8x512xf32>, i32 -> vector<8x512xf32>
    %302 = vector.extract_strided_slice %301 {offsets = [0, 0], sizes = [8, 256], strides = [1, 1]} : vector<8x512xf32> to vector<8x256xf32>
    %c395_i32_136 = arith.constant 395 : i32
    %303 = tpu.dynamic_rotate %284 by %c395_i32_136 dim 1 : vector<8x512xf32>, i32 -> vector<8x512xf32>
    %304 = vector.extract_strided_slice %303 {offsets = [0, 0], sizes = [8, 256], strides = [1, 1]} : vector<8x512xf32> to vector<8x256xf32>
    %c394_i32_137 = arith.constant 394 : i32
    %305 = tpu.dynamic_rotate %284 by %c394_i32_137 dim 1 : vector<8x512xf32>, i32 -> vector<8x512xf32>
    %306 = vector.extract_strided_slice %305 {offsets = [0, 0], sizes = [8, 256], strides = [1, 1]} : vector<8x512xf32> to vector<8x256xf32>
    %c393_i32_138 = arith.constant 393 : i32
    %307 = tpu.dynamic_rotate %284 by %c393_i32_138 dim 1 : vector<8x512xf32>, i32 -> vector<8x512xf32>
    %308 = vector.extract_strided_slice %307 {offsets = [0, 0], sizes = [8, 256], strides = [1, 1]} : vector<8x512xf32> to vector<8x256xf32>
    %c385_i32_139 = arith.constant 385 : i32
    %309 = tpu.dynamic_rotate %284 by %c385_i32_139 dim 1 : vector<8x512xf32>, i32 -> vector<8x512xf32>
    %310 = vector.extract_strided_slice %309 {offsets = [0, 0], sizes = [8, 256], strides = [1, 1]} : vector<8x512xf32> to vector<8x256xf32>
    %c384_i32_140 = arith.constant 384 : i32
    %311 = tpu.dynamic_rotate %284 by %c384_i32_140 dim 1 : vector<8x512xf32>, i32 -> vector<8x512xf32>
    %312 = vector.extract_strided_slice %311 {offsets = [0, 0], sizes = [8, 256], strides = [1, 1]} : vector<8x512xf32> to vector<8x256xf32>
    %c383_i32_141 = arith.constant 383 : i32
    %313 = tpu.dynamic_rotate %284 by %c383_i32_141 dim 1 : vector<8x512xf32>, i32 -> vector<8x512xf32>
    %314 = vector.extract_strided_slice %313 {offsets = [0, 0], sizes = [8, 256], strides = [1, 1]} : vector<8x512xf32> to vector<8x256xf32>
    %c375_i32_142 = arith.constant 375 : i32
    %315 = tpu.dynamic_rotate %284 by %c375_i32_142 dim 1 : vector<8x512xf32>, i32 -> vector<8x512xf32>
    %316 = vector.extract_strided_slice %315 {offsets = [0, 0], sizes = [8, 256], strides = [1, 1]} : vector<8x512xf32> to vector<8x256xf32>
    %c374_i32_143 = arith.constant 374 : i32
    %317 = tpu.dynamic_rotate %284 by %c374_i32_143 dim 1 : vector<8x512xf32>, i32 -> vector<8x512xf32>
    %318 = vector.extract_strided_slice %317 {offsets = [0, 0], sizes = [8, 256], strides = [1, 1]} : vector<8x512xf32> to vector<8x256xf32>
    %c373_i32_144 = arith.constant 373 : i32
    %319 = tpu.dynamic_rotate %284 by %c373_i32_144 dim 1 : vector<8x512xf32>, i32 -> vector<8x512xf32>
    %320 = vector.extract_strided_slice %319 {offsets = [0, 0], sizes = [8, 256], strides = [1, 1]} : vector<8x512xf32> to vector<8x256xf32>
    %c295_i32_145 = arith.constant 295 : i32
    %321 = tpu.dynamic_rotate %284 by %c295_i32_145 dim 1 : vector<8x512xf32>, i32 -> vector<8x512xf32>
    %322 = vector.extract_strided_slice %321 {offsets = [0, 0], sizes = [8, 256], strides = [1, 1]} : vector<8x512xf32> to vector<8x256xf32>
    %c294_i32_146 = arith.constant 294 : i32
    %323 = tpu.dynamic_rotate %284 by %c294_i32_146 dim 1 : vector<8x512xf32>, i32 -> vector<8x512xf32>
    %324 = vector.extract_strided_slice %323 {offsets = [0, 0], sizes = [8, 256], strides = [1, 1]} : vector<8x512xf32> to vector<8x256xf32>
    %c293_i32_147 = arith.constant 293 : i32
    %325 = tpu.dynamic_rotate %284 by %c293_i32_147 dim 1 : vector<8x512xf32>, i32 -> vector<8x512xf32>
    %326 = vector.extract_strided_slice %325 {offsets = [0, 0], sizes = [8, 256], strides = [1, 1]} : vector<8x512xf32> to vector<8x256xf32>
    %c285_i32_148 = arith.constant 285 : i32
    %327 = tpu.dynamic_rotate %284 by %c285_i32_148 dim 1 : vector<8x512xf32>, i32 -> vector<8x512xf32>
    %328 = vector.extract_strided_slice %327 {offsets = [0, 0], sizes = [8, 256], strides = [1, 1]} : vector<8x512xf32> to vector<8x256xf32>
    %c284_i32_149 = arith.constant 284 : i32
    %329 = tpu.dynamic_rotate %284 by %c284_i32_149 dim 1 : vector<8x512xf32>, i32 -> vector<8x512xf32>
    %330 = vector.extract_strided_slice %329 {offsets = [0, 0], sizes = [8, 256], strides = [1, 1]} : vector<8x512xf32> to vector<8x256xf32>
    %c283_i32_150 = arith.constant 283 : i32
    %331 = tpu.dynamic_rotate %284 by %c283_i32_150 dim 1 : vector<8x512xf32>, i32 -> vector<8x512xf32>
    %332 = vector.extract_strided_slice %331 {offsets = [0, 0], sizes = [8, 256], strides = [1, 1]} : vector<8x512xf32> to vector<8x256xf32>
    %c275_i32_151 = arith.constant 275 : i32
    %333 = tpu.dynamic_rotate %284 by %c275_i32_151 dim 1 : vector<8x512xf32>, i32 -> vector<8x512xf32>
    %334 = vector.extract_strided_slice %333 {offsets = [0, 0], sizes = [8, 256], strides = [1, 1]} : vector<8x512xf32> to vector<8x256xf32>
    %c274_i32_152 = arith.constant 274 : i32
    %335 = tpu.dynamic_rotate %284 by %c274_i32_152 dim 1 : vector<8x512xf32>, i32 -> vector<8x512xf32>
    %336 = vector.extract_strided_slice %335 {offsets = [0, 0], sizes = [8, 256], strides = [1, 1]} : vector<8x512xf32> to vector<8x256xf32>
    %c273_i32_153 = arith.constant 273 : i32
    %337 = tpu.dynamic_rotate %284 by %c273_i32_153 dim 1 : vector<8x512xf32>, i32 -> vector<8x512xf32>
    %338 = vector.extract_strided_slice %337 {offsets = [0, 0], sizes = [8, 256], strides = [1, 1]} : vector<8x512xf32> to vector<8x256xf32>
    %cst_154 = arith.constant 0.000000e+00 : f32
    %339 = vector.broadcast %cst_154 : f32 to vector<8x256xf32>
    %340 = tpu.concatenate %286, %288, %290, %292, %294, %296, %298, %300, %302, %304, %306, %308, %310, %312, %314, %316 in 0 : vector<8x256xf32>, vector<8x256xf32>, vector<8x256xf32>, vector<8x256xf32>, vector<8x256xf32>, vector<8x256xf32>, vector<8x256xf32>, vector<8x256xf32>, vector<8x256xf32>, vector<8x256xf32>, vector<8x256xf32>, vector<8x256xf32>, vector<8x256xf32>, vector<8x256xf32>, vector<8x256xf32>, vector<8x256xf32> -> vector<128x256xf32>
    %341 = tpu.concatenate %318, %320, %322, %324, %326, %328, %330, %332, %334, %336, %338, %339 in 0 : vector<8x256xf32>, vector<8x256xf32>, vector<8x256xf32>, vector<8x256xf32>, vector<8x256xf32>, vector<8x256xf32>, vector<8x256xf32>, vector<8x256xf32>, vector<8x256xf32>, vector<8x256xf32>, vector<8x256xf32>, vector<8x256xf32> -> vector<96x256xf32>
    %342 = tpu.concatenate %340, %341 in 0 : vector<128x256xf32>, vector<96x256xf32> -> vector<224x256xf32>
    %cst_155 = arith.constant dense<0.000000e+00> : vector<8x256xf32>
    %343 = tpu.matmul %5, %342, %cst_155 {dimension_numbers = #tpu.dot_dimension_numbers<[1], [0], [0], [1], [0, 0, 1, 1], [], []>} : vector<8x224xf32>, vector<224x256xf32>, vector<8x256xf32> -> vector<8x256xf32>
    %344 = arith.addf %343, %11 : vector<8x256xf32>
    %c0_156 = arith.constant 0 : index
    %c0_157 = arith.constant 0 : index
    %c128_158 = arith.constant 128 : index
    %345 = vector.load %arg1[%c0_156, %c0_157, %c128_158] : memref<1x8x1280xf32, #tpu.memory_space<vmem>>, vector<1x8x256xf32>
    %346 = vector.shape_cast %345 : vector<1x8x256xf32> to vector<8x256xf32>
    %347 = arith.addf %344, %346 : vector<8x256xf32>
    %cst_159 = arith.constant 0.000000e+00 : f32
    %348 = vector.broadcast %cst_159 : f32 to vector<8x256xf32>
    %349 = arith.maximumf %347, %348 : vector<8x256xf32>
    %c0_160 = arith.constant 0 : index
    %c0_161 = arith.constant 0 : index
    %c0_162 = arith.constant 0 : index
    %350 = vector.load %arg7[%c0_160, %c0_161, %c0_162] : memref<1x8x1024xf32, #tpu.memory_space<vmem>>, vector<1x8x256xf32>
    %351 = vector.shape_cast %350 : vector<1x8x256xf32> to vector<8x256xf32>
    %352 = vector.shape_cast %349 : vector<8x256xf32> to vector<1x8x256xf32>
    tpu.vector_store %arg7[%c0_160, %c0_161, %c0_162], %352 {strides = array<i32>} : memref<1x8x1024xf32, #tpu.memory_space<vmem>>, vector<1x8x256xf32>,
    %c0_163 = arith.constant 0 : index
    %c256_164 = arith.constant 256 : index
    %353 = vector.load %arg8[%c0_163, %c256_164] : memref<8x1280xf32, #tpu.memory_space<vmem>>, vector<8x512xf32>
    %c495_i32_165 = arith.constant 495 : i32
    %354 = tpu.dynamic_rotate %353 by %c495_i32_165 dim 1 : vector<8x512xf32>, i32 -> vector<8x512xf32>
    %355 = vector.extract_strided_slice %354 {offsets = [0, 0], sizes = [8, 256], strides = [1, 1]} : vector<8x512xf32> to vector<8x256xf32>
    %c494_i32_166 = arith.constant 494 : i32
    %356 = tpu.dynamic_rotate %353 by %c494_i32_166 dim 1 : vector<8x512xf32>, i32 -> vector<8x512xf32>
    %357 = vector.extract_strided_slice %356 {offsets = [0, 0], sizes = [8, 256], strides = [1, 1]} : vector<8x512xf32> to vector<8x256xf32>
    %c493_i32_167 = arith.constant 493 : i32
    %358 = tpu.dynamic_rotate %353 by %c493_i32_167 dim 1 : vector<8x512xf32>, i32 -> vector<8x512xf32>
    %359 = vector.extract_strided_slice %358 {offsets = [0, 0], sizes = [8, 256], strides = [1, 1]} : vector<8x512xf32> to vector<8x256xf32>
    %c485_i32_168 = arith.constant 485 : i32
    %360 = tpu.dynamic_rotate %353 by %c485_i32_168 dim 1 : vector<8x512xf32>, i32 -> vector<8x512xf32>
    %361 = vector.extract_strided_slice %360 {offsets = [0, 0], sizes = [8, 256], strides = [1, 1]} : vector<8x512xf32> to vector<8x256xf32>
    %c484_i32_169 = arith.constant 484 : i32
    %362 = tpu.dynamic_rotate %353 by %c484_i32_169 dim 1 : vector<8x512xf32>, i32 -> vector<8x512xf32>
    %363 = vector.extract_strided_slice %362 {offsets = [0, 0], sizes = [8, 256], strides = [1, 1]} : vector<8x512xf32> to vector<8x256xf32>
    %c483_i32_170 = arith.constant 483 : i32
    %364 = tpu.dynamic_rotate %353 by %c483_i32_170 dim 1 : vector<8x512xf32>, i32 -> vector<8x512xf32>
    %365 = vector.extract_strided_slice %364 {offsets = [0, 0], sizes = [8, 256], strides = [1, 1]} : vector<8x512xf32> to vector<8x256xf32>
    %c475_i32_171 = arith.constant 475 : i32
    %366 = tpu.dynamic_rotate %353 by %c475_i32_171 dim 1 : vector<8x512xf32>, i32 -> vector<8x512xf32>
    %367 = vector.extract_strided_slice %366 {offsets = [0, 0], sizes = [8, 256], strides = [1, 1]} : vector<8x512xf32> to vector<8x256xf32>
    %c474_i32_172 = arith.constant 474 : i32
    %368 = tpu.dynamic_rotate %353 by %c474_i32_172 dim 1 : vector<8x512xf32>, i32 -> vector<8x512xf32>
    %369 = vector.extract_strided_slice %368 {offsets = [0, 0], sizes = [8, 256], strides = [1, 1]} : vector<8x512xf32> to vector<8x256xf32>
    %c473_i32_173 = arith.constant 473 : i32
    %370 = tpu.dynamic_rotate %353 by %c473_i32_173 dim 1 : vector<8x512xf32>, i32 -> vector<8x512xf32>
    %371 = vector.extract_strided_slice %370 {offsets = [0, 0], sizes = [8, 256], strides = [1, 1]} : vector<8x512xf32> to vector<8x256xf32>
    %c395_i32_174 = arith.constant 395 : i32
    %372 = tpu.dynamic_rotate %353 by %c395_i32_174 dim 1 : vector<8x512xf32>, i32 -> vector<8x512xf32>
    %373 = vector.extract_strided_slice %372 {offsets = [0, 0], sizes = [8, 256], strides = [1, 1]} : vector<8x512xf32> to vector<8x256xf32>
    %c394_i32_175 = arith.constant 394 : i32
    %374 = tpu.dynamic_rotate %353 by %c394_i32_175 dim 1 : vector<8x512xf32>, i32 -> vector<8x512xf32>
    %375 = vector.extract_strided_slice %374 {offsets = [0, 0], sizes = [8, 256], strides = [1, 1]} : vector<8x512xf32> to vector<8x256xf32>
    %c393_i32_176 = arith.constant 393 : i32
    %376 = tpu.dynamic_rotate %353 by %c393_i32_176 dim 1 : vector<8x512xf32>, i32 -> vector<8x512xf32>
    %377 = vector.extract_strided_slice %376 {offsets = [0, 0], sizes = [8, 256], strides = [1, 1]} : vector<8x512xf32> to vector<8x256xf32>
    %c385_i32_177 = arith.constant 385 : i32
    %378 = tpu.dynamic_rotate %353 by %c385_i32_177 dim 1 : vector<8x512xf32>, i32 -> vector<8x512xf32>
    %379 = vector.extract_strided_slice %378 {offsets = [0, 0], sizes = [8, 256], strides = [1, 1]} : vector<8x512xf32> to vector<8x256xf32>
    %c384_i32_178 = arith.constant 384 : i32
    %380 = tpu.dynamic_rotate %353 by %c384_i32_178 dim 1 : vector<8x512xf32>, i32 -> vector<8x512xf32>
    %381 = vector.extract_strided_slice %380 {offsets = [0, 0], sizes = [8, 256], strides = [1, 1]} : vector<8x512xf32> to vector<8x256xf32>
    %c383_i32_179 = arith.constant 383 : i32
    %382 = tpu.dynamic_rotate %353 by %c383_i32_179 dim 1 : vector<8x512xf32>, i32 -> vector<8x512xf32>
    %383 = vector.extract_strided_slice %382 {offsets = [0, 0], sizes = [8, 256], strides = [1, 1]} : vector<8x512xf32> to vector<8x256xf32>
    %c375_i32_180 = arith.constant 375 : i32
    %384 = tpu.dynamic_rotate %353 by %c375_i32_180 dim 1 : vector<8x512xf32>, i32 -> vector<8x512xf32>
    %385 = vector.extract_strided_slice %384 {offsets = [0, 0], sizes = [8, 256], strides = [1, 1]} : vector<8x512xf32> to vector<8x256xf32>
    %c374_i32_181 = arith.constant 374 : i32
    %386 = tpu.dynamic_rotate %353 by %c374_i32_181 dim 1 : vector<8x512xf32>, i32 -> vector<8x512xf32>
    %387 = vector.extract_strided_slice %386 {offsets = [0, 0], sizes = [8, 256], strides = [1, 1]} : vector<8x512xf32> to vector<8x256xf32>
    %c373_i32_182 = arith.constant 373 : i32
    %388 = tpu.dynamic_rotate %353 by %c373_i32_182 dim 1 : vector<8x512xf32>, i32 -> vector<8x512xf32>
    %389 = vector.extract_strided_slice %388 {offsets = [0, 0], sizes = [8, 256], strides = [1, 1]} : vector<8x512xf32> to vector<8x256xf32>
    %c295_i32_183 = arith.constant 295 : i32
    %390 = tpu.dynamic_rotate %353 by %c295_i32_183 dim 1 : vector<8x512xf32>, i32 -> vector<8x512xf32>
    %391 = vector.extract_strided_slice %390 {offsets = [0, 0], sizes = [8, 256], strides = [1, 1]} : vector<8x512xf32> to vector<8x256xf32>
    %c294_i32_184 = arith.constant 294 : i32
    %392 = tpu.dynamic_rotate %353 by %c294_i32_184 dim 1 : vector<8x512xf32>, i32 -> vector<8x512xf32>
    %393 = vector.extract_strided_slice %392 {offsets = [0, 0], sizes = [8, 256], strides = [1, 1]} : vector<8x512xf32> to vector<8x256xf32>
    %c293_i32_185 = arith.constant 293 : i32
    %394 = tpu.dynamic_rotate %353 by %c293_i32_185 dim 1 : vector<8x512xf32>, i32 -> vector<8x512xf32>
    %395 = vector.extract_strided_slice %394 {offsets = [0, 0], sizes = [8, 256], strides = [1, 1]} : vector<8x512xf32> to vector<8x256xf32>
    %c285_i32_186 = arith.constant 285 : i32
    %396 = tpu.dynamic_rotate %353 by %c285_i32_186 dim 1 : vector<8x512xf32>, i32 -> vector<8x512xf32>
    %397 = vector.extract_strided_slice %396 {offsets = [0, 0], sizes = [8, 256], strides = [1, 1]} : vector<8x512xf32> to vector<8x256xf32>
    %c284_i32_187 = arith.constant 284 : i32
    %398 = tpu.dynamic_rotate %353 by %c284_i32_187 dim 1 : vector<8x512xf32>, i32 -> vector<8x512xf32>
    %399 = vector.extract_strided_slice %398 {offsets = [0, 0], sizes = [8, 256], strides = [1, 1]} : vector<8x512xf32> to vector<8x256xf32>
    %c283_i32_188 = arith.constant 283 : i32
    %400 = tpu.dynamic_rotate %353 by %c283_i32_188 dim 1 : vector<8x512xf32>, i32 -> vector<8x512xf32>
    %401 = vector.extract_strided_slice %400 {offsets = [0, 0], sizes = [8, 256], strides = [1, 1]} : vector<8x512xf32> to vector<8x256xf32>
    %c275_i32_189 = arith.constant 275 : i32
    %402 = tpu.dynamic_rotate %353 by %c275_i32_189 dim 1 : vector<8x512xf32>, i32 -> vector<8x512xf32>
    %403 = vector.extract_strided_slice %402 {offsets = [0, 0], sizes = [8, 256], strides = [1, 1]} : vector<8x512xf32> to vector<8x256xf32>
    %c274_i32_190 = arith.constant 274 : i32
    %404 = tpu.dynamic_rotate %353 by %c274_i32_190 dim 1 : vector<8x512xf32>, i32 -> vector<8x512xf32>
    %405 = vector.extract_strided_slice %404 {offsets = [0, 0], sizes = [8, 256], strides = [1, 1]} : vector<8x512xf32> to vector<8x256xf32>
    %c273_i32_191 = arith.constant 273 : i32
    %406 = tpu.dynamic_rotate %353 by %c273_i32_191 dim 1 : vector<8x512xf32>, i32 -> vector<8x512xf32>
    %407 = vector.extract_strided_slice %406 {offsets = [0, 0], sizes = [8, 256], strides = [1, 1]} : vector<8x512xf32> to vector<8x256xf32>
    %cst_192 = arith.constant 0.000000e+00 : f32
    %408 = vector.broadcast %cst_192 : f32 to vector<8x256xf32>
    %409 = tpu.concatenate %355, %357, %359, %361, %363, %365, %367, %369, %371, %373, %375, %377, %379, %381, %383, %385 in 0 : vector<8x256xf32>, vector<8x256xf32>, vector<8x256xf32>, vector<8x256xf32>, vector<8x256xf32>, vector<8x256xf32>, vector<8x256xf32>, vector<8x256xf32>, vector<8x256xf32>, vector<8x256xf32>, vector<8x256xf32>, vector<8x256xf32>, vector<8x256xf32>, vector<8x256xf32>, vector<8x256xf32>, vector<8x256xf32> -> vector<128x256xf32>
    %410 = tpu.concatenate %387, %389, %391, %393, %395, %397, %399, %401, %403, %405, %407, %408 in 0 : vector<8x256xf32>, vector<8x256xf32>, vector<8x256xf32>, vector<8x256xf32>, vector<8x256xf32>, vector<8x256xf32>, vector<8x256xf32>, vector<8x256xf32>, vector<8x256xf32>, vector<8x256xf32>, vector<8x256xf32>, vector<8x256xf32> -> vector<96x256xf32>
    %411 = tpu.concatenate %409, %410 in 0 : vector<128x256xf32>, vector<96x256xf32> -> vector<224x256xf32>
    %cst_193 = arith.constant dense<0.000000e+00> : vector<8x256xf32>
    %412 = tpu.matmul %5, %411, %cst_193 {dimension_numbers = #tpu.dot_dimension_numbers<[1], [0], [0], [1], [0, 0, 1, 1], [], []>} : vector<8x224xf32>, vector<224x256xf32>, vector<8x256xf32> -> vector<8x256xf32>
    %413 = arith.addf %412, %11 : vector<8x256xf32>
    %c0_194 = arith.constant 0 : index
    %c0_195 = arith.constant 0 : index
    %c384_196 = arith.constant 384 : index
    %414 = vector.load %arg1[%c0_194, %c0_195, %c384_196] : memref<1x8x1280xf32, #tpu.memory_space<vmem>>, vector<1x8x256xf32>
    %415 = vector.shape_cast %414 : vector<1x8x256xf32> to vector<8x256xf32>
    %416 = arith.addf %413, %415 : vector<8x256xf32>
    %cst_197 = arith.constant 0.000000e+00 : f32
    %417 = vector.broadcast %cst_197 : f32 to vector<8x256xf32>
    %418 = arith.maximumf %416, %417 : vector<8x256xf32>
    %c0_198 = arith.constant 0 : index
    %c0_199 = arith.constant 0 : index
    %c256_200 = arith.constant 256 : index
    %419 = vector.load %arg7[%c0_198, %c0_199, %c256_200] : memref<1x8x1024xf32, #tpu.memory_space<vmem>>, vector<1x8x256xf32>
    %420 = vector.shape_cast %419 : vector<1x8x256xf32> to vector<8x256xf32>
    %421 = vector.shape_cast %418 : vector<8x256xf32> to vector<1x8x256xf32>
    tpu.vector_store %arg7[%c0_198, %c0_199, %c256_200], %421 {strides = array<i32>} : memref<1x8x1024xf32, #tpu.memory_space<vmem>>, vector<1x8x256xf32>,
    %c0_201 = arith.constant 0 : index
    %c512_202 = arith.constant 512 : index
    %422 = vector.load %arg8[%c0_201, %c512_202] : memref<8x1280xf32, #tpu.memory_space<vmem>>, vector<8x512xf32>
    %c495_i32_203 = arith.constant 495 : i32
    %423 = tpu.dynamic_rotate %422 by %c495_i32_203 dim 1 : vector<8x512xf32>, i32 -> vector<8x512xf32>
    %424 = vector.extract_strided_slice %423 {offsets = [0, 0], sizes = [8, 256], strides = [1, 1]} : vector<8x512xf32> to vector<8x256xf32>
    %c494_i32_204 = arith.constant 494 : i32
    %425 = tpu.dynamic_rotate %422 by %c494_i32_204 dim 1 : vector<8x512xf32>, i32 -> vector<8x512xf32>
    %426 = vector.extract_strided_slice %425 {offsets = [0, 0], sizes = [8, 256], strides = [1, 1]} : vector<8x512xf32> to vector<8x256xf32>
    %c493_i32_205 = arith.constant 493 : i32
    %427 = tpu.dynamic_rotate %422 by %c493_i32_205 dim 1 : vector<8x512xf32>, i32 -> vector<8x512xf32>
    %428 = vector.extract_strided_slice %427 {offsets = [0, 0], sizes = [8, 256], strides = [1, 1]} : vector<8x512xf32> to vector<8x256xf32>
    %c485_i32_206 = arith.constant 485 : i32
    %429 = tpu.dynamic_rotate %422 by %c485_i32_206 dim 1 : vector<8x512xf32>, i32 -> vector<8x512xf32>
    %430 = vector.extract_strided_slice %429 {offsets = [0, 0], sizes = [8, 256], strides = [1, 1]} : vector<8x512xf32> to vector<8x256xf32>
    %c484_i32_207 = arith.constant 484 : i32
    %431 = tpu.dynamic_rotate %422 by %c484_i32_207 dim 1 : vector<8x512xf32>, i32 -> vector<8x512xf32>
    %432 = vector.extract_strided_slice %431 {offsets = [0, 0], sizes = [8, 256], strides = [1, 1]} : vector<8x512xf32> to vector<8x256xf32>
    %c483_i32_208 = arith.constant 483 : i32
    %433 = tpu.dynamic_rotate %422 by %c483_i32_208 dim 1 : vector<8x512xf32>, i32 -> vector<8x512xf32>
    %434 = vector.extract_strided_slice %433 {offsets = [0, 0], sizes = [8, 256], strides = [1, 1]} : vector<8x512xf32> to vector<8x256xf32>
    %c475_i32_209 = arith.constant 475 : i32
    %435 = tpu.dynamic_rotate %422 by %c475_i32_209 dim 1 : vector<8x512xf32>, i32 -> vector<8x512xf32>
    %436 = vector.extract_strided_slice %435 {offsets = [0, 0], sizes = [8, 256], strides = [1, 1]} : vector<8x512xf32> to vector<8x256xf32>
    %c474_i32_210 = arith.constant 474 : i32
    %437 = tpu.dynamic_rotate %422 by %c474_i32_210 dim 1 : vector<8x512xf32>, i32 -> vector<8x512xf32>
    %438 = vector.extract_strided_slice %437 {offsets = [0, 0], sizes = [8, 256], strides = [1, 1]} : vector<8x512xf32> to vector<8x256xf32>
    %c473_i32_211 = arith.constant 473 : i32
    %439 = tpu.dynamic_rotate %422 by %c473_i32_211 dim 1 : vector<8x512xf32>, i32 -> vector<8x512xf32>
    %440 = vector.extract_strided_slice %439 {offsets = [0, 0], sizes = [8, 256], strides = [1, 1]} : vector<8x512xf32> to vector<8x256xf32>
    %c395_i32_212 = arith.constant 395 : i32
    %441 = tpu.dynamic_rotate %422 by %c395_i32_212 dim 1 : vector<8x512xf32>, i32 -> vector<8x512xf32>
    %442 = vector.extract_strided_slice %441 {offsets = [0, 0], sizes = [8, 256], strides = [1, 1]} : vector<8x512xf32> to vector<8x256xf32>
    %c394_i32_213 = arith.constant 394 : i32
    %443 = tpu.dynamic_rotate %422 by %c394_i32_213 dim 1 : vector<8x512xf32>, i32 -> vector<8x512xf32>
    %444 = vector.extract_strided_slice %443 {offsets = [0, 0], sizes = [8, 256], strides = [1, 1]} : vector<8x512xf32> to vector<8x256xf32>
    %c393_i32_214 = arith.constant 393 : i32
    %445 = tpu.dynamic_rotate %422 by %c393_i32_214 dim 1 : vector<8x512xf32>, i32 -> vector<8x512xf32>
    %446 = vector.extract_strided_slice %445 {offsets = [0, 0], sizes = [8, 256], strides = [1, 1]} : vector<8x512xf32> to vector<8x256xf32>
    %c385_i32_215 = arith.constant 385 : i32
    %447 = tpu.dynamic_rotate %422 by %c385_i32_215 dim 1 : vector<8x512xf32>, i32 -> vector<8x512xf32>
    %448 = vector.extract_strided_slice %447 {offsets = [0, 0], sizes = [8, 256], strides = [1, 1]} : vector<8x512xf32> to vector<8x256xf32>
    %c384_i32_216 = arith.constant 384 : i32
    %449 = tpu.dynamic_rotate %422 by %c384_i32_216 dim 1 : vector<8x512xf32>, i32 -> vector<8x512xf32>
    %450 = vector.extract_strided_slice %449 {offsets = [0, 0], sizes = [8, 256], strides = [1, 1]} : vector<8x512xf32> to vector<8x256xf32>
    %c383_i32_217 = arith.constant 383 : i32
    %451 = tpu.dynamic_rotate %422 by %c383_i32_217 dim 1 : vector<8x512xf32>, i32 -> vector<8x512xf32>
    %452 = vector.extract_strided_slice %451 {offsets = [0, 0], sizes = [8, 256], strides = [1, 1]} : vector<8x512xf32> to vector<8x256xf32>
    %c375_i32_218 = arith.constant 375 : i32
    %453 = tpu.dynamic_rotate %422 by %c375_i32_218 dim 1 : vector<8x512xf32>, i32 -> vector<8x512xf32>
    %454 = vector.extract_strided_slice %453 {offsets = [0, 0], sizes = [8, 256], strides = [1, 1]} : vector<8x512xf32> to vector<8x256xf32>
    %c374_i32_219 = arith.constant 374 : i32
    %455 = tpu.dynamic_rotate %422 by %c374_i32_219 dim 1 : vector<8x512xf32>, i32 -> vector<8x512xf32>
    %456 = vector.extract_strided_slice %455 {offsets = [0, 0], sizes = [8, 256], strides = [1, 1]} : vector<8x512xf32> to vector<8x256xf32>
    %c373_i32_220 = arith.constant 373 : i32
    %457 = tpu.dynamic_rotate %422 by %c373_i32_220 dim 1 : vector<8x512xf32>, i32 -> vector<8x512xf32>
    %458 = vector.extract_strided_slice %457 {offsets = [0, 0], sizes = [8, 256], strides = [1, 1]} : vector<8x512xf32> to vector<8x256xf32>
    %c295_i32_221 = arith.constant 295 : i32
    %459 = tpu.dynamic_rotate %422 by %c295_i32_221 dim 1 : vector<8x512xf32>, i32 -> vector<8x512xf32>
    %460 = vector.extract_strided_slice %459 {offsets = [0, 0], sizes = [8, 256], strides = [1, 1]} : vector<8x512xf32> to vector<8x256xf32>
    %c294_i32_222 = arith.constant 294 : i32
    %461 = tpu.dynamic_rotate %422 by %c294_i32_222 dim 1 : vector<8x512xf32>, i32 -> vector<8x512xf32>
    %462 = vector.extract_strided_slice %461 {offsets = [0, 0], sizes = [8, 256], strides = [1, 1]} : vector<8x512xf32> to vector<8x256xf32>
    %c293_i32_223 = arith.constant 293 : i32
    %463 = tpu.dynamic_rotate %422 by %c293_i32_223 dim 1 : vector<8x512xf32>, i32 -> vector<8x512xf32>
    %464 = vector.extract_strided_slice %463 {offsets = [0, 0], sizes = [8, 256], strides = [1, 1]} : vector<8x512xf32> to vector<8x256xf32>
    %c285_i32_224 = arith.constant 285 : i32
    %465 = tpu.dynamic_rotate %422 by %c285_i32_224 dim 1 : vector<8x512xf32>, i32 -> vector<8x512xf32>
    %466 = vector.extract_strided_slice %465 {offsets = [0, 0], sizes = [8, 256], strides = [1, 1]} : vector<8x512xf32> to vector<8x256xf32>
    %c284_i32_225 = arith.constant 284 : i32
    %467 = tpu.dynamic_rotate %422 by %c284_i32_225 dim 1 : vector<8x512xf32>, i32 -> vector<8x512xf32>
    %468 = vector.extract_strided_slice %467 {offsets = [0, 0], sizes = [8, 256], strides = [1, 1]} : vector<8x512xf32> to vector<8x256xf32>
    %c283_i32_226 = arith.constant 283 : i32
    %469 = tpu.dynamic_rotate %422 by %c283_i32_226 dim 1 : vector<8x512xf32>, i32 -> vector<8x512xf32>
    %470 = vector.extract_strided_slice %469 {offsets = [0, 0], sizes = [8, 256], strides = [1, 1]} : vector<8x512xf32> to vector<8x256xf32>
    %c275_i32_227 = arith.constant 275 : i32
    %471 = tpu.dynamic_rotate %422 by %c275_i32_227 dim 1 : vector<8x512xf32>, i32 -> vector<8x512xf32>
    %472 = vector.extract_strided_slice %471 {offsets = [0, 0], sizes = [8, 256], strides = [1, 1]} : vector<8x512xf32> to vector<8x256xf32>
    %c274_i32_228 = arith.constant 274 : i32
    %473 = tpu.dynamic_rotate %422 by %c274_i32_228 dim 1 : vector<8x512xf32>, i32 -> vector<8x512xf32>
    %474 = vector.extract_strided_slice %473 {offsets = [0, 0], sizes = [8, 256], strides = [1, 1]} : vector<8x512xf32> to vector<8x256xf32>
    %c273_i32_229 = arith.constant 273 : i32
    %475 = tpu.dynamic_rotate %422 by %c273_i32_229 dim 1 : vector<8x512xf32>, i32 -> vector<8x512xf32>
    %476 = vector.extract_strided_slice %475 {offsets = [0, 0], sizes = [8, 256], strides = [1, 1]} : vector<8x512xf32> to vector<8x256xf32>
    %cst_230 = arith.constant 0.000000e+00 : f32
    %477 = vector.broadcast %cst_230 : f32 to vector<8x256xf32>
    %478 = tpu.concatenate %424, %426, %428, %430, %432, %434, %436, %438, %440, %442, %444, %446, %448, %450, %452, %454 in 0 : vector<8x256xf32>, vector<8x256xf32>, vector<8x256xf32>, vector<8x256xf32>, vector<8x256xf32>, vector<8x256xf32>, vector<8x256xf32>, vector<8x256xf32>, vector<8x256xf32>, vector<8x256xf32>, vector<8x256xf32>, vector<8x256xf32>, vector<8x256xf32>, vector<8x256xf32>, vector<8x256xf32>, vector<8x256xf32> -> vector<128x256xf32>
    %479 = tpu.concatenate %456, %458, %460, %462, %464, %466, %468, %470, %472, %474, %476, %477 in 0 : vector<8x256xf32>, vector<8x256xf32>, vector<8x256xf32>, vector<8x256xf32>, vector<8x256xf32>, vector<8x256xf32>, vector<8x256xf32>, vector<8x256xf32>, vector<8x256xf32>, vector<8x256xf32>, vector<8x256xf32>, vector<8x256xf32> -> vector<96x256xf32>
    %480 = tpu.concatenate %478, %479 in 0 : vector<128x256xf32>, vector<96x256xf32> -> vector<224x256xf32>
    %cst_231 = arith.constant dense<0.000000e+00> : vector<8x256xf32>
    %481 = tpu.matmul %5, %480, %cst_231 {dimension_numbers = #tpu.dot_dimension_numbers<[1], [0], [0], [1], [0, 0, 1, 1], [], []>} : vector<8x224xf32>, vector<224x256xf32>, vector<8x256xf32> -> vector<8x256xf32>
    %482 = arith.addf %481, %11 : vector<8x256xf32>
    %c0_232 = arith.constant 0 : index
    %c0_233 = arith.constant 0 : index
    %c640_234 = arith.constant 640 : index
    %483 = vector.load %arg1[%c0_232, %c0_233, %c640_234] : memref<1x8x1280xf32, #tpu.memory_space<vmem>>, vector<1x8x256xf32>
    %484 = vector.shape_cast %483 : vector<1x8x256xf32> to vector<8x256xf32>
    %485 = arith.addf %482, %484 : vector<8x256xf32>
    %cst_235 = arith.constant 0.000000e+00 : f32
    %486 = vector.broadcast %cst_235 : f32 to vector<8x256xf32>
    %487 = arith.maximumf %485, %486 : vector<8x256xf32>
    %c0_236 = arith.constant 0 : index
    %c0_237 = arith.constant 0 : index
    %c512_238 = arith.constant 512 : index
    %488 = vector.load %arg7[%c0_236, %c0_237, %c512_238] : memref<1x8x1024xf32, #tpu.memory_space<vmem>>, vector<1x8x256xf32>
    %489 = vector.shape_cast %488 : vector<1x8x256xf32> to vector<8x256xf32>
    %490 = vector.shape_cast %487 : vector<8x256xf32> to vector<1x8x256xf32>
    tpu.vector_store %arg7[%c0_236, %c0_237, %c512_238], %490 {strides = array<i32>} : memref<1x8x1024xf32, #tpu.memory_space<vmem>>, vector<1x8x256xf32>,
    %c0_239 = arith.constant 0 : index
    %c768_240 = arith.constant 768 : index
    %491 = vector.load %arg8[%c0_239, %c768_240] : memref<8x1280xf32, #tpu.memory_space<vmem>>, vector<8x512xf32>
    %c495_i32_241 = arith.constant 495 : i32
    %492 = tpu.dynamic_rotate %491 by %c495_i32_241 dim 1 : vector<8x512xf32>, i32 -> vector<8x512xf32>
    %493 = vector.extract_strided_slice %492 {offsets = [0, 0], sizes = [8, 256], strides = [1, 1]} : vector<8x512xf32> to vector<8x256xf32>
    %c494_i32_242 = arith.constant 494 : i32
    %494 = tpu.dynamic_rotate %491 by %c494_i32_242 dim 1 : vector<8x512xf32>, i32 -> vector<8x512xf32>
    %495 = vector.extract_strided_slice %494 {offsets = [0, 0], sizes = [8, 256], strides = [1, 1]} : vector<8x512xf32> to vector<8x256xf32>
    %c493_i32_243 = arith.constant 493 : i32
    %496 = tpu.dynamic_rotate %491 by %c493_i32_243 dim 1 : vector<8x512xf32>, i32 -> vector<8x512xf32>
    %497 = vector.extract_strided_slice %496 {offsets = [0, 0], sizes = [8, 256], strides = [1, 1]} : vector<8x512xf32> to vector<8x256xf32>
    %c485_i32_244 = arith.constant 485 : i32
    %498 = tpu.dynamic_rotate %491 by %c485_i32_244 dim 1 : vector<8x512xf32>, i32 -> vector<8x512xf32>
    %499 = vector.extract_strided_slice %498 {offsets = [0, 0], sizes = [8, 256], strides = [1, 1]} : vector<8x512xf32> to vector<8x256xf32>
    %c484_i32_245 = arith.constant 484 : i32
    %500 = tpu.dynamic_rotate %491 by %c484_i32_245 dim 1 : vector<8x512xf32>, i32 -> vector<8x512xf32>
    %501 = vector.extract_strided_slice %500 {offsets = [0, 0], sizes = [8, 256], strides = [1, 1]} : vector<8x512xf32> to vector<8x256xf32>
    %c483_i32_246 = arith.constant 483 : i32
    %502 = tpu.dynamic_rotate %491 by %c483_i32_246 dim 1 : vector<8x512xf32>, i32 -> vector<8x512xf32>
    %503 = vector.extract_strided_slice %502 {offsets = [0, 0], sizes = [8, 256], strides = [1, 1]} : vector<8x512xf32> to vector<8x256xf32>
    %c475_i32_247 = arith.constant 475 : i32
    %504 = tpu.dynamic_rotate %491 by %c475_i32_247 dim 1 : vector<8x512xf32>, i32 -> vector<8x512xf32>
    %505 = vector.extract_strided_slice %504 {offsets = [0, 0], sizes = [8, 256], strides = [1, 1]} : vector<8x512xf32> to vector<8x256xf32>
    %c474_i32_248 = arith.constant 474 : i32
    %506 = tpu.dynamic_rotate %491 by %c474_i32_248 dim 1 : vector<8x512xf32>, i32 -> vector<8x512xf32>
    %507 = vector.extract_strided_slice %506 {offsets = [0, 0], sizes = [8, 256], strides = [1, 1]} : vector<8x512xf32> to vector<8x256xf32>
    %c473_i32_249 = arith.constant 473 : i32
    %508 = tpu.dynamic_rotate %491 by %c473_i32_249 dim 1 : vector<8x512xf32>, i32 -> vector<8x512xf32>
    %509 = vector.extract_strided_slice %508 {offsets = [0, 0], sizes = [8, 256], strides = [1, 1]} : vector<8x512xf32> to vector<8x256xf32>
    %c395_i32_250 = arith.constant 395 : i32
    %510 = tpu.dynamic_rotate %491 by %c395_i32_250 dim 1 : vector<8x512xf32>, i32 -> vector<8x512xf32>
    %511 = vector.extract_strided_slice %510 {offsets = [0, 0], sizes = [8, 256], strides = [1, 1]} : vector<8x512xf32> to vector<8x256xf32>
    %c394_i32_251 = arith.constant 394 : i32
    %512 = tpu.dynamic_rotate %491 by %c394_i32_251 dim 1 : vector<8x512xf32>, i32 -> vector<8x512xf32>
    %513 = vector.extract_strided_slice %512 {offsets = [0, 0], sizes = [8, 256], strides = [1, 1]} : vector<8x512xf32> to vector<8x256xf32>
    %c393_i32_252 = arith.constant 393 : i32
    %514 = tpu.dynamic_rotate %491 by %c393_i32_252 dim 1 : vector<8x512xf32>, i32 -> vector<8x512xf32>
    %515 = vector.extract_strided_slice %514 {offsets = [0, 0], sizes = [8, 256], strides = [1, 1]} : vector<8x512xf32> to vector<8x256xf32>
    %c385_i32_253 = arith.constant 385 : i32
    %516 = tpu.dynamic_rotate %491 by %c385_i32_253 dim 1 : vector<8x512xf32>, i32 -> vector<8x512xf32>
    %517 = vector.extract_strided_slice %516 {offsets = [0, 0], sizes = [8, 256], strides = [1, 1]} : vector<8x512xf32> to vector<8x256xf32>
    %c384_i32_254 = arith.constant 384 : i32
    %518 = tpu.dynamic_rotate %491 by %c384_i32_254 dim 1 : vector<8x512xf32>, i32 -> vector<8x512xf32>
    %519 = vector.extract_strided_slice %518 {offsets = [0, 0], sizes = [8, 256], strides = [1, 1]} : vector<8x512xf32> to vector<8x256xf32>
    %c383_i32_255 = arith.constant 383 : i32
    %520 = tpu.dynamic_rotate %491 by %c383_i32_255 dim 1 : vector<8x512xf32>, i32 -> vector<8x512xf32>
    %521 = vector.extract_strided_slice %520 {offsets = [0, 0], sizes = [8, 256], strides = [1, 1]} : vector<8x512xf32> to vector<8x256xf32>
    %c375_i32_256 = arith.constant 375 : i32
    %522 = tpu.dynamic_rotate %491 by %c375_i32_256 dim 1 : vector<8x512xf32>, i32 -> vector<8x512xf32>
    %523 = vector.extract_strided_slice %522 {offsets = [0, 0], sizes = [8, 256], strides = [1, 1]} : vector<8x512xf32> to vector<8x256xf32>
    %c374_i32_257 = arith.constant 374 : i32
    %524 = tpu.dynamic_rotate %491 by %c374_i32_257 dim 1 : vector<8x512xf32>, i32 -> vector<8x512xf32>
    %525 = vector.extract_strided_slice %524 {offsets = [0, 0], sizes = [8, 256], strides = [1, 1]} : vector<8x512xf32> to vector<8x256xf32>
    %c373_i32_258 = arith.constant 373 : i32
    %526 = tpu.dynamic_rotate %491 by %c373_i32_258 dim 1 : vector<8x512xf32>, i32 -> vector<8x512xf32>
    %527 = vector.extract_strided_slice %526 {offsets = [0, 0], sizes = [8, 256], strides = [1, 1]} : vector<8x512xf32> to vector<8x256xf32>
    %c295_i32_259 = arith.constant 295 : i32
    %528 = tpu.dynamic_rotate %491 by %c295_i32_259 dim 1 : vector<8x512xf32>, i32 -> vector<8x512xf32>
    %529 = vector.extract_strided_slice %528 {offsets = [0, 0], sizes = [8, 256], strides = [1, 1]} : vector<8x512xf32> to vector<8x256xf32>
    %c294_i32_260 = arith.constant 294 : i32
    %530 = tpu.dynamic_rotate %491 by %c294_i32_260 dim 1 : vector<8x512xf32>, i32 -> vector<8x512xf32>
    %531 = vector.extract_strided_slice %530 {offsets = [0, 0], sizes = [8, 256], strides = [1, 1]} : vector<8x512xf32> to vector<8x256xf32>
    %c293_i32_261 = arith.constant 293 : i32
    %532 = tpu.dynamic_rotate %491 by %c293_i32_261 dim 1 : vector<8x512xf32>, i32 -> vector<8x512xf32>
    %533 = vector.extract_strided_slice %532 {offsets = [0, 0], sizes = [8, 256], strides = [1, 1]} : vector<8x512xf32> to vector<8x256xf32>
    %c285_i32_262 = arith.constant 285 : i32
    %534 = tpu.dynamic_rotate %491 by %c285_i32_262 dim 1 : vector<8x512xf32>, i32 -> vector<8x512xf32>
    %535 = vector.extract_strided_slice %534 {offsets = [0, 0], sizes = [8, 256], strides = [1, 1]} : vector<8x512xf32> to vector<8x256xf32>
    %c284_i32_263 = arith.constant 284 : i32
    %536 = tpu.dynamic_rotate %491 by %c284_i32_263 dim 1 : vector<8x512xf32>, i32 -> vector<8x512xf32>
    %537 = vector.extract_strided_slice %536 {offsets = [0, 0], sizes = [8, 256], strides = [1, 1]} : vector<8x512xf32> to vector<8x256xf32>
    %c283_i32_264 = arith.constant 283 : i32
    %538 = tpu.dynamic_rotate %491 by %c283_i32_264 dim 1 : vector<8x512xf32>, i32 -> vector<8x512xf32>
    %539 = vector.extract_strided_slice %538 {offsets = [0, 0], sizes = [8, 256], strides = [1, 1]} : vector<8x512xf32> to vector<8x256xf32>
    %c275_i32_265 = arith.constant 275 : i32
    %540 = tpu.dynamic_rotate %491 by %c275_i32_265 dim 1 : vector<8x512xf32>, i32 -> vector<8x512xf32>
    %541 = vector.extract_strided_slice %540 {offsets = [0, 0], sizes = [8, 256], strides = [1, 1]} : vector<8x512xf32> to vector<8x256xf32>
    %c274_i32_266 = arith.constant 274 : i32
    %542 = tpu.dynamic_rotate %491 by %c274_i32_266 dim 1 : vector<8x512xf32>, i32 -> vector<8x512xf32>
    %543 = vector.extract_strided_slice %542 {offsets = [0, 0], sizes = [8, 256], strides = [1, 1]} : vector<8x512xf32> to vector<8x256xf32>
    %c273_i32_267 = arith.constant 273 : i32
    %544 = tpu.dynamic_rotate %491 by %c273_i32_267 dim 1 : vector<8x512xf32>, i32 -> vector<8x512xf32>
    %545 = vector.extract_strided_slice %544 {offsets = [0, 0], sizes = [8, 256], strides = [1, 1]} : vector<8x512xf32> to vector<8x256xf32>
    %cst_268 = arith.constant 0.000000e+00 : f32
    %546 = vector.broadcast %cst_268 : f32 to vector<8x256xf32>
    %547 = tpu.concatenate %493, %495, %497, %499, %501, %503, %505, %507, %509, %511, %513, %515, %517, %519, %521, %523 in 0 : vector<8x256xf32>, vector<8x256xf32>, vector<8x256xf32>, vector<8x256xf32>, vector<8x256xf32>, vector<8x256xf32>, vector<8x256xf32>, vector<8x256xf32>, vector<8x256xf32>, vector<8x256xf32>, vector<8x256xf32>, vector<8x256xf32>, vector<8x256xf32>, vector<8x256xf32>, vector<8x256xf32>, vector<8x256xf32> -> vector<128x256xf32>
    %548 = tpu.concatenate %525, %527, %529, %531, %533, %535, %537, %539, %541, %543, %545, %546 in 0 : vector<8x256xf32>, vector<8x256xf32>, vector<8x256xf32>, vector<8x256xf32>, vector<8x256xf32>, vector<8x256xf32>, vector<8x256xf32>, vector<8x256xf32>, vector<8x256xf32>, vector<8x256xf32>, vector<8x256xf32>, vector<8x256xf32> -> vector<96x256xf32>
    %549 = tpu.concatenate %547, %548 in 0 : vector<128x256xf32>, vector<96x256xf32> -> vector<224x256xf32>
    %cst_269 = arith.constant dense<0.000000e+00> : vector<8x256xf32>
    %550 = tpu.matmul %5, %549, %cst_269 {dimension_numbers = #tpu.dot_dimension_numbers<[1], [0], [0], [1], [0, 0, 1, 1], [], []>} : vector<8x224xf32>, vector<224x256xf32>, vector<8x256xf32> -> vector<8x256xf32>
    %551 = arith.addf %550, %11 : vector<8x256xf32>
    %c0_270 = arith.constant 0 : index
    %c0_271 = arith.constant 0 : index
    %c896_272 = arith.constant 896 : index
    %552 = vector.load %arg1[%c0_270, %c0_271, %c896_272] : memref<1x8x1280xf32, #tpu.memory_space<vmem>>, vector<1x8x256xf32>
    %553 = vector.shape_cast %552 : vector<1x8x256xf32> to vector<8x256xf32>
    %554 = arith.addf %551, %553 : vector<8x256xf32>
    %cst_273 = arith.constant 0.000000e+00 : f32
    %555 = vector.broadcast %cst_273 : f32 to vector<8x256xf32>
    %556 = arith.maximumf %554, %555 : vector<8x256xf32>
    %c0_274 = arith.constant 0 : index
    %c0_275 = arith.constant 0 : index
    %c768_276 = arith.constant 768 : index
    %557 = vector.load %arg7[%c0_274, %c0_275, %c768_276] : memref<1x8x1024xf32, #tpu.memory_space<vmem>>, vector<1x8x256xf32>
    %558 = vector.shape_cast %557 : vector<1x8x256xf32> to vector<8x256xf32>
    %559 = vector.shape_cast %556 : vector<8x256xf32> to vector<1x8x256xf32>
    tpu.vector_store %arg7[%c0_274, %c0_275, %c768_276], %559 {strides = array<i32>} : memref<1x8x1024xf32, #tpu.memory_space<vmem>>, vector<1x8x256xf32>,
    return
  }
  func.func @transform_0(%arg0: i32) -> (i32, i32, i32) {
    %c0_i32 = arith.constant 0 : i32
    %c0_i32_0 = arith.constant 0 : i32
    %c0_i32_1 = arith.constant 0 : i32
    return %arg0, %c0_i32, %c0_i32_0 : i32, i32, i32
  }
  func.func @transform_1(%arg0: i32) -> (i32, i32) {
    %c0_i32 = arith.constant 0 : i32
    %c0_i32_0 = arith.constant 0 : i32
    %c0_i32_1 = arith.constant 0 : i32
    return %c0_i32, %c0_i32_0 : i32, i32
  }
  func.func @transform_2(%arg0: i32) -> (i32, i32) {
    %c0_i32 = arith.constant 0 : i32
    %c0_i32_0 = arith.constant 0 : i32
    %c0_i32_1 = arith.constant 0 : i32
    return %c0_i32, %c0_i32_0 : i32, i32
  }
  func.func @transform_3(%arg0: i32) -> (i32, i32) {
    %c0_i32 = arith.constant 0 : i32
    %c0_i32_0 = arith.constant 0 : i32
    %c0_i32_1 = arith.constant 0 : i32
    return %c0_i32, %c0_i32_0 : i32, i32
  }
  func.func @transform_4(%arg0: i32) -> (i32, i32) {
    %c0_i32 = arith.constant 0 : i32
    %c0_i32_0 = arith.constant 0 : i32
    %c0_i32_1 = arith.constant 0 : i32
    return %c0_i32, %c0_i32_0 : i32, i32
  }
  func.func @transform_5(%arg0: i32) -> (i32, i32) {
    %c0_i32 = arith.constant 0 : i32
    %c0_i32_0 = arith.constant 0 : i32
    %c0_i32_1 = arith.constant 0 : i32
    return %c0_i32, %c0_i32_0 : i32, i32
  }
  func.func @transform_6(%arg0: i32) -> (i32, i32, i32) {
    %c0_i32 = arith.constant 0 : i32
    %c0_i32_0 = arith.constant 0 : i32
    %c0_i32_1 = arith.constant 0 : i32
    return %arg0, %c0_i32, %c0_i32_0 : i32, i32, i32
  }
}

</mosaic_0001>

<llo_original>
// kernel: _lambda_.1
$region0: #{_lambda_.1}
  #allocation0 [shape = 'u32[]', space=smem, size = 0x4, offset = 0x4, fixed_abs, tag = 'smem constant byte address 0x4 - core index']
  #allocation1 [shape = 'u32[144,128]{1,0:T(1,128)}', space=vmem, size = 0x12000, scoped, tag = 'internal scratch']
  #allocation2 [shape = 'f32[8,1280]{1,0:T(8,128)}', space=vmem, size = 0xa000, scoped, tag = 'scratch operand']
  %s0 = inlined_call_operand.vmem [shape: f32[2,8,1280], index: 0, kind: input, shape index: {}]
  %s1 = inlined_call_operand.vmem [shape: f32[8,224], index: 1, kind: input, shape index: {}]
  %s2 = inlined_call_operand.vmem [shape: f32[8,1], index: 2, kind: input, shape index: {}]
  %s3 = inlined_call_operand.vmem [shape: f32[8,224], index: 3, kind: input, shape index: {}]
  %s4 = inlined_call_operand.vmem [shape: f32[8,1], index: 4, kind: input, shape index: {}]
  %s5 = inlined_call_operand.vmem [shape: f32[1,1024], index: 5, kind: input, shape index: {}]
  %s6 = inlined_call_operand.vmem [shape: f32[2,8,1024], index: 6, kind: output, shape index: {}]
  %s7 = sld [smem:[#allocation0]]
  $region57: #{_lambda_.1} parent=0
    _
  %s9 = ssub.s32 1, %s7
  %s10 = scalar_select 0, %s9, %s7
  loop: start=0, step=1, limit=4
  $region2: #{_lambda_.1} parent=0 // loop_pre_header
    _
  $region3: #{_lambda_.1} parent=0 // loop_header
    %s12 = sphi 0, %s16
    %p13 = scmp.ge.s32.totalorder %s12, 4
    %s22 = sphi 0, %s24
    %s25 = sphi 0, %s22
    %s26 = sphi 0, %s25
    %s42 = sphi 0, %s26
    %s46 = sphi 0, %s46
    %s48 = sphi 0, %s46
    %s49 = sphi 0, %s48
    %s63 = sphi 0, %s49
    %s67 = sphi 0, %s67
    %s69 = sphi 0, %s67
    %s70 = sphi 0, %s69
    %s84 = sphi 0, %s70
    %s88 = sphi 0, %s88
    %s90 = sphi 0, %s88
    %s91 = sphi 0, %s90
    %s105 = sphi 0, %s91
    %s109 = sphi 0, %s109
    %s111 = sphi 0, %s109
    %s112 = sphi 0, %s111
    %s126 = sphi 0, %s112
    %s130 = sphi 0, %s130
    %s132 = sphi 0, %s130
    %s133 = sphi 0, %s132
    %s147 = sphi 0, %s133
    %s153 = sphi 0, %s155
    %s156 = sphi 0, %s153
    %s157 = sphi 0, %s156
    %s173 = sphi 0, %s157
  $region4: #{_lambda_.1} parent=0 // loop_header_branch
    %15 = sbr.rel (%p13) target = $region8
  $region5: #{_lambda_.1} parent=0 // loop_body
    %s17 = ssub.s32 %s12, 1
    %s18 = ssub.s32 %s12, 2
    %s19 = sadd.s32 %s12, 1
    %s20 = ssub.s32 %s12, %s19
    %p21 = scmp.eq.s32.totalorder %s20, 0
    %s23 = sadd.s32 %s22, 1
    %s24 = scalar_select %p21, %s22, %s23
    %p27 = pneg %p21
    %p28 = scmp.eq.s32.totalorder %s12, 1
    %p29 = por %p27, %p28
    %p30 = scmp.ne.s32.totalorder %s22, %s25
    %p31 = scmp.eq.s32.totalorder %s12, 0
    %p32 = por %p30, %p31
    %p33 = scmp.ne.s32.totalorder %s22, %s25
    %p34 = scmp.eq.s32.totalorder %s17, 1
    %p35 = por %p33, %p34
    %p36 = scmp.ne.s32.totalorder %s25, %s26
    %p37 = scmp.eq.s32.totalorder %s17, 0
    %p38 = por %p36, %p37
    %p39 = scmp.ne.s32.totalorder %s25, %s26
    %p40 = scmp.eq.s32.totalorder %s18, 1
    %p41 = por %p39, %p40
    %p43 = scmp.ne.s32.totalorder %s26, %s42
    %p44 = scmp.eq.s32.totalorder %s18, 0
    %p45 = por %p43, %p44
    %s47 = sadd.s32 %s46, 1
    %p50 = scmp.eq.s32.totalorder %s12, 1
    %p51 = scmp.ne.s32.totalorder %s46, %s48
    %p52 = scmp.eq.s32.totalorder %s12, 0
    %p53 = por %p51, %p52
    %p54 = scmp.ne.s32.totalorder %s46, %s48
    %p55 = scmp.eq.s32.totalorder %s17, 1
    %p56 = por %p54, %p55
    %p57 = scmp.ne.s32.totalorder %s48, %s49
    %p58 = scmp.eq.s32.totalorder %s17, 0
    %p59 = por %p57, %p58
    %p60 = scmp.ne.s32.totalorder %s48, %s49
    %p61 = scmp.eq.s32.totalorder %s18, 1
    %p62 = por %p60, %p61
    %p64 = scmp.ne.s32.totalorder %s49, %s63
    %p65 = scmp.eq.s32.totalorder %s18, 0
    %p66 = por %p64, %p65
    %s68 = sadd.s32 %s67, 1
    %p71 = scmp.eq.s32.totalorder %s12, 1
    %p72 = scmp.ne.s32.totalorder %s67, %s69
    %p73 = scmp.eq.s32.totalorder %s12, 0
    %p74 = por %p72, %p73
    %p75 = scmp.ne.s32.totalorder %s67, %s69
    %p76 = scmp.eq.s32.totalorder %s17, 1
    %p77 = por %p75, %p76
    %p78 = scmp.ne.s32.totalorder %s69, %s70
    %p79 = scmp.eq.s32.totalorder %s17, 0
    %p80 = por %p78, %p79
    %p81 = scmp.ne.s32.totalorder %s69, %s70
    %p82 = scmp.eq.s32.totalorder %s18, 1
    %p83 = por %p81, %p82
    %p85 = scmp.ne.s32.totalorder %s70, %s84
    %p86 = scmp.eq.s32.totalorder %s18, 0
    %p87 = por %p85, %p86
    %s89 = sadd.s32 %s88, 1
    %p92 = scmp.eq.s32.totalorder %s12, 1
    %p93 = scmp.ne.s32.totalorder %s88, %s90
    %p94 = scmp.eq.s32.totalorder %s12, 0
    %p95 = por %p93, %p94
    %p96 = scmp.ne.s32.totalorder %s88, %s90
    %p97 = scmp.eq.s32.totalorder %s17, 1
    %p98 = por %p96, %p97
    %p99 = scmp.ne.s32.totalorder %s90, %s91
    %p100 = scmp.eq.s32.totalorder %s17, 0
    %p101 = por %p99, %p100
    %p102 = scmp.ne.s32.totalorder %s90, %s91
    %p103 = scmp.eq.s32.totalorder %s18, 1
    %p104 = por %p102, %p103
    %p106 = scmp.ne.s32.totalorder %s91, %s105
    %p107 = scmp.eq.s32.totalorder %s18, 0
    %p108 = por %p106, %p107
    %s110 = sadd.s32 %s109, 1
    %p113 = scmp.eq.s32.totalorder %s12, 1
    %p114 = scmp.ne.s32.totalorder %s109, %s111
    %p115 = scmp.eq.s32.totalorder %s12, 0
    %p116 = por %p114, %p115
    %p117 = scmp.ne.s32.totalorder %s109, %s111
    %p118 = scmp.eq.s32.totalorder %s17, 1
    %p119 = por %p117, %p118
    %p120 = scmp.ne.s32.totalorder %s111, %s112
    %p121 = scmp.eq.s32.totalorder %s17, 0
    %p122 = por %p120, %p121
    %p123 = scmp.ne.s32.totalorder %s111, %s112
    %p124 = scmp.eq.s32.totalorder %s18, 1
    %p125 = por %p123, %p124
    %p127 = scmp.ne.s32.totalorder %s112, %s126
    %p128 = scmp.eq.s32.totalorder %s18, 0
    %p129 = por %p127, %p128
    %s131 = sadd.s32 %s130, 1
    %p134 = scmp.eq.s32.totalorder %s12, 1
    %p135 = scmp.ne.s32.totalorder %s130, %s132
    %p136 = scmp.eq.s32.totalorder %s12, 0
    %p137 = por %p135, %p136
    %p138 = scmp.ne.s32.totalorder %s130, %s132
    %p139 = scmp.eq.s32.totalorder %s17, 1
    %p140 = por %p138, %p139
    %p141 = scmp.ne.s32.totalorder %s132, %s133
    %p142 = scmp.eq.s32.totalorder %s17, 0
    %p143 = por %p141, %p142
    %p144 = scmp.ne.s32.totalorder %s132, %s133
    %p145 = scmp.eq.s32.totalorder %s18, 1
    %p146 = por %p144, %p145
    %p148 = scmp.ne.s32.totalorder %s133, %s147
    %p149 = scmp.eq.s32.totalorder %s18, 0
    %p150 = por %p148, %p149
    %s151 = ssub.s32 %s12, %s19
    %p152 = scmp.eq.s32.totalorder %s151, 0
    %s154 = sadd.s32 %s153, 1
    %s155 = scalar_select %p152, %s153, %s154
    %p158 = pneg %p152
    %p159 = scmp.eq.s32.totalorder %s12, 1
    %p160 = por %p158, %p159
    %p161 = scmp.ne.s32.totalorder %s153, %s156
    %p162 = scmp.eq.s32.totalorder %s12, 0
    %p163 = por %p161, %p162
    %p164 = scmp.ne.s32.totalorder %s153, %s156
    %p165 = scmp.eq.s32.totalorder %s17, 1
    %p166 = por %p164, %p165
    %p167 = scmp.ne.s32.totalorder %s156, %s157
    %p168 = scmp.eq.s32.totalorder %s17, 0
    %p169 = por %p167, %p168
    %p170 = scmp.ne.s32.totalorder %s156, %s157
    %p171 = scmp.eq.s32.totalorder %s18, 1
    %p172 = por %p170, %p171
    %p174 = scmp.ne.s32.totalorder %s157, %s173
    %p175 = scmp.eq.s32.totalorder %s18, 0
    %p176 = por %p174, %p175
    %p177 = scmp.le.s32.totalorder 1, %s12
    %p178 = scmp.lt.s32.totalorder %s12, 3
    %p179 = pnand %p177, %p178
    %p180 = pneg %p179
    // Predicated region
    $region9: #{_lambda_.1} parent=5 // pred_check
      _
    $region10: #{_lambda_.1} parent=5 // pred_check_branch
      %182 = sbr.rel (%p179) target = $region12
    $region11: #{_lambda_.1} parent=5 // pred_region
      %s183 = ssub.s32 %s12, 1
      // Predicated region
      $region13: #{_lambda_.1} parent=11 // pred_check
        %p184 = pneg %p59
      $region14: #{_lambda_.1} parent=11 // pred_check_branch
        %186 = sbr.rel (%p184) target = $region16
      $region15: #{_lambda_.1} parent=11 // pred_region
        _
      $region16: #{_lambda_.1} parent=11 // pred_fallthru
        _
      // Predicated region
      $region17: #{_lambda_.1} parent=11 // pred_check
        %p187 = pneg %p80
      $region18: #{_lambda_.1} parent=11 // pred_check_branch
        %189 = sbr.rel (%p187) target = $region20
      $region19: #{_lambda_.1} parent=11 // pred_region
        _
      $region20: #{_lambda_.1} parent=11 // pred_fallthru
        _
      // Predicated region
      $region21: #{_lambda_.1} parent=11 // pred_check
        %p190 = pneg %p101
      $region22: #{_lambda_.1} parent=11 // pred_check_branch
        %192 = sbr.rel (%p190) target = $region24
      $region23: #{_lambda_.1} parent=11 // pred_region
        _
      $region24: #{_lambda_.1} parent=11 // pred_fallthru
        _
      // Predicated region
      $region25: #{_lambda_.1} parent=11 // pred_check
        %p193 = pneg %p122
      $region26: #{_lambda_.1} parent=11 // pred_check_branch
        %195 = sbr.rel (%p193) target = $region28
      $region27: #{_lambda_.1} parent=11 // pred_region
        _
      $region28: #{_lambda_.1} parent=11 // pred_fallthru
        _
      // Predicated region
      $region29: #{_lambda_.1} parent=11 // pred_check
        %p196 = pneg %p143
      $region30: #{_lambda_.1} parent=11 // pred_check_branch
        %198 = sbr.rel (%p196) target = $region32
      $region31: #{_lambda_.1} parent=11 // pred_region
        _
      $region32: #{_lambda_.1} parent=11 // pred_fallthru
        _
    $region12: #{_lambda_.1} parent=5 // pred_fallthru
      _
    %p199 = scmp.lt.s32.totalorder %s12, 2
    // Predicated region
    $region33: #{_lambda_.1} parent=5 // pred_check
      %p200 = pneg %p199
    $region34: #{_lambda_.1} parent=5 // pred_check_branch
      %202 = sbr.rel (%p200) target = $region36
    $region35: #{_lambda_.1} parent=5 // pred_region
      // Predicated region
      $region37: #{_lambda_.1} parent=35 // pred_check
        %p203 = pneg %p32
      $region38: #{_lambda_.1} parent=35 // pred_check_branch
        %205 = sbr.rel (%p203) target = $region40
      $region39: #{_lambda_.1} parent=35 // pred_region
        %p206 = scmp.lt.s32.totalorder %s12, 1
        %s207 = scalar_select %p206, %s12, 1
        %s208 = smul.addr %s207, 10
        %s209 = smul.addr %s208, 8
        %s210 = scalar_lea.vmem %s0, %s209
      $region40: #{_lambda_.1} parent=35 // pred_fallthru
        _
    $region36: #{_lambda_.1} parent=5 // pred_fallthru
      _
    %p211 = scmp.le.s32.totalorder 1, %s12
    %p212 = scmp.lt.s32.totalorder %s12, 3
    %p213 = pnand %p211, %p212
    %p214 = pneg %p213
    // Predicated region
    $region41: #{_lambda_.1} parent=5 // pred_check
      _
    $region42: #{_lambda_.1} parent=5 // pred_check_branch
      %216 = sbr.rel (%p213) target = $region44
    $region43: #{_lambda_.1} parent=5 // pred_region
      %s217 = ssub.s32 %s12, 1
      %p218 = scmp.lt.s32.totalorder %s17, 1
      %s219 = scalar_select %p218, %s17, 1
      %s220 = smul.addr %s219, 10
      %s221 = smul.addr %s220, 8
      %s222 = scalar_lea.vmem %s0, %s221
      %p223 = pneg %p38
      %p224 = pneg %p35
      %p225 = pneg %p59
      %p226 = pneg %p56
      %p227 = pneg %p80
      %p228 = pneg %p77
      %p229 = pneg %p101
      %p230 = pneg %p98
      %p231 = pneg %p122
      %p232 = pneg %p119
      %p233 = pneg %p143
      %p234 = pneg %p140
      %p235 = pneg %p169
      %p236 = pneg %p166
      %p237 = scmp.lt.s32.totalorder %s17, 1
      %s238 = scalar_select %p237, %s17, 1
      %s239 = smul.addr %s238, 8
      %s240 = smul.addr %s239, 8
      %s241 = scalar_lea.vmem %s6, %s240
      %p242 = scmp.lt.s32.totalorder %s17, 1
      %s243 = scalar_select %p242, %s17, 1
      %s244 = smul.addr %s243, 10
      %s245 = smul.addr %s244, 8
      %s246 = scalar_lea.vmem %s0, %s245
      %p247 = scmp.lt.s32.totalorder %s17, 1
      %s248 = scalar_select %p247, %s17, 1
      %s249 = smul.addr %s248, 8
      %s250 = smul.addr %s249, 8
      %s251 = scalar_lea.vmem %s6, %s250
      %252 = vst [vmem:[#allocation2] sm:$0xff] 0.0
      %253 = vst [vmem:[#allocation2 + $0x48] sm:$0xff] 0.0
      %v254 = vld [vmem:[%s1] sm:$0xff]
      %v255 = vld [vmem:[%s1 + $0x8] sm:$0xff]
      %v256 = vld [vmem:[%s3] sm:$0xff]
      %v257 = vld [vmem:[%s3 + $0x8] sm:$0xff]
      %v258 = vld [vmem:[%s2] sm:$0xff]
      %260 = vset.pattern.permute.xlu0 0
      %261 = vperm.xlu0 %260, %v258
      %v262 = vpop.permute.xlu0 %261
      %v264 = vld [vmem:[%s4] sm:$0xff]
      %266 = vset.pattern.permute.xlu0 0
      %267 = vperm.xlu0 %266, %v264
      %v268 = vpop.permute.xlu0 %267
      %v270 = vld [vmem:[%s246] sm:$0xff]
      %v271 = vld [vmem:[%s246 + $0x8] sm:$0xff]
      %v272 = vld [vmem:[%s246 + $0x10] sm:$0xff]
      %v273 = vld [vmem:[%s246 + $0x18] sm:$0xff]
      %274 = vrot.lane.b32.xlu0 %v270, 111
      %v275 = vpop.permute.xlu0 %274
      %276 = vrot.lane.b32.xlu0 %v271, 111
      %v277 = vpop.permute.xlu0 %276
      %278 = vrot.lane.b32.xlu0 %v272, 111
      %v279 = vpop.permute.xlu0 %278
      %v280 = vlaneseq
      %v281 = vand.u32 %v280, 127
      %vm282 = vcmp.lt.s32.totalorder %v281, 111
      %v283 = vsel %vm282, %v277, %v279
      %v284 = vsel %vm282, %v275, %v277
      %285 = vrot.lane.b32.xlu0 %v270, 110
      %v286 = vpop.permute.xlu0 %285
      %287 = vrot.lane.b32.xlu0 %v271, 110
      %v288 = vpop.permute.xlu0 %287
      %289 = vrot.lane.b32.xlu0 %v272, 110
      %v290 = vpop.permute.xlu0 %289
      %vm291 = vcmp.lt.s32.totalorder %v281, 110
      %v292 = vsel %vm291, %v288, %v290
      %v293 = vsel %vm291, %v286, %v288
      %294 = vrot.lane.b32.xlu0 %v270, 109
      %v295 = vpop.permute.xlu0 %294
      %296 = vrot.lane.b32.xlu0 %v271, 109
      %v297 = vpop.permute.xlu0 %296
      %298 = vrot.lane.b32.xlu0 %v272, 109
      %v299 = vpop.permute.xlu0 %298
      %vm300 = vcmp.lt.s32.totalorder %v281, 109
      %v301 = vsel %vm300, %v297, %v299
      %v302 = vsel %vm300, %v295, %v297
      %303 = vrot.lane.b32.xlu0 %v270, 101
      %v304 = vpop.permute.xlu0 %303
      %305 = vrot.lane.b32.xlu0 %v271, 101
      %v306 = vpop.permute.xlu0 %305
      %307 = vrot.lane.b32.xlu0 %v272, 101
      %v308 = vpop.permute.xlu0 %307
      %vm309 = vcmp.lt.s32.totalorder %v281, 101
      %v310 = vsel %vm309, %v306, %v308
      %v311 = vsel %vm309, %v304, %v306
      %312 = vrot.lane.b32.xlu0 %v270, 100
      %v313 = vpop.permute.xlu0 %312
      %314 = vrot.lane.b32.xlu0 %v271, 100
      %v315 = vpop.permute.xlu0 %314
      %316 = vrot.lane.b32.xlu0 %v272, 100
      %v317 = vpop.permute.xlu0 %316
      %vm318 = vcmp.lt.s32.totalorder %v281, 100
      %v319 = vsel %vm318, %v315, %v317
      %v320 = vsel %vm318, %v313, %v315
      %321 = vrot.lane.b32.xlu0 %v270, 99
      %v322 = vpop.permute.xlu0 %321
      %323 = vrot.lane.b32.xlu0 %v271, 99
      %v324 = vpop.permute.xlu0 %323
      %325 = vrot.lane.b32.xlu0 %v272, 99
      %v326 = vpop.permute.xlu0 %325
      %vm327 = vcmp.lt.s32.totalorder %v281, 99
      %v328 = vsel %vm327, %v324, %v326
      %v329 = vsel %vm327, %v322, %v324
      %330 = vrot.lane.b32.xlu0 %v270, 91
      %v331 = vpop.permute.xlu0 %330
      %332 = vrot.lane.b32.xlu0 %v271, 91
      %v333 = vpop.permute.xlu0 %332
      %334 = vrot.lane.b32.xlu0 %v272, 91
      %v335 = vpop.permute.xlu0 %334
      %vm336 = vcmp.lt.s32.totalorder %v281, 91
      %v337 = vsel %vm336, %v333, %v335
      %v338 = vsel %vm336, %v331, %v333
      %339 = vrot.lane.b32.xlu0 %v270, 90
      %v340 = vpop.permute.xlu0 %339
      %341 = vrot.lane.b32.xlu0 %v271, 90
      %v342 = vpop.permute.xlu0 %341
      %343 = vrot.lane.b32.xlu0 %v272, 90
      %v344 = vpop.permute.xlu0 %343
      %vm345 = vcmp.lt.s32.totalorder %v281, 90
      %v346 = vsel %vm345, %v342, %v344
      %v347 = vsel %vm345, %v340, %v342
      %348 = vrot.lane.b32.xlu0 %v270, 89
      %v349 = vpop.permute.xlu0 %348
      %350 = vrot.lane.b32.xlu0 %v271, 89
      %v351 = vpop.permute.xlu0 %350
      %352 = vrot.lane.b32.xlu0 %v272, 89
      %v353 = vpop.permute.xlu0 %352
      %vm354 = vcmp.lt.s32.totalorder %v281, 89
      %v355 = vsel %vm354, %v351, %v353
      %v356 = vsel %vm354, %v349, %v351
      %357 = vrot.lane.b32.xlu0 %v270, 11
      %v358 = vpop.permute.xlu0 %357
      %359 = vrot.lane.b32.xlu0 %v271, 11
      %v360 = vpop.permute.xlu0 %359
      %361 = vrot.lane.b32.xlu0 %v272, 11
      %v362 = vpop.permute.xlu0 %361
      %vm363 = vcmp.lt.s32.totalorder %v281, 11
      %v364 = vsel %vm363, %v360, %v362
      %v365 = vsel %vm363, %v358, %v360
      %366 = vrot.lane.b32.xlu0 %v270, 10
      %v367 = vpop.permute.xlu0 %366
      %368 = vrot.lane.b32.xlu0 %v271, 10
      %v369 = vpop.permute.xlu0 %368
      %370 = vrot.lane.b32.xlu0 %v272, 10
      %v371 = vpop.permute.xlu0 %370
      %vm372 = vcmp.lt.s32.totalorder %v281, 10
      %v373 = vsel %vm372, %v369, %v371
      %v374 = vsel %vm372, %v367, %v369
      %375 = vrot.lane.b32.xlu0 %v270, 9
      %v376 = vpop.permute.xlu0 %375
      %377 = vrot.lane.b32.xlu0 %v271, 9
      %v378 = vpop.permute.xlu0 %377
      %379 = vrot.lane.b32.xlu0 %v272, 9
      %v380 = vpop.permute.xlu0 %379
      %vm381 = vcmp.lt.s32.totalorder %v281, 9
      %v382 = vsel %vm381, %v378, %v380
      %v383 = vsel %vm381, %v376, %v378
      %384 = vrot.lane.b32.xlu0 %v270, 1
      %v385 = vpop.permute.xlu0 %384
      %386 = vrot.lane.b32.xlu0 %v271, 1
      %v387 = vpop.permute.xlu0 %386
      %388 = vrot.lane.b32.xlu0 %v272, 1
      %v389 = vpop.permute.xlu0 %388
      %vm390 = vcmp.lt.s32.totalorder %v281, 1
      %v391 = vsel %vm390, %v387, %v389
      %v392 = vsel %vm390, %v385, %v387
      %393 = vrot.lane.b32.xlu0 %v271, 127
      %v394 = vpop.permute.xlu0 %393
      %395 = vrot.lane.b32.xlu0 %v272, 127
      %v396 = vpop.permute.xlu0 %395
      %397 = vrot.lane.b32.xlu0 %v273, 127
      %v398 = vpop.permute.xlu0 %397
      %vm399 = vcmp.lt.s32.totalorder %v281, 127
      %v400 = vsel %vm399, %v396, %v398
      %v401 = vsel %vm399, %v394, %v396
      %402 = vrot.lane.b32.xlu0 %v271, 119
      %v403 = vpop.permute.xlu0 %402
      %404 = vrot.lane.b32.xlu0 %v272, 119
      %v405 = vpop.permute.xlu0 %404
      %406 = vrot.lane.b32.xlu0 %v273, 119
      %v407 = vpop.permute.xlu0 %406
      %vm408 = vcmp.lt.s32.totalorder %v281, 119
      %v409 = vsel %vm408, %v405, %v407
      %v410 = vsel %vm408, %v403, %v405
      %411 = vrot.lane.b32.xlu0 %v271, 118
      %v412 = vpop.permute.xlu0 %411
      %413 = vrot.lane.b32.xlu0 %v272, 118
      %v414 = vpop.permute.xlu0 %413
      %415 = vrot.lane.b32.xlu0 %v273, 118
      %v416 = vpop.permute.xlu0 %415
      %vm417 = vcmp.lt.s32.totalorder %v281, 118
      %v418 = vsel %vm417, %v414, %v416
      %v419 = vsel %vm417, %v412, %v414
      %420 = vrot.lane.b32.xlu0 %v271, 117
      %v421 = vpop.permute.xlu0 %420
      %422 = vrot.lane.b32.xlu0 %v272, 117
      %v423 = vpop.permute.xlu0 %422
      %424 = vrot.lane.b32.xlu0 %v273, 117
      %v425 = vpop.permute.xlu0 %424
      %vm426 = vcmp.lt.s32.totalorder %v281, 117
      %v427 = vsel %vm426, %v423, %v425
      %v428 = vsel %vm426, %v421, %v423
      %429 = vrot.lane.b32.xlu0 %v271, 39
      %v430 = vpop.permute.xlu0 %429
      %431 = vrot.lane.b32.xlu0 %v272, 39
      %v432 = vpop.permute.xlu0 %431
      %433 = vrot.lane.b32.xlu0 %v273, 39
      %v434 = vpop.permute.xlu0 %433
      %vm435 = vcmp.lt.s32.totalorder %v281, 39
      %v436 = vsel %vm435, %v432, %v434
      %v437 = vsel %vm435, %v430, %v432
      %438 = vrot.lane.b32.xlu0 %v271, 38
      %v439 = vpop.permute.xlu0 %438
      %440 = vrot.lane.b32.xlu0 %v272, 38
      %v441 = vpop.permute.xlu0 %440
      %442 = vrot.lane.b32.xlu0 %v273, 38
      %v443 = vpop.permute.xlu0 %442
      %vm444 = vcmp.lt.s32.totalorder %v281, 38
      %v445 = vsel %vm444, %v441, %v443
      %v446 = vsel %vm444, %v439, %v441
      %447 = vrot.lane.b32.xlu0 %v271, 37
      %v448 = vpop.permute.xlu0 %447
      %449 = vrot.lane.b32.xlu0 %v272, 37
      %v450 = vpop.permute.xlu0 %449
      %451 = vrot.lane.b32.xlu0 %v273, 37
      %v452 = vpop.permute.xlu0 %451
      %vm453 = vcmp.lt.s32.totalorder %v281, 37
      %v454 = vsel %vm453, %v450, %v452
      %v455 = vsel %vm453, %v448, %v450
      %456 = vrot.lane.b32.xlu0 %v271, 29
      %v457 = vpop.permute.xlu0 %456
      %458 = vrot.lane.b32.xlu0 %v272, 29
      %v459 = vpop.permute.xlu0 %458
      %460 = vrot.lane.b32.xlu0 %v273, 29
      %v461 = vpop.permute.xlu0 %460
      %vm462 = vcmp.lt.s32.totalorder %v281, 29
      %v463 = vsel %vm462, %v459, %v461
      %v464 = vsel %vm462, %v457, %v459
      %465 = vrot.lane.b32.xlu0 %v271, 28
      %v466 = vpop.permute.xlu0 %465
      %467 = vrot.lane.b32.xlu0 %v272, 28
      %v468 = vpop.permute.xlu0 %467
      %469 = vrot.lane.b32.xlu0 %v273, 28
      %v470 = vpop.permute.xlu0 %469
      %vm471 = vcmp.lt.s32.totalorder %v281, 28
      %v472 = vsel %vm471, %v468, %v470
      %v473 = vsel %vm471, %v466, %v468
      %474 = vrot.lane.b32.xlu0 %v271, 27
      %v475 = vpop.permute.xlu0 %474
      %476 = vrot.lane.b32.xlu0 %v272, 27
      %v477 = vpop.permute.xlu0 %476
      %478 = vrot.lane.b32.xlu0 %v273, 27
      %v479 = vpop.permute.xlu0 %478
      %vm480 = vcmp.lt.s32.totalorder %v281, 27
      %v481 = vsel %vm480, %v477, %v479
      %v482 = vsel %vm480, %v475, %v477
      %483 = vrot.lane.b32.xlu0 %v271, 19
      %v484 = vpop.permute.xlu0 %483
      %485 = vrot.lane.b32.xlu0 %v272, 19
      %v486 = vpop.permute.xlu0 %485
      %487 = vrot.lane.b32.xlu0 %v273, 19
      %v488 = vpop.permute.xlu0 %487
      %vm489 = vcmp.lt.s32.totalorder %v281, 19
      %v490 = vsel %vm489, %v486, %v488
      %v491 = vsel %vm489, %v484, %v486
      %492 = vrot.lane.b32.xlu0 %v271, 18
      %v493 = vpop.permute.xlu0 %492
      %494 = vrot.lane.b32.xlu0 %v272, 18
      %v495 = vpop.permute.xlu0 %494
      %496 = vrot.lane.b32.xlu0 %v273, 18
      %v497 = vpop.permute.xlu0 %496
      %vm498 = vcmp.lt.s32.totalorder %v281, 18
      %v499 = vsel %vm498, %v495, %v497
      %v500 = vsel %vm498, %v493, %v495
      %501 = vrot.lane.b32.xlu0 %v271, 17
      %v502 = vpop.permute.xlu0 %501
      %503 = vrot.lane.b32.xlu0 %v272, 17
      %v504 = vpop.permute.xlu0 %503
      %505 = vrot.lane.b32.xlu0 %v273, 17
      %v506 = vpop.permute.xlu0 %505
      %vm507 = vcmp.lt.s32.totalorder %v281, 17
      %v508 = vsel %vm507, %v504, %v506
      %v509 = vsel %vm507, %v502, %v504
      %vm510 = vcmask 785408
      %v512 = vsel %vm510, %v255, 0
      %514 = vmatprep.subr.mxu0 %v283
      %515 = vmatpush1.msra.mxu0 %v284
      %516 = vmatprep.subr.mxu0 %v292
      %517 = vmatpush1.msra.mxu0 %v293
      %518 = vmatprep.subr.mxu0 %v301
      %519 = vmatpush1.msra.mxu0 %v302
      %520 = vmatprep.subr.mxu0 %v310
      %521 = vmatpush1.msra.mxu0 %v311
      %522 = vmatprep.subr.mxu0 %v319
      %523 = vmatpush1.msra.mxu0 %v320
      %524 = vmatprep.subr.mxu0 %v328
      %525 = vmatpush1.msra.mxu0 %v329
      %526 = vmatprep.subr.mxu0 %v337
      %527 = vmatpush1.msra.mxu0 %v338
      %528 = vmatprep.subr.mxu0 %v346
      %529 = vmatpush1.msra.mxu0 %v347
      %530 = vmatprep.subr.mxu0 %v355
      %531 = vmatpush1.msra.mxu0 %v356
      %532 = vmatprep.subr.mxu0 %v364
      %533 = vmatpush1.msra.mxu0 %v365
      %534 = vmatprep.subr.mxu0 %v373
      %535 = vmatpush1.msra.mxu0 %v374
      %536 = vmatprep.subr.mxu0 %v382
      %537 = vmatpush1.msra.mxu0 %v383
      %538 = vmatprep.subr.mxu0 %v391
      %539 = vmatpush1.msra.mxu0 %v392
      %540 = vmatprep.subr.mxu0 %v272
      %541 = vmatpush1.msra.mxu0 %v271
      %542 = vmatprep.subr.mxu0 %v400
      %543 = vmatpush1.msra.mxu0 %v401
      %544 = vmatprep.subr.mxu0 %v409
      %545 = vmatpush1.msra.mxu0 %v410
      %546 = vmatprep.subr.mxu0 %v418
      %547 = vmatpush1.msra.mxu0 %v419
      %548 = vmatprep.subr.mxu0 %v427
      %549 = vmatpush1.msra.mxu0 %v428
      %550 = vmatprep.subr.mxu0 %v436
      %551 = vmatpush1.msra.mxu0 %v437
      %552 = vmatprep.subr.mxu0 %v445
      %553 = vmatpush1.msra.mxu0 %v446
      %554 = vmatprep.subr.mxu0 %v454
      %555 = vmatpush1.msra.mxu0 %v455
      %556 = vmatprep.subr.mxu0 %v463
      %557 = vmatpush1.msra.mxu0 %v464
      %558 = vmatprep.subr.mxu0 %v472
      %559 = vmatpush1.msra.mxu0 %v473
      %560 = vmatprep.subr.mxu0 %v481
      %561 = vmatpush1.msra.mxu0 %v482
      %562 = vmatprep.subr.mxu0 %v490
      %563 = vmatpush1.msra.mxu0 %v491
      %564 = vmatprep.subr.mxu0 %v499
      %565 = vmatpush1.msra.mxu0 %v500
      %566 = vmatprep.subr.mxu0 %v508
      %567 = vmatpush1.msra.mxu0 %v509
      %568 = vmatprep.subr.mxu0 0.0
      %569 = vmatpush1.msra.mxu0 0.0
      %570 = vmatprep.subr.mxu0 0.0
      %571 = vmatpush1.msra.mxu0 0.0
      %572 = vmatprep.subr.mxu0 0.0
      %573 = vmatpush1.msra.mxu0 0.0
      %574 = vmatprep.subr.mxu0 0.0
      %575 = vmatpush1.msra.mxu0 0.0
      %576 = vmatprep.subr.mxu0 0.0
      %577 = vmatpush1.msra.mxu0 0.0
      %578 = vmatprep.mubr.f32.mxu0 %v512
      %579 = vmatmul.mubr.f32.gmra.mrb[0].mxu0 %v254
      %v580 = vpop.f32.mrb[0].mxu0
      %v581 = vadd.f32 %v262, %v580
      %v582 = vpop.f32.mrb[0].mxu0
      %v583 = vadd.f32 %v262, %v582
      %584 = vdwg.mxu0
      %v585 = vmax.f32 %v581, 0.0
      %v586 = vmax.f32 %v583, 0.0
      %v587 = vld [vmem:[%s5] sm:$0x3]
      %v589 = vlaneseq
      %v590 = vshrl.u32 %v589, 7
      %v591 = vsub.s32 0, %v590
      %v592 = vrot.slane %v587, %v591
      %v593 = vlaneseq
      %v594 = vshrl.u32 %v593, 7
      %v595 = vsub.s32 1, %v594
      %v596 = vrot.slane %v587, %v595
      %v599 = vmul.f32 %v585, %v592
      %v600 = vmul.f32 %v586, %v596
      %601 = vst [vmem:[#allocation2 + $0x8] sm:$0xff] %v599
      %602 = vst [vmem:[#allocation2 + $0x10] sm:$0xff] %v600
      %v603 = vld [vmem:[%s246 + $0x10] sm:$0xff]
      %v604 = vld [vmem:[%s246 + $0x18] sm:$0xff]
      %v605 = vld [vmem:[%s246 + $0x20] sm:$0xff]
      %v606 = vld [vmem:[%s246 + $0x28] sm:$0xff]
      %607 = vrot.lane.b32.xlu0 %v603, 111
      %v608 = vpop.permute.xlu0 %607
      %609 = vrot.lane.b32.xlu0 %v604, 111
      %v610 = vpop.permute.xlu0 %609
      %611 = vrot.lane.b32.xlu0 %v605, 111
      %v612 = vpop.permute.xlu0 %611
      %v613 = vsel %vm282, %v610, %v612
      %v614 = vsel %vm282, %v608, %v610
      %615 = vrot.lane.b32.xlu0 %v603, 110
      %v616 = vpop.permute.xlu0 %615
      %617 = vrot.lane.b32.xlu0 %v604, 110
      %v618 = vpop.permute.xlu0 %617
      %619 = vrot.lane.b32.xlu0 %v605, 110
      %v620 = vpop.permute.xlu0 %619
      %v621 = vsel %vm291, %v618, %v620
      %v622 = vsel %vm291, %v616, %v618
      %623 = vrot.lane.b32.xlu0 %v603, 109
      %v624 = vpop.permute.xlu0 %623
      %625 = vrot.lane.b32.xlu0 %v604, 109
      %v626 = vpop.permute.xlu0 %625
      %627 = vrot.lane.b32.xlu0 %v605, 109
      %v628 = vpop.permute.xlu0 %627
      %v629 = vsel %vm300, %v626, %v628
      %v630 = vsel %vm300, %v624, %v626
      %631 = vrot.lane.b32.xlu0 %v603, 101
      %v632 = vpop.permute.xlu0 %631
      %633 = vrot.lane.b32.xlu0 %v604, 101
      %v634 = vpop.permute.xlu0 %633
      %635 = vrot.lane.b32.xlu0 %v605, 101
      %v636 = vpop.permute.xlu0 %635
      %v637 = vsel %vm309, %v634, %v636
      %v638 = vsel %vm309, %v632, %v634
      %639 = vrot.lane.b32.xlu0 %v603, 100
      %v640 = vpop.permute.xlu0 %639
      %641 = vrot.lane.b32.xlu0 %v604, 100
      %v642 = vpop.permute.xlu0 %641
      %643 = vrot.lane.b32.xlu0 %v605, 100
      %v644 = vpop.permute.xlu0 %643
      %v645 = vsel %vm318, %v642, %v644
      %v646 = vsel %vm318, %v640, %v642
      %647 = vrot.lane.b32.xlu0 %v603, 99
      %v648 = vpop.permute.xlu0 %647
      %649 = vrot.lane.b32.xlu0 %v604, 99
      %v650 = vpop.permute.xlu0 %649
      %651 = vrot.lane.b32.xlu0 %v605, 99
      %v652 = vpop.permute.xlu0 %651
      %v653 = vsel %vm327, %v650, %v652
      %v654 = vsel %vm327, %v648, %v650
      %655 = vrot.lane.b32.xlu0 %v603, 91
      %v656 = vpop.permute.xlu0 %655
      %657 = vrot.lane.b32.xlu0 %v604, 91
      %v658 = vpop.permute.xlu0 %657
      %659 = vrot.lane.b32.xlu0 %v605, 91
      %v660 = vpop.permute.xlu0 %659
      %v661 = vsel %vm336, %v658, %v660
      %v662 = vsel %vm336, %v656, %v658
      %663 = vrot.lane.b32.xlu0 %v603, 90
      %v664 = vpop.permute.xlu0 %663
      %665 = vrot.lane.b32.xlu0 %v604, 90
      %v666 = vpop.permute.xlu0 %665
      %667 = vrot.lane.b32.xlu0 %v605, 90
      %v668 = vpop.permute.xlu0 %667
      %v669 = vsel %vm345, %v666, %v668
      %v670 = vsel %vm345, %v664, %v666
      %671 = vrot.lane.b32.xlu0 %v603, 89
      %v672 = vpop.permute.xlu0 %671
      %673 = vrot.lane.b32.xlu0 %v604, 89
      %v674 = vpop.permute.xlu0 %673
      %675 = vrot.lane.b32.xlu0 %v605, 89
      %v676 = vpop.permute.xlu0 %675
      %v677 = vsel %vm354, %v674, %v676
      %v678 = vsel %vm354, %v672, %v674
      %679 = vrot.lane.b32.xlu0 %v603, 11
      %v680 = vpop.permute.xlu0 %679
      %681 = vrot.lane.b32.xlu0 %v604, 11
      %v682 = vpop.permute.xlu0 %681
      %683 = vrot.lane.b32.xlu0 %v605, 11
      %v684 = vpop.permute.xlu0 %683
      %v685 = vsel %vm363, %v682, %v684
      %v686 = vsel %vm363, %v680, %v682
      %687 = vrot.lane.b32.xlu0 %v603, 10
      %v688 = vpop.permute.xlu0 %687
      %689 = vrot.lane.b32.xlu0 %v604, 10
      %v690 = vpop.permute.xlu0 %689
      %691 = vrot.lane.b32.xlu0 %v605, 10
      %v692 = vpop.permute.xlu0 %691
      %v693 = vsel %vm372, %v690, %v692
      %v694 = vsel %vm372, %v688, %v690
      %695 = vrot.lane.b32.xlu0 %v603, 9
      %v696 = vpop.permute.xlu0 %695
      %697 = vrot.lane.b32.xlu0 %v604, 9
      %v698 = vpop.permute.xlu0 %697
      %699 = vrot.lane.b32.xlu0 %v605, 9
      %v700 = vpop.permute.xlu0 %699
      %v701 = vsel %vm381, %v698, %v700
      %v702 = vsel %vm381, %v696, %v698
      %703 = vrot.lane.b32.xlu0 %v603, 1
      %v704 = vpop.permute.xlu0 %703
      %705 = vrot.lane.b32.xlu0 %v604, 1
      %v706 = vpop.permute.xlu0 %705
      %707 = vrot.lane.b32.xlu0 %v605, 1
      %v708 = vpop.permute.xlu0 %707
      %v709 = vsel %vm390, %v706, %v708
      %v710 = vsel %vm390, %v704, %v706
      %711 = vrot.lane.b32.xlu0 %v604, 127
      %v712 = vpop.permute.xlu0 %711
      %713 = vrot.lane.b32.xlu0 %v605, 127
      %v714 = vpop.permute.xlu0 %713
      %715 = vrot.lane.b32.xlu0 %v606, 127
      %v716 = vpop.permute.xlu0 %715
      %v717 = vsel %vm399, %v714, %v716
      %v718 = vsel %vm399, %v712, %v714
      %719 = vrot.lane.b32.xlu0 %v604, 119
      %v720 = vpop.permute.xlu0 %719
      %721 = vrot.lane.b32.xlu0 %v605, 119
      %v722 = vpop.permute.xlu0 %721
      %723 = vrot.lane.b32.xlu0 %v606, 119
      %v724 = vpop.permute.xlu0 %723
      %v725 = vsel %vm408, %v722, %v724
      %v726 = vsel %vm408, %v720, %v722
      %727 = vrot.lane.b32.xlu0 %v604, 118
      %v728 = vpop.permute.xlu0 %727
      %729 = vrot.lane.b32.xlu0 %v605, 118
      %v730 = vpop.permute.xlu0 %729
      %731 = vrot.lane.b32.xlu0 %v606, 118
      %v732 = vpop.permute.xlu0 %731
      %v733 = vsel %vm417, %v730, %v732
      %v734 = vsel %vm417, %v728, %v730
      %735 = vrot.lane.b32.xlu0 %v604, 117
      %v736 = vpop.permute.xlu0 %735
      %737 = vrot.lane.b32.xlu0 %v605, 117
      %v738 = vpop.permute.xlu0 %737
      %739 = vrot.lane.b32.xlu0 %v606, 117
      %v740 = vpop.permute.xlu0 %739
      %v741 = vsel %vm426, %v738, %v740
      %v742 = vsel %vm426, %v736, %v738
      %743 = vrot.lane.b32.xlu0 %v604, 39
      %v744 = vpop.permute.xlu0 %743
      %745 = vrot.lane.b32.xlu0 %v605, 39
      %v746 = vpop.permute.xlu0 %745
      %747 = vrot.lane.b32.xlu0 %v606, 39
      %v748 = vpop.permute.xlu0 %747
      %v749 = vsel %vm435, %v746, %v748
      %v750 = vsel %vm435, %v744, %v746
      %751 = vrot.lane.b32.xlu0 %v604, 38
      %v752 = vpop.permute.xlu0 %751
      %753 = vrot.lane.b32.xlu0 %v605, 38
      %v754 = vpop.permute.xlu0 %753
      %755 = vrot.lane.b32.xlu0 %v606, 38
      %v756 = vpop.permute.xlu0 %755
      %v757 = vsel %vm444, %v754, %v756
      %v758 = vsel %vm444, %v752, %v754
      %759 = vrot.lane.b32.xlu0 %v604, 37
      %v760 = vpop.permute.xlu0 %759
      %761 = vrot.lane.b32.xlu0 %v605, 37
      %v762 = vpop.permute.xlu0 %761
      %763 = vrot.lane.b32.xlu0 %v606, 37
      %v764 = vpop.permute.xlu0 %763
      %v765 = vsel %vm453, %v762, %v764
      %v766 = vsel %vm453, %v760, %v762
      %767 = vrot.lane.b32.xlu0 %v604, 29
      %v768 = vpop.permute.xlu0 %767
      %769 = vrot.lane.b32.xlu0 %v605, 29
      %v770 = vpop.permute.xlu0 %769
      %771 = vrot.lane.b32.xlu0 %v606, 29
      %v772 = vpop.permute.xlu0 %771
      %v773 = vsel %vm462, %v770, %v772
      %v774 = vsel %vm462, %v768, %v770
      %775 = vrot.lane.b32.xlu0 %v604, 28
      %v776 = vpop.permute.xlu0 %775
      %777 = vrot.lane.b32.xlu0 %v605, 28
      %v778 = vpop.permute.xlu0 %777
      %779 = vrot.lane.b32.xlu0 %v606, 28
      %v780 = vpop.permute.xlu0 %779
      %v781 = vsel %vm471, %v778, %v780
      %v782 = vsel %vm471, %v776, %v778
      %783 = vrot.lane.b32.xlu0 %v604, 27
      %v784 = vpop.permute.xlu0 %783
      %785 = vrot.lane.b32.xlu0 %v605, 27
      %v786 = vpop.permute.xlu0 %785
      %787 = vrot.lane.b32.xlu0 %v606, 27
      %v788 = vpop.permute.xlu0 %787
      %v789 = vsel %vm480, %v786, %v788
      %v790 = vsel %vm480, %v784, %v786
      %791 = vrot.lane.b32.xlu0 %v604, 19
      %v792 = vpop.permute.xlu0 %791
      %793 = vrot.lane.b32.xlu0 %v605, 19
      %v794 = vpop.permute.xlu0 %793
      %795 = vrot.lane.b32.xlu0 %v606, 19
      %v796 = vpop.permute.xlu0 %795
      %v797 = vsel %vm489, %v794, %v796
      %v798 = vsel %vm489, %v792, %v794
      %799 = vrot.lane.b32.xlu0 %v604, 18
      %v800 = vpop.permute.xlu0 %799
      %801 = vrot.lane.b32.xlu0 %v605, 18
      %v802 = vpop.permute.xlu0 %801
      %803 = vrot.lane.b32.xlu0 %v606, 18
      %v804 = vpop.permute.xlu0 %803
      %v805 = vsel %vm498, %v802, %v804
      %v806 = vsel %vm498, %v800, %v802
      %807 = vrot.lane.b32.xlu0 %v604, 17
      %v808 = vpop.permute.xlu0 %807
      %809 = vrot.lane.b32.xlu0 %v605, 17
      %v810 = vpop.permute.xlu0 %809
      %811 = vrot.lane.b32.xlu0 %v606, 17
      %v812 = vpop.permute.xlu0 %811
      %v813 = vsel %vm507, %v810, %v812
      %v814 = vsel %vm507, %v808, %v810
      %815 = vmatprep.subr.mxu0 %v613
      %816 = vmatpush1.msra.mxu0 %v614
      %817 = vmatprep.subr.mxu0 %v621
      %818 = vmatpush1.msra.mxu0 %v622
      %819 = vmatprep.subr.mxu0 %v629
      %820 = vmatpush1.msra.mxu0 %v630
      %821 = vmatprep.subr.mxu0 %v637
      %822 = vmatpush1.msra.mxu0 %v638
      %823 = vmatprep.subr.mxu0 %v645
      %824 = vmatpush1.msra.mxu0 %v646
      %825 = vmatprep.subr.mxu0 %v653
      %826 = vmatpush1.msra.mxu0 %v654
      %827 = vmatprep.subr.mxu0 %v661
      %828 = vmatpush1.msra.mxu0 %v662
      %829 = vmatprep.subr.mxu0 %v669
      %830 = vmatpush1.msra.mxu0 %v670
      %831 = vmatprep.subr.mxu0 %v677
      %832 = vmatpush1.msra.mxu0 %v678
      %833 = vmatprep.subr.mxu0 %v685
      %834 = vmatpush1.msra.mxu0 %v686
      %835 = vmatprep.subr.mxu0 %v693
      %836 = vmatpush1.msra.mxu0 %v694
      %837 = vmatprep.subr.mxu0 %v701
      %838 = vmatpush1.msra.mxu0 %v702
      %839 = vmatprep.subr.mxu0 %v709
      %840 = vmatpush1.msra.mxu0 %v710
      %841 = vmatprep.subr.mxu0 %v605
      %842 = vmatpush1.msra.mxu0 %v604
      %843 = vmatprep.subr.mxu0 %v717
      %844 = vmatpush1.msra.mxu0 %v718
      %845 = vmatprep.subr.mxu0 %v725
      %846 = vmatpush1.msra.mxu0 %v726
      %847 = vmatprep.subr.mxu0 %v733
      %848 = vmatpush1.msra.mxu0 %v734
      %849 = vmatprep.subr.mxu0 %v741
      %850 = vmatpush1.msra.mxu0 %v742
      %851 = vmatprep.subr.mxu0 %v749
      %852 = vmatpush1.msra.mxu0 %v750
      %853 = vmatprep.subr.mxu0 %v757
      %854 = vmatpush1.msra.mxu0 %v758
      %855 = vmatprep.subr.mxu0 %v765
      %856 = vmatpush1.msra.mxu0 %v766
      %857 = vmatprep.subr.mxu0 %v773
      %858 = vmatpush1.msra.mxu0 %v774
      %859 = vmatprep.subr.mxu0 %v781
      %860 = vmatpush1.msra.mxu0 %v782
      %861 = vmatprep.subr.mxu0 %v789
      %862 = vmatpush1.msra.mxu0 %v790
      %863 = vmatprep.subr.mxu0 %v797
      %864 = vmatpush1.msra.mxu0 %v798
      %865 = vmatprep.subr.mxu0 %v805
      %866 = vmatpush1.msra.mxu0 %v806
      %867 = vmatprep.subr.mxu0 %v813
      %868 = vmatpush1.msra.mxu0 %v814
      %869 = vmatprep.subr.mxu0 0.0
      %870 = vmatpush1.msra.mxu0 0.0
      %871 = vmatprep.subr.mxu0 0.0
      %872 = vmatpush1.msra.mxu0 0.0
      %873 = vmatprep.subr.mxu0 0.0
      %874 = vmatpush1.msra.mxu0 0.0
      %875 = vmatprep.subr.mxu0 0.0
      %876 = vmatpush1.msra.mxu0 0.0
      %877 = vmatprep.subr.mxu0 0.0
      %878 = vmatpush1.msra.mxu0 0.0
      %879 = vmatprep.mubr.f32.mxu0 %v512
      %880 = vmatmul.mubr.f32.gmra.mrb[0].mxu0 %v254
      %v881 = vpop.f32.mrb[0].mxu0
      %v882 = vadd.f32 %v262, %v881
      %v883 = vpop.f32.mrb[0].mxu0
      %v884 = vadd.f32 %v262, %v883
      %885 = vdwg.mxu0
      %v886 = vmax.f32 %v882, 0.0
      %v887 = vmax.f32 %v884, 0.0
      %v888 = vld [vmem:[%s5 + $0x2] sm:$0x3]
      %v890 = vlaneseq
      %v891 = vshrl.u32 %v890, 7
      %v892 = vsub.s32 0, %v891
      %v893 = vrot.slane %v888, %v892
      %v894 = vlaneseq
      %v895 = vshrl.u32 %v894, 7
      %v896 = vsub.s32 1, %v895
      %v897 = vrot.slane %v888, %v896
      %v900 = vmul.f32 %v886, %v893
      %v901 = vmul.f32 %v887, %v897
      %902 = vst [vmem:[#allocation2 + $0x18] sm:$0xff] %v900
      %903 = vst [vmem:[#allocation2 + $0x20] sm:$0xff] %v901
      %v904 = vld [vmem:[%s246 + $0x20] sm:$0xff]
      %v905 = vld [vmem:[%s246 + $0x28] sm:$0xff]
      %v906 = vld [vmem:[%s246 + $0x30] sm:$0xff]
      %v907 = vld [vmem:[%s246 + $0x38] sm:$0xff]
      %908 = vrot.lane.b32.xlu0 %v904, 111
      %v909 = vpop.permute.xlu0 %908
      %910 = vrot.lane.b32.xlu0 %v905, 111
      %v911 = vpop.permute.xlu0 %910
      %912 = vrot.lane.b32.xlu0 %v906, 111
      %v913 = vpop.permute.xlu0 %912
      %v914 = vsel %vm282, %v911, %v913
      %v915 = vsel %vm282, %v909, %v911
      %916 = vrot.lane.b32.xlu0 %v904, 110
      %v917 = vpop.permute.xlu0 %916
      %918 = vrot.lane.b32.xlu0 %v905, 110
      %v919 = vpop.permute.xlu0 %918
      %920 = vrot.lane.b32.xlu0 %v906, 110
      %v921 = vpop.permute.xlu0 %920
      %v922 = vsel %vm291, %v919, %v921
      %v923 = vsel %vm291, %v917, %v919
      %924 = vrot.lane.b32.xlu0 %v904, 109
      %v925 = vpop.permute.xlu0 %924
      %926 = vrot.lane.b32.xlu0 %v905, 109
      %v927 = vpop.permute.xlu0 %926
      %928 = vrot.lane.b32.xlu0 %v906, 109
      %v929 = vpop.permute.xlu0 %928
      %v930 = vsel %vm300, %v927, %v929
      %v931 = vsel %vm300, %v925, %v927
      %932 = vrot.lane.b32.xlu0 %v904, 101
      %v933 = vpop.permute.xlu0 %932
      %934 = vrot.lane.b32.xlu0 %v905, 101
      %v935 = vpop.permute.xlu0 %934
      %936 = vrot.lane.b32.xlu0 %v906, 101
      %v937 = vpop.permute.xlu0 %936
      %v938 = vsel %vm309, %v935, %v937
      %v939 = vsel %vm309, %v933, %v935
      %940 = vrot.lane.b32.xlu0 %v904, 100
      %v941 = vpop.permute.xlu0 %940
      %942 = vrot.lane.b32.xlu0 %v905, 100
      %v943 = vpop.permute.xlu0 %942
      %944 = vrot.lane.b32.xlu0 %v906, 100
      %v945 = vpop.permute.xlu0 %944
      %v946 = vsel %vm318, %v943, %v945
      %v947 = vsel %vm318, %v941, %v943
      %948 = vrot.lane.b32.xlu0 %v904, 99
      %v949 = vpop.permute.xlu0 %948
      %950 = vrot.lane.b32.xlu0 %v905, 99
      %v951 = vpop.permute.xlu0 %950
      %952 = vrot.lane.b32.xlu0 %v906, 99
      %v953 = vpop.permute.xlu0 %952
      %v954 = vsel %vm327, %v951, %v953
      %v955 = vsel %vm327, %v949, %v951
      %956 = vrot.lane.b32.xlu0 %v904, 91
      %v957 = vpop.permute.xlu0 %956
      %958 = vrot.lane.b32.xlu0 %v905, 91
      %v959 = vpop.permute.xlu0 %958
      %960 = vrot.lane.b32.xlu0 %v906, 91
      %v961 = vpop.permute.xlu0 %960
      %v962 = vsel %vm336, %v959, %v961
      %v963 = vsel %vm336, %v957, %v959
      %964 = vrot.lane.b32.xlu0 %v904, 90
      %v965 = vpop.permute.xlu0 %964
      %966 = vrot.lane.b32.xlu0 %v905, 90
      %v967 = vpop.permute.xlu0 %966
      %968 = vrot.lane.b32.xlu0 %v906, 90
      %v969 = vpop.permute.xlu0 %968
      %v970 = vsel %vm345, %v967, %v969
      %v971 = vsel %vm345, %v965, %v967
      %972 = vrot.lane.b32.xlu0 %v904, 89
      %v973 = vpop.permute.xlu0 %972
      %974 = vrot.lane.b32.xlu0 %v905, 89
      %v975 = vpop.permute.xlu0 %974
      %976 = vrot.lane.b32.xlu0 %v906, 89
      %v977 = vpop.permute.xlu0 %976
      %v978 = vsel %vm354, %v975, %v977
      %v979 = vsel %vm354, %v973, %v975
      %980 = vrot.lane.b32.xlu0 %v904, 11
      %v981 = vpop.permute.xlu0 %980
      %982 = vrot.lane.b32.xlu0 %v905, 11
      %v983 = vpop.permute.xlu0 %982
      %984 = vrot.lane.b32.xlu0 %v906, 11
      %v985 = vpop.permute.xlu0 %984
      %v986 = vsel %vm363, %v983, %v985
      %v987 = vsel %vm363, %v981, %v983
      %988 = vrot.lane.b32.xlu0 %v904, 10
      %v989 = vpop.permute.xlu0 %988
      %990 = vrot.lane.b32.xlu0 %v905, 10
      %v991 = vpop.permute.xlu0 %990
      %992 = vrot.lane.b32.xlu0 %v906, 10
      %v993 = vpop.permute.xlu0 %992
      %v994 = vsel %vm372, %v991, %v993
      %v995 = vsel %vm372, %v989, %v991
      %996 = vrot.lane.b32.xlu0 %v904, 9
      %v997 = vpop.permute.xlu0 %996
      %998 = vrot.lane.b32.xlu0 %v905, 9
      %v999 = vpop.permute.xlu0 %998
      %1000 = vrot.lane.b32.xlu0 %v906, 9
      %v1001 = vpop.permute.xlu0 %1000
      %v1002 = vsel %vm381, %v999, %v1001
      %v1003 = vsel %vm381, %v997, %v999
      %1004 = vrot.lane.b32.xlu0 %v904, 1
      %v1005 = vpop.permute.xlu0 %1004
      %1006 = vrot.lane.b32.xlu0 %v905, 1
      %v1007 = vpop.permute.xlu0 %1006
      %1008 = vrot.lane.b32.xlu0 %v906, 1
      %v1009 = vpop.permute.xlu0 %1008
      %v1010 = vsel %vm390, %v1007, %v1009
      %v1011 = vsel %vm390, %v1005, %v1007
      %1012 = vrot.lane.b32.xlu0 %v905, 127
      %v1013 = vpop.permute.xlu0 %1012
      %1014 = vrot.lane.b32.xlu0 %v906, 127
      %v1015 = vpop.permute.xlu0 %1014
      %1016 = vrot.lane.b32.xlu0 %v907, 127
      %v1017 = vpop.permute.xlu0 %1016
      %v1018 = vsel %vm399, %v1015, %v1017
      %v1019 = vsel %vm399, %v1013, %v1015
      %1020 = vrot.lane.b32.xlu0 %v905, 119
      %v1021 = vpop.permute.xlu0 %1020
      %1022 = vrot.lane.b32.xlu0 %v906, 119
      %v1023 = vpop.permute.xlu0 %1022
      %1024 = vrot.lane.b32.xlu0 %v907, 119
      %v1025 = vpop.permute.xlu0 %1024
      %v1026 = vsel %vm408, %v1023, %v1025
      %v1027 = vsel %vm408, %v1021, %v1023
      %1028 = vrot.lane.b32.xlu0 %v905, 118
      %v1029 = vpop.permute.xlu0 %1028
      %1030 = vrot.lane.b32.xlu0 %v906, 118
      %v1031 = vpop.permute.xlu0 %1030
      %1032 = vrot.lane.b32.xlu0 %v907, 118
      %v1033 = vpop.permute.xlu0 %1032
      %v1034 = vsel %vm417, %v1031, %v1033
      %v1035 = vsel %vm417, %v1029, %v1031
      %1036 = vrot.lane.b32.xlu0 %v905, 117
      %v1037 = vpop.permute.xlu0 %1036
      %1038 = vrot.lane.b32.xlu0 %v906, 117
      %v1039 = vpop.permute.xlu0 %1038
      %1040 = vrot.lane.b32.xlu0 %v907, 117
      %v1041 = vpop.permute.xlu0 %1040
      %v1042 = vsel %vm426, %v1039, %v1041
      %v1043 = vsel %vm426, %v1037, %v1039
      %1044 = vrot.lane.b32.xlu0 %v905, 39
      %v1045 = vpop.permute.xlu0 %1044
      %1046 = vrot.lane.b32.xlu0 %v906, 39
      %v1047 = vpop.permute.xlu0 %1046
      %1048 = vrot.lane.b32.xlu0 %v907, 39
      %v1049 = vpop.permute.xlu0 %1048
      %v1050 = vsel %vm435, %v1047, %v1049
      %v1051 = vsel %vm435, %v1045, %v1047
      %1052 = vrot.lane.b32.xlu0 %v905, 38
      %v1053 = vpop.permute.xlu0 %1052
      %1054 = vrot.lane.b32.xlu0 %v906, 38
      %v1055 = vpop.permute.xlu0 %1054
      %1056 = vrot.lane.b32.xlu0 %v907, 38
      %v1057 = vpop.permute.xlu0 %1056
      %v1058 = vsel %vm444, %v1055, %v1057
      %v1059 = vsel %vm444, %v1053, %v1055
      %1060 = vrot.lane.b32.xlu0 %v905, 37
      %v1061 = vpop.permute.xlu0 %1060
      %1062 = vrot.lane.b32.xlu0 %v906, 37
      %v1063 = vpop.permute.xlu0 %1062
      %1064 = vrot.lane.b32.xlu0 %v907, 37
      %v1065 = vpop.permute.xlu0 %1064
      %v1066 = vsel %vm453, %v1063, %v1065
      %v1067 = vsel %vm453, %v1061, %v1063
      %1068 = vrot.lane.b32.xlu0 %v905, 29
      %v1069 = vpop.permute.xlu0 %1068
      %1070 = vrot.lane.b32.xlu0 %v906, 29
      %v1071 = vpop.permute.xlu0 %1070
      %1072 = vrot.lane.b32.xlu0 %v907, 29
      %v1073 = vpop.permute.xlu0 %1072
      %v1074 = vsel %vm462, %v1071, %v1073
      %v1075 = vsel %vm462, %v1069, %v1071
      %1076 = vrot.lane.b32.xlu0 %v905, 28
      %v1077 = vpop.permute.xlu0 %1076
      %1078 = vrot.lane.b32.xlu0 %v906, 28
      %v1079 = vpop.permute.xlu0 %1078
      %1080 = vrot.lane.b32.xlu0 %v907, 28
      %v1081 = vpop.permute.xlu0 %1080
      %v1082 = vsel %vm471, %v1079, %v1081
      %v1083 = vsel %vm471, %v1077, %v1079
      %1084 = vrot.lane.b32.xlu0 %v905, 27
      %v1085 = vpop.permute.xlu0 %1084
      %1086 = vrot.lane.b32.xlu0 %v906, 27
      %v1087 = vpop.permute.xlu0 %1086
      %1088 = vrot.lane.b32.xlu0 %v907, 27
      %v1089 = vpop.permute.xlu0 %1088
      %v1090 = vsel %vm480, %v1087, %v1089
      %v1091 = vsel %vm480, %v1085, %v1087
      %1092 = vrot.lane.b32.xlu0 %v905, 19
      %v1093 = vpop.permute.xlu0 %1092
      %1094 = vrot.lane.b32.xlu0 %v906, 19
      %v1095 = vpop.permute.xlu0 %1094
      %1096 = vrot.lane.b32.xlu0 %v907, 19
      %v1097 = vpop.permute.xlu0 %1096
      %v1098 = vsel %vm489, %v1095, %v1097
      %v1099 = vsel %vm489, %v1093, %v1095
      %1100 = vrot.lane.b32.xlu0 %v905, 18
      %v1101 = vpop.permute.xlu0 %1100
      %1102 = vrot.lane.b32.xlu0 %v906, 18
      %v1103 = vpop.permute.xlu0 %1102
      %1104 = vrot.lane.b32.xlu0 %v907, 18
      %v1105 = vpop.permute.xlu0 %1104
      %v1106 = vsel %vm498, %v1103, %v1105
      %v1107 = vsel %vm498, %v1101, %v1103
      %1108 = vrot.lane.b32.xlu0 %v905, 17
      %v1109 = vpop.permute.xlu0 %1108
      %1110 = vrot.lane.b32.xlu0 %v906, 17
      %v1111 = vpop.permute.xlu0 %1110
      %1112 = vrot.lane.b32.xlu0 %v907, 17
      %v1113 = vpop.permute.xlu0 %1112
      %v1114 = vsel %vm507, %v1111, %v1113
      %v1115 = vsel %vm507, %v1109, %v1111
      %1116 = vmatprep.subr.mxu0 %v914
      %1117 = vmatpush1.msra.mxu0 %v915
      %1118 = vmatprep.subr.mxu0 %v922
      %1119 = vmatpush1.msra.mxu0 %v923
      %1120 = vmatprep.subr.mxu0 %v930
      %1121 = vmatpush1.msra.mxu0 %v931
      %1122 = vmatprep.subr.mxu0 %v938
      %1123 = vmatpush1.msra.mxu0 %v939
      %1124 = vmatprep.subr.mxu0 %v946
      %1125 = vmatpush1.msra.mxu0 %v947
      %1126 = vmatprep.subr.mxu0 %v954
      %1127 = vmatpush1.msra.mxu0 %v955
      %1128 = vmatprep.subr.mxu0 %v962
      %1129 = vmatpush1.msra.mxu0 %v963
      %1130 = vmatprep.subr.mxu0 %v970
      %1131 = vmatpush1.msra.mxu0 %v971
      %1132 = vmatprep.subr.mxu0 %v978
      %1133 = vmatpush1.msra.mxu0 %v979
      %1134 = vmatprep.subr.mxu0 %v986
      %1135 = vmatpush1.msra.mxu0 %v987
      %1136 = vmatprep.subr.mxu0 %v994
      %1137 = vmatpush1.msra.mxu0 %v995
      %1138 = vmatprep.subr.mxu0 %v1002
      %1139 = vmatpush1.msra.mxu0 %v1003
      %1140 = vmatprep.subr.mxu0 %v1010
      %1141 = vmatpush1.msra.mxu0 %v1011
      %1142 = vmatprep.subr.mxu0 %v906
      %1143 = vmatpush1.msra.mxu0 %v905
      %1144 = vmatprep.subr.mxu0 %v1018
      %1145 = vmatpush1.msra.mxu0 %v1019
      %1146 = vmatprep.subr.mxu0 %v1026
      %1147 = vmatpush1.msra.mxu0 %v1027
      %1148 = vmatprep.subr.mxu0 %v1034
      %1149 = vmatpush1.msra.mxu0 %v1035
      %1150 = vmatprep.subr.mxu0 %v1042
      %1151 = vmatpush1.msra.mxu0 %v1043
      %1152 = vmatprep.subr.mxu0 %v1050
      %1153 = vmatpush1.msra.mxu0 %v1051
      %1154 = vmatprep.subr.mxu0 %v1058
      %1155 = vmatpush1.msra.mxu0 %v1059
      %1156 = vmatprep.subr.mxu0 %v1066
      %1157 = vmatpush1.msra.mxu0 %v1067
      %1158 = vmatprep.subr.mxu0 %v1074
      %1159 = vmatpush1.msra.mxu0 %v1075
      %1160 = vmatprep.subr.mxu0 %v1082
      %1161 = vmatpush1.msra.mxu0 %v1083
      %1162 = vmatprep.subr.mxu0 %v1090
      %1163 = vmatpush1.msra.mxu0 %v1091
      %1164 = vmatprep.subr.mxu0 %v1098
      %1165 = vmatpush1.msra.mxu0 %v1099
      %1166 = vmatprep.subr.mxu0 %v1106
      %1167 = vmatpush1.msra.mxu0 %v1107
      %1168 = vmatprep.subr.mxu0 %v1114
      %1169 = vmatpush1.msra.mxu0 %v1115
      %1170 = vmatprep.subr.mxu0 0.0
      %1171 = vmatpush1.msra.mxu0 0.0
      %1172 = vmatprep.subr.mxu0 0.0
      %1173 = vmatpush1.msra.mxu0 0.0
      %1174 = vmatprep.subr.mxu0 0.0
      %1175 = vmatpush1.msra.mxu0 0.0
      %1176 = vmatprep.subr.mxu0 0.0
      %1177 = vmatpush1.msra.mxu0 0.0
      %1178 = vmatprep.subr.mxu0 0.0
      %1179 = vmatpush1.msra.mxu0 0.0
      %1180 = vmatprep.mubr.f32.mxu0 %v512
      %1181 = vmatmul.mubr.f32.gmra.mrb[0].mxu0 %v254
      %v1182 = vpop.f32.mrb[0].mxu0
      %v1183 = vadd.f32 %v262, %v1182
      %v1184 = vpop.f32.mrb[0].mxu0
      %v1185 = vadd.f32 %v262, %v1184
      %1186 = vdwg.mxu0
      %v1187 = vmax.f32 %v1183, 0.0
      %v1188 = vmax.f32 %v1185, 0.0
      %v1189 = vld [vmem:[%s5 + $0x4] sm:$0x3]
      %v1191 = vlaneseq
      %v1192 = vshrl.u32 %v1191, 7
      %v1193 = vsub.s32 0, %v1192
      %v1194 = vrot.slane %v1189, %v1193
      %v1195 = vlaneseq
      %v1196 = vshrl.u32 %v1195, 7
      %v1197 = vsub.s32 1, %v1196
      %v1198 = vrot.slane %v1189, %v1197
      %v1201 = vmul.f32 %v1187, %v1194
      %v1202 = vmul.f32 %v1188, %v1198
      %1203 = vst [vmem:[#allocation2 + $0x28] sm:$0xff] %v1201
      %1204 = vst [vmem:[#allocation2 + $0x30] sm:$0xff] %v1202
      %v1205 = vld [vmem:[%s246 + $0x30] sm:$0xff]
      %v1206 = vld [vmem:[%s246 + $0x38] sm:$0xff]
      %v1207 = vld [vmem:[%s246 + $0x40] sm:$0xff]
      %v1208 = vld [vmem:[%s246 + $0x48] sm:$0xff]
      %1209 = vrot.lane.b32.xlu0 %v1205, 111
      %v1210 = vpop.permute.xlu0 %1209
      %1211 = vrot.lane.b32.xlu0 %v1206, 111
      %v1212 = vpop.permute.xlu0 %1211
      %1213 = vrot.lane.b32.xlu0 %v1207, 111
      %v1214 = vpop.permute.xlu0 %1213
      %v1215 = vsel %vm282, %v1212, %v1214
      %v1216 = vsel %vm282, %v1210, %v1212
      %1217 = vrot.lane.b32.xlu0 %v1205, 110
      %v1218 = vpop.permute.xlu0 %1217
      %1219 = vrot.lane.b32.xlu0 %v1206, 110
      %v1220 = vpop.permute.xlu0 %1219
      %1221 = vrot.lane.b32.xlu0 %v1207, 110
      %v1222 = vpop.permute.xlu0 %1221
      %v1223 = vsel %vm291, %v1220, %v1222
      %v1224 = vsel %vm291, %v1218, %v1220
      %1225 = vrot.lane.b32.xlu0 %v1205, 109
      %v1226 = vpop.permute.xlu0 %1225
      %1227 = vrot.lane.b32.xlu0 %v1206, 109
      %v1228 = vpop.permute.xlu0 %1227
      %1229 = vrot.lane.b32.xlu0 %v1207, 109
      %v1230 = vpop.permute.xlu0 %1229
      %v1231 = vsel %vm300, %v1228, %v1230
      %v1232 = vsel %vm300, %v1226, %v1228
      %1233 = vrot.lane.b32.xlu0 %v1205, 101
      %v1234 = vpop.permute.xlu0 %1233
      %1235 = vrot.lane.b32.xlu0 %v1206, 101
      %v1236 = vpop.permute.xlu0 %1235
      %1237 = vrot.lane.b32.xlu0 %v1207, 101
      %v1238 = vpop.permute.xlu0 %1237
      %v1239 = vsel %vm309, %v1236, %v1238
      %v1240 = vsel %vm309, %v1234, %v1236
      %1241 = vrot.lane.b32.xlu0 %v1205, 100
      %v1242 = vpop.permute.xlu0 %1241
      %1243 = vrot.lane.b32.xlu0 %v1206, 100
      %v1244 = vpop.permute.xlu0 %1243
      %1245 = vrot.lane.b32.xlu0 %v1207, 100
      %v1246 = vpop.permute.xlu0 %1245
      %v1247 = vsel %vm318, %v1244, %v1246
      %v1248 = vsel %vm318, %v1242, %v1244
      %1249 = vrot.lane.b32.xlu0 %v1205, 99
      %v1250 = vpop.permute.xlu0 %1249
      %1251 = vrot.lane.b32.xlu0 %v1206, 99
      %v1252 = vpop.permute.xlu0 %1251
      %1253 = vrot.lane.b32.xlu0 %v1207, 99
      %v1254 = vpop.permute.xlu0 %1253
      %v1255 = vsel %vm327, %v1252, %v1254
      %v1256 = vsel %vm327, %v1250, %v1252
      %1257 = vrot.lane.b32.xlu0 %v1205, 91
      %v1258 = vpop.permute.xlu0 %1257
      %1259 = vrot.lane.b32.xlu0 %v1206, 91
      %v1260 = vpop.permute.xlu0 %1259
      %1261 = vrot.lane.b32.xlu0 %v1207, 91
      %v1262 = vpop.permute.xlu0 %1261
      %v1263 = vsel %vm336, %v1260, %v1262
      %v1264 = vsel %vm336, %v1258, %v1260
      %1265 = vrot.lane.b32.xlu0 %v1205, 90
      %v1266 = vpop.permute.xlu0 %1265
      %1267 = vrot.lane.b32.xlu0 %v1206, 90
      %v1268 = vpop.permute.xlu0 %1267
      %1269 = vrot.lane.b32.xlu0 %v1207, 90
      %v1270 = vpop.permute.xlu0 %1269
      %v1271 = vsel %vm345, %v1268, %v1270
      %v1272 = vsel %vm345, %v1266, %v1268
      %1273 = vrot.lane.b32.xlu0 %v1205, 89
      %v1274 = vpop.permute.xlu0 %1273
      %1275 = vrot.lane.b32.xlu0 %v1206, 89
      %v1276 = vpop.permute.xlu0 %1275
      %1277 = vrot.lane.b32.xlu0 %v1207, 89
      %v1278 = vpop.permute.xlu0 %1277
      %v1279 = vsel %vm354, %v1276, %v1278
      %v1280 = vsel %vm354, %v1274, %v1276
      %1281 = vrot.lane.b32.xlu0 %v1205, 11
      %v1282 = vpop.permute.xlu0 %1281
      %1283 = vrot.lane.b32.xlu0 %v1206, 11
      %v1284 = vpop.permute.xlu0 %1283
      %1285 = vrot.lane.b32.xlu0 %v1207, 11
      %v1286 = vpop.permute.xlu0 %1285
      %v1287 = vsel %vm363, %v1284, %v1286
      %v1288 = vsel %vm363, %v1282, %v1284
      %1289 = vrot.lane.b32.xlu0 %v1205, 10
      %v1290 = vpop.permute.xlu0 %1289
      %1291 = vrot.lane.b32.xlu0 %v1206, 10
      %v1292 = vpop.permute.xlu0 %1291
      %1293 = vrot.lane.b32.xlu0 %v1207, 10
      %v1294 = vpop.permute.xlu0 %1293
      %v1295 = vsel %vm372, %v1292, %v1294
      %v1296 = vsel %vm372, %v1290, %v1292
      %1297 = vrot.lane.b32.xlu0 %v1205, 9
      %v1298 = vpop.permute.xlu0 %1297
      %1299 = vrot.lane.b32.xlu0 %v1206, 9
      %v1300 = vpop.permute.xlu0 %1299
      %1301 = vrot.lane.b32.xlu0 %v1207, 9
      %v1302 = vpop.permute.xlu0 %1301
      %v1303 = vsel %vm381, %v1300, %v1302
      %v1304 = vsel %vm381, %v1298, %v1300
      %1305 = vrot.lane.b32.xlu0 %v1205, 1
      %v1306 = vpop.permute.xlu0 %1305
      %1307 = vrot.lane.b32.xlu0 %v1206, 1
      %v1308 = vpop.permute.xlu0 %1307
      %1309 = vrot.lane.b32.xlu0 %v1207, 1
      %v1310 = vpop.permute.xlu0 %1309
      %v1311 = vsel %vm390, %v1308, %v1310
      %v1312 = vsel %vm390, %v1306, %v1308
      %1313 = vrot.lane.b32.xlu0 %v1206, 127
      %v1314 = vpop.permute.xlu0 %1313
      %1315 = vrot.lane.b32.xlu0 %v1207, 127
      %v1316 = vpop.permute.xlu0 %1315
      %1317 = vrot.lane.b32.xlu0 %v1208, 127
      %v1318 = vpop.permute.xlu0 %1317
      %v1319 = vsel %vm399, %v1316, %v1318
      %v1320 = vsel %vm399, %v1314, %v1316
      %1321 = vrot.lane.b32.xlu0 %v1206, 119
      %v1322 = vpop.permute.xlu0 %1321
      %1323 = vrot.lane.b32.xlu0 %v1207, 119
      %v1324 = vpop.permute.xlu0 %1323
      %1325 = vrot.lane.b32.xlu0 %v1208, 119
      %v1326 = vpop.permute.xlu0 %1325
      %v1327 = vsel %vm408, %v1324, %v1326
      %v1328 = vsel %vm408, %v1322, %v1324
      %1329 = vrot.lane.b32.xlu0 %v1206, 118
      %v1330 = vpop.permute.xlu0 %1329
      %1331 = vrot.lane.b32.xlu0 %v1207, 118
      %v1332 = vpop.permute.xlu0 %1331
      %1333 = vrot.lane.b32.xlu0 %v1208, 118
      %v1334 = vpop.permute.xlu0 %1333
      %v1335 = vsel %vm417, %v1332, %v1334
      %v1336 = vsel %vm417, %v1330, %v1332
      %1337 = vrot.lane.b32.xlu0 %v1206, 117
      %v1338 = vpop.permute.xlu0 %1337
      %1339 = vrot.lane.b32.xlu0 %v1207, 117
      %v1340 = vpop.permute.xlu0 %1339
      %1341 = vrot.lane.b32.xlu0 %v1208, 117
      %v1342 = vpop.permute.xlu0 %1341
      %v1343 = vsel %vm426, %v1340, %v1342
      %v1344 = vsel %vm426, %v1338, %v1340
      %1345 = vrot.lane.b32.xlu0 %v1206, 39
      %v1346 = vpop.permute.xlu0 %1345
      %1347 = vrot.lane.b32.xlu0 %v1207, 39
      %v1348 = vpop.permute.xlu0 %1347
      %1349 = vrot.lane.b32.xlu0 %v1208, 39
      %v1350 = vpop.permute.xlu0 %1349
      %v1351 = vsel %vm435, %v1348, %v1350
      %v1352 = vsel %vm435, %v1346, %v1348
      %1353 = vrot.lane.b32.xlu0 %v1206, 38
      %v1354 = vpop.permute.xlu0 %1353
      %1355 = vrot.lane.b32.xlu0 %v1207, 38
      %v1356 = vpop.permute.xlu0 %1355
      %1357 = vrot.lane.b32.xlu0 %v1208, 38
      %v1358 = vpop.permute.xlu0 %1357
      %v1359 = vsel %vm444, %v1356, %v1358
      %v1360 = vsel %vm444, %v1354, %v1356
      %1361 = vrot.lane.b32.xlu0 %v1206, 37
      %v1362 = vpop.permute.xlu0 %1361
      %1363 = vrot.lane.b32.xlu0 %v1207, 37
      %v1364 = vpop.permute.xlu0 %1363
      %1365 = vrot.lane.b32.xlu0 %v1208, 37
      %v1366 = vpop.permute.xlu0 %1365
      %v1367 = vsel %vm453, %v1364, %v1366
      %v1368 = vsel %vm453, %v1362, %v1364
      %1369 = vrot.lane.b32.xlu0 %v1206, 29
      %v1370 = vpop.permute.xlu0 %1369
      %1371 = vrot.lane.b32.xlu0 %v1207, 29
      %v1372 = vpop.permute.xlu0 %1371
      %1373 = vrot.lane.b32.xlu0 %v1208, 29
      %v1374 = vpop.permute.xlu0 %1373
      %v1375 = vsel %vm462, %v1372, %v1374
      %v1376 = vsel %vm462, %v1370, %v1372
      %1377 = vrot.lane.b32.xlu0 %v1206, 28
      %v1378 = vpop.permute.xlu0 %1377
      %1379 = vrot.lane.b32.xlu0 %v1207, 28
      %v1380 = vpop.permute.xlu0 %1379
      %1381 = vrot.lane.b32.xlu0 %v1208, 28
      %v1382 = vpop.permute.xlu0 %1381
      %v1383 = vsel %vm471, %v1380, %v1382
      %v1384 = vsel %vm471, %v1378, %v1380
      %1385 = vrot.lane.b32.xlu0 %v1206, 27
      %v1386 = vpop.permute.xlu0 %1385
      %1387 = vrot.lane.b32.xlu0 %v1207, 27
      %v1388 = vpop.permute.xlu0 %1387
      %1389 = vrot.lane.b32.xlu0 %v1208, 27
      %v1390 = vpop.permute.xlu0 %1389
      %v1391 = vsel %vm480, %v1388, %v1390
      %v1392 = vsel %vm480, %v1386, %v1388
      %1393 = vrot.lane.b32.xlu0 %v1206, 19
      %v1394 = vpop.permute.xlu0 %1393
      %1395 = vrot.lane.b32.xlu0 %v1207, 19
      %v1396 = vpop.permute.xlu0 %1395
      %1397 = vrot.lane.b32.xlu0 %v1208, 19
      %v1398 = vpop.permute.xlu0 %1397
      %v1399 = vsel %vm489, %v1396, %v1398
      %v1400 = vsel %vm489, %v1394, %v1396
      %1401 = vrot.lane.b32.xlu0 %v1206, 18
      %v1402 = vpop.permute.xlu0 %1401
      %1403 = vrot.lane.b32.xlu0 %v1207, 18
      %v1404 = vpop.permute.xlu0 %1403
      %1405 = vrot.lane.b32.xlu0 %v1208, 18
      %v1406 = vpop.permute.xlu0 %1405
      %v1407 = vsel %vm498, %v1404, %v1406
      %v1408 = vsel %vm498, %v1402, %v1404
      %1409 = vrot.lane.b32.xlu0 %v1206, 17
      %v1410 = vpop.permute.xlu0 %1409
      %1411 = vrot.lane.b32.xlu0 %v1207, 17
      %v1412 = vpop.permute.xlu0 %1411
      %1413 = vrot.lane.b32.xlu0 %v1208, 17
      %v1414 = vpop.permute.xlu0 %1413
      %v1415 = vsel %vm507, %v1412, %v1414
      %v1416 = vsel %vm507, %v1410, %v1412
      %1417 = vmatprep.subr.mxu0 %v1215
      %1418 = vmatpush1.msra.mxu0 %v1216
      %1419 = vmatprep.subr.mxu0 %v1223
      %1420 = vmatpush1.msra.mxu0 %v1224
      %1421 = vmatprep.subr.mxu0 %v1231
      %1422 = vmatpush1.msra.mxu0 %v1232
      %1423 = vmatprep.subr.mxu0 %v1239
      %1424 = vmatpush1.msra.mxu0 %v1240
      %1425 = vmatprep.subr.mxu0 %v1247
      %1426 = vmatpush1.msra.mxu0 %v1248
      %1427 = vmatprep.subr.mxu0 %v1255
      %1428 = vmatpush1.msra.mxu0 %v1256
      %1429 = vmatprep.subr.mxu0 %v1263
      %1430 = vmatpush1.msra.mxu0 %v1264
      %1431 = vmatprep.subr.mxu0 %v1271
      %1432 = vmatpush1.msra.mxu0 %v1272
      %1433 = vmatprep.subr.mxu0 %v1279
      %1434 = vmatpush1.msra.mxu0 %v1280
      %1435 = vmatprep.subr.mxu0 %v1287
      %1436 = vmatpush1.msra.mxu0 %v1288
      %1437 = vmatprep.subr.mxu0 %v1295
      %1438 = vmatpush1.msra.mxu0 %v1296
      %1439 = vmatprep.subr.mxu0 %v1303
      %1440 = vmatpush1.msra.mxu0 %v1304
      %1441 = vmatprep.subr.mxu0 %v1311
      %1442 = vmatpush1.msra.mxu0 %v1312
      %1443 = vmatprep.subr.mxu0 %v1207
      %1444 = vmatpush1.msra.mxu0 %v1206
      %1445 = vmatprep.subr.mxu0 %v1319
      %1446 = vmatpush1.msra.mxu0 %v1320
      %1447 = vmatprep.subr.mxu0 %v1327
      %1448 = vmatpush1.msra.mxu0 %v1328
      %1449 = vmatprep.subr.mxu0 %v1335
      %1450 = vmatpush1.msra.mxu0 %v1336
      %1451 = vmatprep.subr.mxu0 %v1343
      %1452 = vmatpush1.msra.mxu0 %v1344
      %1453 = vmatprep.subr.mxu0 %v1351
      %1454 = vmatpush1.msra.mxu0 %v1352
      %1455 = vmatprep.subr.mxu0 %v1359
      %1456 = vmatpush1.msra.mxu0 %v1360
      %1457 = vmatprep.subr.mxu0 %v1367
      %1458 = vmatpush1.msra.mxu0 %v1368
      %1459 = vmatprep.subr.mxu0 %v1375
      %1460 = vmatpush1.msra.mxu0 %v1376
      %1461 = vmatprep.subr.mxu0 %v1383
      %1462 = vmatpush1.msra.mxu0 %v1384
      %1463 = vmatprep.subr.mxu0 %v1391
      %1464 = vmatpush1.msra.mxu0 %v1392
      %1465 = vmatprep.subr.mxu0 %v1399
      %1466 = vmatpush1.msra.mxu0 %v1400
      %1467 = vmatprep.subr.mxu0 %v1407
      %1468 = vmatpush1.msra.mxu0 %v1408
      %1469 = vmatprep.subr.mxu0 %v1415
      %1470 = vmatpush1.msra.mxu0 %v1416
      %1471 = vmatprep.subr.mxu0 0.0
      %1472 = vmatpush1.msra.mxu0 0.0
      %1473 = vmatprep.subr.mxu0 0.0
      %1474 = vmatpush1.msra.mxu0 0.0
      %1475 = vmatprep.subr.mxu0 0.0
      %1476 = vmatpush1.msra.mxu0 0.0
      %1477 = vmatprep.subr.mxu0 0.0
      %1478 = vmatpush1.msra.mxu0 0.0
      %1479 = vmatprep.subr.mxu0 0.0
      %1480 = vmatpush1.msra.mxu0 0.0
      %1481 = vmatprep.mubr.f32.mxu0 %v512
      %1482 = vmatmul.mubr.f32.gmra.mrb[0].mxu0 %v254
      %v1483 = vpop.f32.mrb[0].mxu0
      %v1484 = vadd.f32 %v262, %v1483
      %v1485 = vpop.f32.mrb[0].mxu0
      %v1486 = vadd.f32 %v262, %v1485
      %1487 = vdwg.mxu0
      %v1488 = vmax.f32 %v1484, 0.0
      %v1489 = vmax.f32 %v1486, 0.0
      %v1490 = vld [vmem:[%s5 + $0x6] sm:$0x3]
      %v1492 = vlaneseq
      %v1493 = vshrl.u32 %v1492, 7
      %v1494 = vsub.s32 0, %v1493
      %v1495 = vrot.slane %v1490, %v1494
      %v1496 = vlaneseq
      %v1497 = vshrl.u32 %v1496, 7
      %v1498 = vsub.s32 1, %v1497
      %v1499 = vrot.slane %v1490, %v1498
      %v1502 = vmul.f32 %v1488, %v1495
      %v1503 = vmul.f32 %v1489, %v1499
      %1504 = vst [vmem:[#allocation2 + $0x38] sm:$0xff] %v1502
      %1505 = vst [vmem:[#allocation2 + $0x40] sm:$0xff] %v1503
      %v1506 = vld [vmem:[#allocation2] sm:$0xff]
      %v1507 = vld [vmem:[#allocation2 + $0x8] sm:$0xff]
      %v1508 = vld [vmem:[#allocation2 + $0x10] sm:$0xff]
      %v1509 = vld [vmem:[#allocation2 + $0x18] sm:$0xff]
      %1510 = vrot.lane.b32.xlu0 %v1506, 111
      %v1511 = vpop.permute.xlu0 %1510
      %1512 = vrot.lane.b32.xlu0 %v1507, 111
      %v1513 = vpop.permute.xlu0 %1512
      %1514 = vrot.lane.b32.xlu0 %v1508, 111
      %v1515 = vpop.permute.xlu0 %1514
      %v1516 = vsel %vm282, %v1513, %v1515
      %v1517 = vsel %vm282, %v1511, %v1513
      %1518 = vrot.lane.b32.xlu0 %v1506, 110
      %v1519 = vpop.permute.xlu0 %1518
      %1520 = vrot.lane.b32.xlu0 %v1507, 110
      %v1521 = vpop.permute.xlu0 %1520
      %1522 = vrot.lane.b32.xlu0 %v1508, 110
      %v1523 = vpop.permute.xlu0 %1522
      %v1524 = vsel %vm291, %v1521, %v1523
      %v1525 = vsel %vm291, %v1519, %v1521
      %1526 = vrot.lane.b32.xlu0 %v1506, 109
      %v1527 = vpop.permute.xlu0 %1526
      %1528 = vrot.lane.b32.xlu0 %v1507, 109
      %v1529 = vpop.permute.xlu0 %1528
      %1530 = vrot.lane.b32.xlu0 %v1508, 109
      %v1531 = vpop.permute.xlu0 %1530
      %v1532 = vsel %vm300, %v1529, %v1531
      %v1533 = vsel %vm300, %v1527, %v1529
      %1534 = vrot.lane.b32.xlu0 %v1506, 101
      %v1535 = vpop.permute.xlu0 %1534
      %1536 = vrot.lane.b32.xlu0 %v1507, 101
      %v1537 = vpop.permute.xlu0 %1536
      %1538 = vrot.lane.b32.xlu0 %v1508, 101
      %v1539 = vpop.permute.xlu0 %1538
      %v1540 = vsel %vm309, %v1537, %v1539
      %v1541 = vsel %vm309, %v1535, %v1537
      %1542 = vrot.lane.b32.xlu0 %v1506, 100
      %v1543 = vpop.permute.xlu0 %1542
      %1544 = vrot.lane.b32.xlu0 %v1507, 100
      %v1545 = vpop.permute.xlu0 %1544
      %1546 = vrot.lane.b32.xlu0 %v1508, 100
      %v1547 = vpop.permute.xlu0 %1546
      %v1548 = vsel %vm318, %v1545, %v1547
      %v1549 = vsel %vm318, %v1543, %v1545
      %1550 = vrot.lane.b32.xlu0 %v1506, 99
      %v1551 = vpop.permute.xlu0 %1550
      %1552 = vrot.lane.b32.xlu0 %v1507, 99
      %v1553 = vpop.permute.xlu0 %1552
      %1554 = vrot.lane.b32.xlu0 %v1508, 99
      %v1555 = vpop.permute.xlu0 %1554
      %v1556 = vsel %vm327, %v1553, %v1555
      %v1557 = vsel %vm327, %v1551, %v1553
      %1558 = vrot.lane.b32.xlu0 %v1506, 91
      %v1559 = vpop.permute.xlu0 %1558
      %1560 = vrot.lane.b32.xlu0 %v1507, 91
      %v1561 = vpop.permute.xlu0 %1560
      %1562 = vrot.lane.b32.xlu0 %v1508, 91
      %v1563 = vpop.permute.xlu0 %1562
      %v1564 = vsel %vm336, %v1561, %v1563
      %v1565 = vsel %vm336, %v1559, %v1561
      %1566 = vrot.lane.b32.xlu0 %v1506, 90
      %v1567 = vpop.permute.xlu0 %1566
      %1568 = vrot.lane.b32.xlu0 %v1507, 90
      %v1569 = vpop.permute.xlu0 %1568
      %1570 = vrot.lane.b32.xlu0 %v1508, 90
      %v1571 = vpop.permute.xlu0 %1570
      %v1572 = vsel %vm345, %v1569, %v1571
      %v1573 = vsel %vm345, %v1567, %v1569
      %1574 = vrot.lane.b32.xlu0 %v1506, 89
      %v1575 = vpop.permute.xlu0 %1574
      %1576 = vrot.lane.b32.xlu0 %v1507, 89
      %v1577 = vpop.permute.xlu0 %1576
      %1578 = vrot.lane.b32.xlu0 %v1508, 89
      %v1579 = vpop.permute.xlu0 %1578
      %v1580 = vsel %vm354, %v1577, %v1579
      %v1581 = vsel %vm354, %v1575, %v1577
      %1582 = vrot.lane.b32.xlu0 %v1506, 11
      %v1583 = vpop.permute.xlu0 %1582
      %1584 = vrot.lane.b32.xlu0 %v1507, 11
      %v1585 = vpop.permute.xlu0 %1584
      %1586 = vrot.lane.b32.xlu0 %v1508, 11
      %v1587 = vpop.permute.xlu0 %1586
      %v1588 = vsel %vm363, %v1585, %v1587
      %v1589 = vsel %vm363, %v1583, %v1585
      %1590 = vrot.lane.b32.xlu0 %v1506, 10
      %v1591 = vpop.permute.xlu0 %1590
      %1592 = vrot.lane.b32.xlu0 %v1507, 10
      %v1593 = vpop.permute.xlu0 %1592
      %1594 = vrot.lane.b32.xlu0 %v1508, 10
      %v1595 = vpop.permute.xlu0 %1594
      %v1596 = vsel %vm372, %v1593, %v1595
      %v1597 = vsel %vm372, %v1591, %v1593
      %1598 = vrot.lane.b32.xlu0 %v1506, 9
      %v1599 = vpop.permute.xlu0 %1598
      %1600 = vrot.lane.b32.xlu0 %v1507, 9
      %v1601 = vpop.permute.xlu0 %1600
      %1602 = vrot.lane.b32.xlu0 %v1508, 9
      %v1603 = vpop.permute.xlu0 %1602
      %v1604 = vsel %vm381, %v1601, %v1603
      %v1605 = vsel %vm381, %v1599, %v1601
      %1606 = vrot.lane.b32.xlu0 %v1506, 1
      %v1607 = vpop.permute.xlu0 %1606
      %1608 = vrot.lane.b32.xlu0 %v1507, 1
      %v1609 = vpop.permute.xlu0 %1608
      %1610 = vrot.lane.b32.xlu0 %v1508, 1
      %v1611 = vpop.permute.xlu0 %1610
      %v1612 = vsel %vm390, %v1609, %v1611
      %v1613 = vsel %vm390, %v1607, %v1609
      %1614 = vrot.lane.b32.xlu0 %v1507, 127
      %v1615 = vpop.permute.xlu0 %1614
      %1616 = vrot.lane.b32.xlu0 %v1508, 127
      %v1617 = vpop.permute.xlu0 %1616
      %1618 = vrot.lane.b32.xlu0 %v1509, 127
      %v1619 = vpop.permute.xlu0 %1618
      %v1620 = vsel %vm399, %v1617, %v1619
      %v1621 = vsel %vm399, %v1615, %v1617
      %1622 = vrot.lane.b32.xlu0 %v1507, 119
      %v1623 = vpop.permute.xlu0 %1622
      %1624 = vrot.lane.b32.xlu0 %v1508, 119
      %v1625 = vpop.permute.xlu0 %1624
      %1626 = vrot.lane.b32.xlu0 %v1509, 119
      %v1627 = vpop.permute.xlu0 %1626
      %v1628 = vsel %vm408, %v1625, %v1627
      %v1629 = vsel %vm408, %v1623, %v1625
      %1630 = vrot.lane.b32.xlu0 %v1507, 118
      %v1631 = vpop.permute.xlu0 %1630
      %1632 = vrot.lane.b32.xlu0 %v1508, 118
      %v1633 = vpop.permute.xlu0 %1632
      %1634 = vrot.lane.b32.xlu0 %v1509, 118
      %v1635 = vpop.permute.xlu0 %1634
      %v1636 = vsel %vm417, %v1633, %v1635
      %v1637 = vsel %vm417, %v1631, %v1633
      %1638 = vrot.lane.b32.xlu0 %v1507, 117
      %v1639 = vpop.permute.xlu0 %1638
      %1640 = vrot.lane.b32.xlu0 %v1508, 117
      %v1641 = vpop.permute.xlu0 %1640
      %1642 = vrot.lane.b32.xlu0 %v1509, 117
      %v1643 = vpop.permute.xlu0 %1642
      %v1644 = vsel %vm426, %v1641, %v1643
      %v1645 = vsel %vm426, %v1639, %v1641
      %1646 = vrot.lane.b32.xlu0 %v1507, 39
      %v1647 = vpop.permute.xlu0 %1646
      %1648 = vrot.lane.b32.xlu0 %v1508, 39
      %v1649 = vpop.permute.xlu0 %1648
      %1650 = vrot.lane.b32.xlu0 %v1509, 39
      %v1651 = vpop.permute.xlu0 %1650
      %v1652 = vsel %vm435, %v1649, %v1651
      %v1653 = vsel %vm435, %v1647, %v1649
      %1654 = vrot.lane.b32.xlu0 %v1507, 38
      %v1655 = vpop.permute.xlu0 %1654
      %1656 = vrot.lane.b32.xlu0 %v1508, 38
      %v1657 = vpop.permute.xlu0 %1656
      %1658 = vrot.lane.b32.xlu0 %v1509, 38
      %v1659 = vpop.permute.xlu0 %1658
      %v1660 = vsel %vm444, %v1657, %v1659
      %v1661 = vsel %vm444, %v1655, %v1657
      %1662 = vrot.lane.b32.xlu0 %v1507, 37
      %v1663 = vpop.permute.xlu0 %1662
      %1664 = vrot.lane.b32.xlu0 %v1508, 37
      %v1665 = vpop.permute.xlu0 %1664
      %1666 = vrot.lane.b32.xlu0 %v1509, 37
      %v1667 = vpop.permute.xlu0 %1666
      %v1668 = vsel %vm453, %v1665, %v1667
      %v1669 = vsel %vm453, %v1663, %v1665
      %1670 = vrot.lane.b32.xlu0 %v1507, 29
      %v1671 = vpop.permute.xlu0 %1670
      %1672 = vrot.lane.b32.xlu0 %v1508, 29
      %v1673 = vpop.permute.xlu0 %1672
      %1674 = vrot.lane.b32.xlu0 %v1509, 29
      %v1675 = vpop.permute.xlu0 %1674
      %v1676 = vsel %vm462, %v1673, %v1675
      %v1677 = vsel %vm462, %v1671, %v1673
      %1678 = vrot.lane.b32.xlu0 %v1507, 28
      %v1679 = vpop.permute.xlu0 %1678
      %1680 = vrot.lane.b32.xlu0 %v1508, 28
      %v1681 = vpop.permute.xlu0 %1680
      %1682 = vrot.lane.b32.xlu0 %v1509, 28
      %v1683 = vpop.permute.xlu0 %1682
      %v1684 = vsel %vm471, %v1681, %v1683
      %v1685 = vsel %vm471, %v1679, %v1681
      %1686 = vrot.lane.b32.xlu0 %v1507, 27
      %v1687 = vpop.permute.xlu0 %1686
      %1688 = vrot.lane.b32.xlu0 %v1508, 27
      %v1689 = vpop.permute.xlu0 %1688
      %1690 = vrot.lane.b32.xlu0 %v1509, 27
      %v1691 = vpop.permute.xlu0 %1690
      %v1692 = vsel %vm480, %v1689, %v1691
      %v1693 = vsel %vm480, %v1687, %v1689
      %1694 = vrot.lane.b32.xlu0 %v1507, 19
      %v1695 = vpop.permute.xlu0 %1694
      %1696 = vrot.lane.b32.xlu0 %v1508, 19
      %v1697 = vpop.permute.xlu0 %1696
      %1698 = vrot.lane.b32.xlu0 %v1509, 19
      %v1699 = vpop.permute.xlu0 %1698
      %v1700 = vsel %vm489, %v1697, %v1699
      %v1701 = vsel %vm489, %v1695, %v1697
      %1702 = vrot.lane.b32.xlu0 %v1507, 18
      %v1703 = vpop.permute.xlu0 %1702
      %1704 = vrot.lane.b32.xlu0 %v1508, 18
      %v1705 = vpop.permute.xlu0 %1704
      %1706 = vrot.lane.b32.xlu0 %v1509, 18
      %v1707 = vpop.permute.xlu0 %1706
      %v1708 = vsel %vm498, %v1705, %v1707
      %v1709 = vsel %vm498, %v1703, %v1705
      %1710 = vrot.lane.b32.xlu0 %v1507, 17
      %v1711 = vpop.permute.xlu0 %1710
      %1712 = vrot.lane.b32.xlu0 %v1508, 17
      %v1713 = vpop.permute.xlu0 %1712
      %1714 = vrot.lane.b32.xlu0 %v1509, 17
      %v1715 = vpop.permute.xlu0 %1714
      %v1716 = vsel %vm507, %v1713, %v1715
      %v1717 = vsel %vm507, %v1711, %v1713
      %v1719 = vsel %vm510, %v257, 0
      %1721 = vmatprep.subr.mxu0 %v1516
      %1722 = vmatpush1.msra.mxu0 %v1517
      %1723 = vmatprep.subr.mxu0 %v1524
      %1724 = vmatpush1.msra.mxu0 %v1525
      %1725 = vmatprep.subr.mxu0 %v1532
      %1726 = vmatpush1.msra.mxu0 %v1533
      %1727 = vmatprep.subr.mxu0 %v1540
      %1728 = vmatpush1.msra.mxu0 %v1541
      %1729 = vmatprep.subr.mxu0 %v1548
      %1730 = vmatpush1.msra.mxu0 %v1549
      %1731 = vmatprep.subr.mxu0 %v1556
      %1732 = vmatpush1.msra.mxu0 %v1557
      %1733 = vmatprep.subr.mxu0 %v1564
      %1734 = vmatpush1.msra.mxu0 %v1565
      %1735 = vmatprep.subr.mxu0 %v1572
      %1736 = vmatpush1.msra.mxu0 %v1573
      %1737 = vmatprep.subr.mxu0 %v1580
      %1738 = vmatpush1.msra.mxu0 %v1581
      %1739 = vmatprep.subr.mxu0 %v1588
      %1740 = vmatpush1.msra.mxu0 %v1589
      %1741 = vmatprep.subr.mxu0 %v1596
      %1742 = vmatpush1.msra.mxu0 %v1597
      %1743 = vmatprep.subr.mxu0 %v1604
      %1744 = vmatpush1.msra.mxu0 %v1605
      %1745 = vmatprep.subr.mxu0 %v1612
      %1746 = vmatpush1.msra.mxu0 %v1613
      %1747 = vmatprep.subr.mxu0 %v1508
      %1748 = vmatpush1.msra.mxu0 %v1507
      %1749 = vmatprep.subr.mxu0 %v1620
      %1750 = vmatpush1.msra.mxu0 %v1621
      %1751 = vmatprep.subr.mxu0 %v1628
      %1752 = vmatpush1.msra.mxu0 %v1629
      %1753 = vmatprep.subr.mxu0 %v1636
      %1754 = vmatpush1.msra.mxu0 %v1637
      %1755 = vmatprep.subr.mxu0 %v1644
      %1756 = vmatpush1.msra.mxu0 %v1645
      %1757 = vmatprep.subr.mxu0 %v1652
      %1758 = vmatpush1.msra.mxu0 %v1653
      %1759 = vmatprep.subr.mxu0 %v1660
      %1760 = vmatpush1.msra.mxu0 %v1661
      %1761 = vmatprep.subr.mxu0 %v1668
      %1762 = vmatpush1.msra.mxu0 %v1669
      %1763 = vmatprep.subr.mxu0 %v1676
      %1764 = vmatpush1.msra.mxu0 %v1677
      %1765 = vmatprep.subr.mxu0 %v1684
      %1766 = vmatpush1.msra.mxu0 %v1685
      %1767 = vmatprep.subr.mxu0 %v1692
      %1768 = vmatpush1.msra.mxu0 %v1693
      %1769 = vmatprep.subr.mxu0 %v1700
      %1770 = vmatpush1.msra.mxu0 %v1701
      %1771 = vmatprep.subr.mxu0 %v1708
      %1772 = vmatpush1.msra.mxu0 %v1709
      %1773 = vmatprep.subr.mxu0 %v1716
      %1774 = vmatpush1.msra.mxu0 %v1717
      %1775 = vmatprep.subr.mxu0 0.0
      %1776 = vmatpush1.msra.mxu0 0.0
      %1777 = vmatprep.subr.mxu0 0.0
      %1778 = vmatpush1.msra.mxu0 0.0
      %1779 = vmatprep.subr.mxu0 0.0
      %1780 = vmatpush1.msra.mxu0 0.0
      %1781 = vmatprep.subr.mxu0 0.0
      %1782 = vmatpush1.msra.mxu0 0.0
      %1783 = vmatprep.subr.mxu0 0.0
      %1784 = vmatpush1.msra.mxu0 0.0
      %1785 = vmatprep.mubr.f32.mxu0 %v1719
      %1786 = vmatmul.mubr.f32.gmra.mrb[0].mxu0 %v256
      %v1787 = vpop.f32.mrb[0].mxu0
      %v1788 = vadd.f32 %v268, %v1787
      %v1789 = vpop.f32.mrb[0].mxu0
      %v1790 = vadd.f32 %v268, %v1789
      %1791 = vdwg.mxu0
      %v1792 = vld [vmem:[%s246 + $0x8] sm:$0xff]
      %v1793 = vld [vmem:[%s246 + $0x10] sm:$0xff]
      %v1794 = vadd.f32 %v1788, %v1792
      %v1795 = vadd.f32 %v1790, %v1793
      %v1796 = vmax.f32 %v1794, 0.0
      %v1797 = vmax.f32 %v1795, 0.0
      %1798 = vst [vmem:[%s251] sm:$0xff] %v1796
      %1799 = vst [vmem:[%s251 + $0x8] sm:$0xff] %v1797
      %v1800 = vld [vmem:[#allocation2 + $0x10] sm:$0xff]
      %v1801 = vld [vmem:[#allocation2 + $0x18] sm:$0xff]
      %v1802 = vld [vmem:[#allocation2 + $0x20] sm:$0xff]
      %v1803 = vld [vmem:[#allocation2 + $0x28] sm:$0xff]
      %1804 = vrot.lane.b32.xlu0 %v1800, 111
      %v1805 = vpop.permute.xlu0 %1804
      %1806 = vrot.lane.b32.xlu0 %v1801, 111
      %v1807 = vpop.permute.xlu0 %1806
      %1808 = vrot.lane.b32.xlu0 %v1802, 111
      %v1809 = vpop.permute.xlu0 %1808
      %v1810 = vsel %vm282, %v1807, %v1809
      %v1811 = vsel %vm282, %v1805, %v1807
      %1812 = vrot.lane.b32.xlu0 %v1800, 110
      %v1813 = vpop.permute.xlu0 %1812
      %1814 = vrot.lane.b32.xlu0 %v1801, 110
      %v1815 = vpop.permute.xlu0 %1814
      %1816 = vrot.lane.b32.xlu0 %v1802, 110
      %v1817 = vpop.permute.xlu0 %1816
      %v1818 = vsel %vm291, %v1815, %v1817
      %v1819 = vsel %vm291, %v1813, %v1815
      %1820 = vrot.lane.b32.xlu0 %v1800, 109
      %v1821 = vpop.permute.xlu0 %1820
      %1822 = vrot.lane.b32.xlu0 %v1801, 109
      %v1823 = vpop.permute.xlu0 %1822
      %1824 = vrot.lane.b32.xlu0 %v1802, 109
      %v1825 = vpop.permute.xlu0 %1824
      %v1826 = vsel %vm300, %v1823, %v1825
      %v1827 = vsel %vm300, %v1821, %v1823
      %1828 = vrot.lane.b32.xlu0 %v1800, 101
      %v1829 = vpop.permute.xlu0 %1828
      %1830 = vrot.lane.b32.xlu0 %v1801, 101
      %v1831 = vpop.permute.xlu0 %1830
      %1832 = vrot.lane.b32.xlu0 %v1802, 101
      %v1833 = vpop.permute.xlu0 %1832
      %v1834 = vsel %vm309, %v1831, %v1833
      %v1835 = vsel %vm309, %v1829, %v1831
      %1836 = vrot.lane.b32.xlu0 %v1800, 100
      %v1837 = vpop.permute.xlu0 %1836
      %1838 = vrot.lane.b32.xlu0 %v1801, 100
      %v1839 = vpop.permute.xlu0 %1838
      %1840 = vrot.lane.b32.xlu0 %v1802, 100
      %v1841 = vpop.permute.xlu0 %1840
      %v1842 = vsel %vm318, %v1839, %v1841
      %v1843 = vsel %vm318, %v1837, %v1839
      %1844 = vrot.lane.b32.xlu0 %v1800, 99
      %v1845 = vpop.permute.xlu0 %1844
      %1846 = vrot.lane.b32.xlu0 %v1801, 99
      %v1847 = vpop.permute.xlu0 %1846
      %1848 = vrot.lane.b32.xlu0 %v1802, 99
      %v1849 = vpop.permute.xlu0 %1848
      %v1850 = vsel %vm327, %v1847, %v1849
      %v1851 = vsel %vm327, %v1845, %v1847
      %1852 = vrot.lane.b32.xlu0 %v1800, 91
      %v1853 = vpop.permute.xlu0 %1852
      %1854 = vrot.lane.b32.xlu0 %v1801, 91
      %v1855 = vpop.permute.xlu0 %1854
      %1856 = vrot.lane.b32.xlu0 %v1802, 91
      %v1857 = vpop.permute.xlu0 %1856
      %v1858 = vsel %vm336, %v1855, %v1857
      %v1859 = vsel %vm336, %v1853, %v1855
      %1860 = vrot.lane.b32.xlu0 %v1800, 90
      %v1861 = vpop.permute.xlu0 %1860
      %1862 = vrot.lane.b32.xlu0 %v1801, 90
      %v1863 = vpop.permute.xlu0 %1862
      %1864 = vrot.lane.b32.xlu0 %v1802, 90
      %v1865 = vpop.permute.xlu0 %1864
      %v1866 = vsel %vm345, %v1863, %v1865
      %v1867 = vsel %vm345, %v1861, %v1863
      %1868 = vrot.lane.b32.xlu0 %v1800, 89
      %v1869 = vpop.permute.xlu0 %1868
      %1870 = vrot.lane.b32.xlu0 %v1801, 89
      %v1871 = vpop.permute.xlu0 %1870
      %1872 = vrot.lane.b32.xlu0 %v1802, 89
      %v1873 = vpop.permute.xlu0 %1872
      %v1874 = vsel %vm354, %v1871, %v1873
      %v1875 = vsel %vm354, %v1869, %v1871
      %1876 = vrot.lane.b32.xlu0 %v1800, 11
      %v1877 = vpop.permute.xlu0 %1876
      %1878 = vrot.lane.b32.xlu0 %v1801, 11
      %v1879 = vpop.permute.xlu0 %1878
      %1880 = vrot.lane.b32.xlu0 %v1802, 11
      %v1881 = vpop.permute.xlu0 %1880
      %v1882 = vsel %vm363, %v1879, %v1881
      %v1883 = vsel %vm363, %v1877, %v1879
      %1884 = vrot.lane.b32.xlu0 %v1800, 10
      %v1885 = vpop.permute.xlu0 %1884
      %1886 = vrot.lane.b32.xlu0 %v1801, 10
      %v1887 = vpop.permute.xlu0 %1886
      %1888 = vrot.lane.b32.xlu0 %v1802, 10
      %v1889 = vpop.permute.xlu0 %1888
      %v1890 = vsel %vm372, %v1887, %v1889
      %v1891 = vsel %vm372, %v1885, %v1887
      %1892 = vrot.lane.b32.xlu0 %v1800, 9
      %v1893 = vpop.permute.xlu0 %1892
      %1894 = vrot.lane.b32.xlu0 %v1801, 9
      %v1895 = vpop.permute.xlu0 %1894
      %1896 = vrot.lane.b32.xlu0 %v1802, 9
      %v1897 = vpop.permute.xlu0 %1896
      %v1898 = vsel %vm381, %v1895, %v1897
      %v1899 = vsel %vm381, %v1893, %v1895
      %1900 = vrot.lane.b32.xlu0 %v1800, 1
      %v1901 = vpop.permute.xlu0 %1900
      %1902 = vrot.lane.b32.xlu0 %v1801, 1
      %v1903 = vpop.permute.xlu0 %1902
      %1904 = vrot.lane.b32.xlu0 %v1802, 1
      %v1905 = vpop.permute.xlu0 %1904
      %v1906 = vsel %vm390, %v1903, %v1905
      %v1907 = vsel %vm390, %v1901, %v1903
      %1908 = vrot.lane.b32.xlu0 %v1801, 127
      %v1909 = vpop.permute.xlu0 %1908
      %1910 = vrot.lane.b32.xlu0 %v1802, 127
      %v1911 = vpop.permute.xlu0 %1910
      %1912 = vrot.lane.b32.xlu0 %v1803, 127
      %v1913 = vpop.permute.xlu0 %1912
      %v1914 = vsel %vm399, %v1911, %v1913
      %v1915 = vsel %vm399, %v1909, %v1911
      %1916 = vrot.lane.b32.xlu0 %v1801, 119
      %v1917 = vpop.permute.xlu0 %1916
      %1918 = vrot.lane.b32.xlu0 %v1802, 119
      %v1919 = vpop.permute.xlu0 %1918
      %1920 = vrot.lane.b32.xlu0 %v1803, 119
      %v1921 = vpop.permute.xlu0 %1920
      %v1922 = vsel %vm408, %v1919, %v1921
      %v1923 = vsel %vm408, %v1917, %v1919
      %1924 = vrot.lane.b32.xlu0 %v1801, 118
      %v1925 = vpop.permute.xlu0 %1924
      %1926 = vrot.lane.b32.xlu0 %v1802, 118
      %v1927 = vpop.permute.xlu0 %1926
      %1928 = vrot.lane.b32.xlu0 %v1803, 118
      %v1929 = vpop.permute.xlu0 %1928
      %v1930 = vsel %vm417, %v1927, %v1929
      %v1931 = vsel %vm417, %v1925, %v1927
      %1932 = vrot.lane.b32.xlu0 %v1801, 117
      %v1933 = vpop.permute.xlu0 %1932
      %1934 = vrot.lane.b32.xlu0 %v1802, 117
      %v1935 = vpop.permute.xlu0 %1934
      %1936 = vrot.lane.b32.xlu0 %v1803, 117
      %v1937 = vpop.permute.xlu0 %1936
      %v1938 = vsel %vm426, %v1935, %v1937
      %v1939 = vsel %vm426, %v1933, %v1935
      %1940 = vrot.lane.b32.xlu0 %v1801, 39
      %v1941 = vpop.permute.xlu0 %1940
      %1942 = vrot.lane.b32.xlu0 %v1802, 39
      %v1943 = vpop.permute.xlu0 %1942
      %1944 = vrot.lane.b32.xlu0 %v1803, 39
      %v1945 = vpop.permute.xlu0 %1944
      %v1946 = vsel %vm435, %v1943, %v1945
      %v1947 = vsel %vm435, %v1941, %v1943
      %1948 = vrot.lane.b32.xlu0 %v1801, 38
      %v1949 = vpop.permute.xlu0 %1948
      %1950 = vrot.lane.b32.xlu0 %v1802, 38
      %v1951 = vpop.permute.xlu0 %1950
      %1952 = vrot.lane.b32.xlu0 %v1803, 38
      %v1953 = vpop.permute.xlu0 %1952
      %v1954 = vsel %vm444, %v1951, %v1953
      %v1955 = vsel %vm444, %v1949, %v1951
      %1956 = vrot.lane.b32.xlu0 %v1801, 37
      %v1957 = vpop.permute.xlu0 %1956
      %1958 = vrot.lane.b32.xlu0 %v1802, 37
      %v1959 = vpop.permute.xlu0 %1958
      %1960 = vrot.lane.b32.xlu0 %v1803, 37
      %v1961 = vpop.permute.xlu0 %1960
      %v1962 = vsel %vm453, %v1959, %v1961
      %v1963 = vsel %vm453, %v1957, %v1959
      %1964 = vrot.lane.b32.xlu0 %v1801, 29
      %v1965 = vpop.permute.xlu0 %1964
      %1966 = vrot.lane.b32.xlu0 %v1802, 29
      %v1967 = vpop.permute.xlu0 %1966
      %1968 = vrot.lane.b32.xlu0 %v1803, 29
      %v1969 = vpop.permute.xlu0 %1968
      %v1970 = vsel %vm462, %v1967, %v1969
      %v1971 = vsel %vm462, %v1965, %v1967
      %1972 = vrot.lane.b32.xlu0 %v1801, 28
      %v1973 = vpop.permute.xlu0 %1972
      %1974 = vrot.lane.b32.xlu0 %v1802, 28
      %v1975 = vpop.permute.xlu0 %1974
      %1976 = vrot.lane.b32.xlu0 %v1803, 28
      %v1977 = vpop.permute.xlu0 %1976
      %v1978 = vsel %vm471, %v1975, %v1977
      %v1979 = vsel %vm471, %v1973, %v1975
      %1980 = vrot.lane.b32.xlu0 %v1801, 27
      %v1981 = vpop.permute.xlu0 %1980
      %1982 = vrot.lane.b32.xlu0 %v1802, 27
      %v1983 = vpop.permute.xlu0 %1982
      %1984 = vrot.lane.b32.xlu0 %v1803, 27
      %v1985 = vpop.permute.xlu0 %1984
      %v1986 = vsel %vm480, %v1983, %v1985
      %v1987 = vsel %vm480, %v1981, %v1983
      %1988 = vrot.lane.b32.xlu0 %v1801, 19
      %v1989 = vpop.permute.xlu0 %1988
      %1990 = vrot.lane.b32.xlu0 %v1802, 19
      %v1991 = vpop.permute.xlu0 %1990
      %1992 = vrot.lane.b32.xlu0 %v1803, 19
      %v1993 = vpop.permute.xlu0 %1992
      %v1994 = vsel %vm489, %v1991, %v1993
      %v1995 = vsel %vm489, %v1989, %v1991
      %1996 = vrot.lane.b32.xlu0 %v1801, 18
      %v1997 = vpop.permute.xlu0 %1996
      %1998 = vrot.lane.b32.xlu0 %v1802, 18
      %v1999 = vpop.permute.xlu0 %1998
      %2000 = vrot.lane.b32.xlu0 %v1803, 18
      %v2001 = vpop.permute.xlu0 %2000
      %v2002 = vsel %vm498, %v1999, %v2001
      %v2003 = vsel %vm498, %v1997, %v1999
      %2004 = vrot.lane.b32.xlu0 %v1801, 17
      %v2005 = vpop.permute.xlu0 %2004
      %2006 = vrot.lane.b32.xlu0 %v1802, 17
      %v2007 = vpop.permute.xlu0 %2006
      %2008 = vrot.lane.b32.xlu0 %v1803, 17
      %v2009 = vpop.permute.xlu0 %2008
      %v2010 = vsel %vm507, %v2007, %v2009
      %v2011 = vsel %vm507, %v2005, %v2007
      %2012 = vmatprep.subr.mxu0 %v1810
      %2013 = vmatpush1.msra.mxu0 %v1811
      %2014 = vmatprep.subr.mxu0 %v1818
      %2015 = vmatpush1.msra.mxu0 %v1819
      %2016 = vmatprep.subr.mxu0 %v1826
      %2017 = vmatpush1.msra.mxu0 %v1827
      %2018 = vmatprep.subr.mxu0 %v1834
      %2019 = vmatpush1.msra.mxu0 %v1835
      %2020 = vmatprep.subr.mxu0 %v1842
      %2021 = vmatpush1.msra.mxu0 %v1843
      %2022 = vmatprep.subr.mxu0 %v1850
      %2023 = vmatpush1.msra.mxu0 %v1851
      %2024 = vmatprep.subr.mxu0 %v1858
      %2025 = vmatpush1.msra.mxu0 %v1859
      %2026 = vmatprep.subr.mxu0 %v1866
      %2027 = vmatpush1.msra.mxu0 %v1867
      %2028 = vmatprep.subr.mxu0 %v1874
      %2029 = vmatpush1.msra.mxu0 %v1875
      %2030 = vmatprep.subr.mxu0 %v1882
      %2031 = vmatpush1.msra.mxu0 %v1883
      %2032 = vmatprep.subr.mxu0 %v1890
      %2033 = vmatpush1.msra.mxu0 %v1891
      %2034 = vmatprep.subr.mxu0 %v1898
      %2035 = vmatpush1.msra.mxu0 %v1899
      %2036 = vmatprep.subr.mxu0 %v1906
      %2037 = vmatpush1.msra.mxu0 %v1907
      %2038 = vmatprep.subr.mxu0 %v1802
      %2039 = vmatpush1.msra.mxu0 %v1801
      %2040 = vmatprep.subr.mxu0 %v1914
      %2041 = vmatpush1.msra.mxu0 %v1915
      %2042 = vmatprep.subr.mxu0 %v1922
      %2043 = vmatpush1.msra.mxu0 %v1923
      %2044 = vmatprep.subr.mxu0 %v1930
      %2045 = vmatpush1.msra.mxu0 %v1931
      %2046 = vmatprep.subr.mxu0 %v1938
      %2047 = vmatpush1.msra.mxu0 %v1939
      %2048 = vmatprep.subr.mxu0 %v1946
      %2049 = vmatpush1.msra.mxu0 %v1947
      %2050 = vmatprep.subr.mxu0 %v1954
      %2051 = vmatpush1.msra.mxu0 %v1955
      %2052 = vmatprep.subr.mxu0 %v1962
      %2053 = vmatpush1.msra.mxu0 %v1963
      %2054 = vmatprep.subr.mxu0 %v1970
      %2055 = vmatpush1.msra.mxu0 %v1971
      %2056 = vmatprep.subr.mxu0 %v1978
      %2057 = vmatpush1.msra.mxu0 %v1979
      %2058 = vmatprep.subr.mxu0 %v1986
      %2059 = vmatpush1.msra.mxu0 %v1987
      %2060 = vmatprep.subr.mxu0 %v1994
      %2061 = vmatpush1.msra.mxu0 %v1995
      %2062 = vmatprep.subr.mxu0 %v2002
      %2063 = vmatpush1.msra.mxu0 %v2003
      %2064 = vmatprep.subr.mxu0 %v2010
      %2065 = vmatpush1.msra.mxu0 %v2011
      %2066 = vmatprep.subr.mxu0 0.0
      %2067 = vmatpush1.msra.mxu0 0.0
      %2068 = vmatprep.subr.mxu0 0.0
      %2069 = vmatpush1.msra.mxu0 0.0
      %2070 = vmatprep.subr.mxu0 0.0
      %2071 = vmatpush1.msra.mxu0 0.0
      %2072 = vmatprep.subr.mxu0 0.0
      %2073 = vmatpush1.msra.mxu0 0.0
      %2074 = vmatprep.subr.mxu0 0.0
      %2075 = vmatpush1.msra.mxu0 0.0
      %2076 = vmatprep.mubr.f32.mxu0 %v1719
      %2077 = vmatmul.mubr.f32.gmra.mrb[0].mxu0 %v256
      %v2078 = vpop.f32.mrb[0].mxu0
      %v2079 = vadd.f32 %v268, %v2078
      %v2080 = vpop.f32.mrb[0].mxu0
      %v2081 = vadd.f32 %v268, %v2080
      %2082 = vdwg.mxu0
      %v2083 = vld [vmem:[%s246 + $0x18] sm:$0xff]
      %v2084 = vld [vmem:[%s246 + $0x20] sm:$0xff]
      %v2085 = vadd.f32 %v2079, %v2083
      %v2086 = vadd.f32 %v2081, %v2084
      %v2087 = vmax.f32 %v2085, 0.0
      %v2088 = vmax.f32 %v2086, 0.0
      %2089 = vst [vmem:[%s251 + $0x10] sm:$0xff] %v2087
      %2090 = vst [vmem:[%s251 + $0x18] sm:$0xff] %v2088
      %v2091 = vld [vmem:[#allocation2 + $0x20] sm:$0xff]
      %v2092 = vld [vmem:[#allocation2 + $0x28] sm:$0xff]
      %v2093 = vld [vmem:[#allocation2 + $0x30] sm:$0xff]
      %v2094 = vld [vmem:[#allocation2 + $0x38] sm:$0xff]
      %2095 = vrot.lane.b32.xlu0 %v2091, 111
      %v2096 = vpop.permute.xlu0 %2095
      %2097 = vrot.lane.b32.xlu0 %v2092, 111
      %v2098 = vpop.permute.xlu0 %2097
      %2099 = vrot.lane.b32.xlu0 %v2093, 111
      %v2100 = vpop.permute.xlu0 %2099
      %v2101 = vsel %vm282, %v2098, %v2100
      %v2102 = vsel %vm282, %v2096, %v2098
      %2103 = vrot.lane.b32.xlu0 %v2091, 110
      %v2104 = vpop.permute.xlu0 %2103
      %2105 = vrot.lane.b32.xlu0 %v2092, 110
      %v2106 = vpop.permute.xlu0 %2105
      %2107 = vrot.lane.b32.xlu0 %v2093, 110
      %v2108 = vpop.permute.xlu0 %2107
      %v2109 = vsel %vm291, %v2106, %v2108
      %v2110 = vsel %vm291, %v2104, %v2106
      %2111 = vrot.lane.b32.xlu0 %v2091, 109
      %v2112 = vpop.permute.xlu0 %2111
      %2113 = vrot.lane.b32.xlu0 %v2092, 109
      %v2114 = vpop.permute.xlu0 %2113
      %2115 = vrot.lane.b32.xlu0 %v2093, 109
      %v2116 = vpop.permute.xlu0 %2115
      %v2117 = vsel %vm300, %v2114, %v2116
      %v2118 = vsel %vm300, %v2112, %v2114
      %2119 = vrot.lane.b32.xlu0 %v2091, 101
      %v2120 = vpop.permute.xlu0 %2119
      %2121 = vrot.lane.b32.xlu0 %v2092, 101
      %v2122 = vpop.permute.xlu0 %2121
      %2123 = vrot.lane.b32.xlu0 %v2093, 101
      %v2124 = vpop.permute.xlu0 %2123
      %v2125 = vsel %vm309, %v2122, %v2124
      %v2126 = vsel %vm309, %v2120, %v2122
      %2127 = vrot.lane.b32.xlu0 %v2091, 100
      %v2128 = vpop.permute.xlu0 %2127
      %2129 = vrot.lane.b32.xlu0 %v2092, 100
      %v2130 = vpop.permute.xlu0 %2129
      %2131 = vrot.lane.b32.xlu0 %v2093, 100
      %v2132 = vpop.permute.xlu0 %2131
      %v2133 = vsel %vm318, %v2130, %v2132
      %v2134 = vsel %vm318, %v2128, %v2130
      %2135 = vrot.lane.b32.xlu0 %v2091, 99
      %v2136 = vpop.permute.xlu0 %2135
      %2137 = vrot.lane.b32.xlu0 %v2092, 99
      %v2138 = vpop.permute.xlu0 %2137
      %2139 = vrot.lane.b32.xlu0 %v2093, 99
      %v2140 = vpop.permute.xlu0 %2139
      %v2141 = vsel %vm327, %v2138, %v2140
      %v2142 = vsel %vm327, %v2136, %v2138
      %2143 = vrot.lane.b32.xlu0 %v2091, 91
      %v2144 = vpop.permute.xlu0 %2143
      %2145 = vrot.lane.b32.xlu0 %v2092, 91
      %v2146 = vpop.permute.xlu0 %2145
      %2147 = vrot.lane.b32.xlu0 %v2093, 91
      %v2148 = vpop.permute.xlu0 %2147
      %v2149 = vsel %vm336, %v2146, %v2148
      %v2150 = vsel %vm336, %v2144, %v2146
      %2151 = vrot.lane.b32.xlu0 %v2091, 90
      %v2152 = vpop.permute.xlu0 %2151
      %2153 = vrot.lane.b32.xlu0 %v2092, 90
      %v2154 = vpop.permute.xlu0 %2153
      %2155 = vrot.lane.b32.xlu0 %v2093, 90
      %v2156 = vpop.permute.xlu0 %2155
      %v2157 = vsel %vm345, %v2154, %v2156
      %v2158 = vsel %vm345, %v2152, %v2154
      %2159 = vrot.lane.b32.xlu0 %v2091, 89
      %v2160 = vpop.permute.xlu0 %2159
      %2161 = vrot.lane.b32.xlu0 %v2092, 89
      %v2162 = vpop.permute.xlu0 %2161
      %2163 = vrot.lane.b32.xlu0 %v2093, 89
      %v2164 = vpop.permute.xlu0 %2163
      %v2165 = vsel %vm354, %v2162, %v2164
      %v2166 = vsel %vm354, %v2160, %v2162
      %2167 = vrot.lane.b32.xlu0 %v2091, 11
      %v2168 = vpop.permute.xlu0 %2167
      %2169 = vrot.lane.b32.xlu0 %v2092, 11
      %v2170 = vpop.permute.xlu0 %2169
      %2171 = vrot.lane.b32.xlu0 %v2093, 11
      %v2172 = vpop.permute.xlu0 %2171
      %v2173 = vsel %vm363, %v2170, %v2172
      %v2174 = vsel %vm363, %v2168, %v2170
      %2175 = vrot.lane.b32.xlu0 %v2091, 10
      %v2176 = vpop.permute.xlu0 %2175
      %2177 = vrot.lane.b32.xlu0 %v2092, 10
      %v2178 = vpop.permute.xlu0 %2177
      %2179 = vrot.lane.b32.xlu0 %v2093, 10
      %v2180 = vpop.permute.xlu0 %2179
      %v2181 = vsel %vm372, %v2178, %v2180
      %v2182 = vsel %vm372, %v2176, %v2178
      %2183 = vrot.lane.b32.xlu0 %v2091, 9
      %v2184 = vpop.permute.xlu0 %2183
      %2185 = vrot.lane.b32.xlu0 %v2092, 9
      %v2186 = vpop.permute.xlu0 %2185
      %2187 = vrot.lane.b32.xlu0 %v2093, 9
      %v2188 = vpop.permute.xlu0 %2187
      %v2189 = vsel %vm381, %v2186, %v2188
      %v2190 = vsel %vm381, %v2184, %v2186
      %2191 = vrot.lane.b32.xlu0 %v2091, 1
      %v2192 = vpop.permute.xlu0 %2191
      %2193 = vrot.lane.b32.xlu0 %v2092, 1
      %v2194 = vpop.permute.xlu0 %2193
      %2195 = vrot.lane.b32.xlu0 %v2093, 1
      %v2196 = vpop.permute.xlu0 %2195
      %v2197 = vsel %vm390, %v2194, %v2196
      %v2198 = vsel %vm390, %v2192, %v2194
      %2199 = vrot.lane.b32.xlu0 %v2092, 127
      %v2200 = vpop.permute.xlu0 %2199
      %2201 = vrot.lane.b32.xlu0 %v2093, 127
      %v2202 = vpop.permute.xlu0 %2201
      %2203 = vrot.lane.b32.xlu0 %v2094, 127
      %v2204 = vpop.permute.xlu0 %2203
      %v2205 = vsel %vm399, %v2202, %v2204
      %v2206 = vsel %vm399, %v2200, %v2202
      %2207 = vrot.lane.b32.xlu0 %v2092, 119
      %v2208 = vpop.permute.xlu0 %2207
      %2209 = vrot.lane.b32.xlu0 %v2093, 119
      %v2210 = vpop.permute.xlu0 %2209
      %2211 = vrot.lane.b32.xlu0 %v2094, 119
      %v2212 = vpop.permute.xlu0 %2211
      %v2213 = vsel %vm408, %v2210, %v2212
      %v2214 = vsel %vm408, %v2208, %v2210
      %2215 = vrot.lane.b32.xlu0 %v2092, 118
      %v2216 = vpop.permute.xlu0 %2215
      %2217 = vrot.lane.b32.xlu0 %v2093, 118
      %v2218 = vpop.permute.xlu0 %2217
      %2219 = vrot.lane.b32.xlu0 %v2094, 118
      %v2220 = vpop.permute.xlu0 %2219
      %v2221 = vsel %vm417, %v2218, %v2220
      %v2222 = vsel %vm417, %v2216, %v2218
      %2223 = vrot.lane.b32.xlu0 %v2092, 117
      %v2224 = vpop.permute.xlu0 %2223
      %2225 = vrot.lane.b32.xlu0 %v2093, 117
      %v2226 = vpop.permute.xlu0 %2225
      %2227 = vrot.lane.b32.xlu0 %v2094, 117
      %v2228 = vpop.permute.xlu0 %2227
      %v2229 = vsel %vm426, %v2226, %v2228
      %v2230 = vsel %vm426, %v2224, %v2226
      %2231 = vrot.lane.b32.xlu0 %v2092, 39
      %v2232 = vpop.permute.xlu0 %2231
      %2233 = vrot.lane.b32.xlu0 %v2093, 39
      %v2234 = vpop.permute.xlu0 %2233
      %2235 = vrot.lane.b32.xlu0 %v2094, 39
      %v2236 = vpop.permute.xlu0 %2235
      %v2237 = vsel %vm435, %v2234, %v2236
      %v2238 = vsel %vm435, %v2232, %v2234
      %2239 = vrot.lane.b32.xlu0 %v2092, 38
      %v2240 = vpop.permute.xlu0 %2239
      %2241 = vrot.lane.b32.xlu0 %v2093, 38
      %v2242 = vpop.permute.xlu0 %2241
      %2243 = vrot.lane.b32.xlu0 %v2094, 38
      %v2244 = vpop.permute.xlu0 %2243
      %v2245 = vsel %vm444, %v2242, %v2244
      %v2246 = vsel %vm444, %v2240, %v2242
      %2247 = vrot.lane.b32.xlu0 %v2092, 37
      %v2248 = vpop.permute.xlu0 %2247
      %2249 = vrot.lane.b32.xlu0 %v2093, 37
      %v2250 = vpop.permute.xlu0 %2249
      %2251 = vrot.lane.b32.xlu0 %v2094, 37
      %v2252 = vpop.permute.xlu0 %2251
      %v2253 = vsel %vm453, %v2250, %v2252
      %v2254 = vsel %vm453, %v2248, %v2250
      %2255 = vrot.lane.b32.xlu0 %v2092, 29
      %v2256 = vpop.permute.xlu0 %2255
      %2257 = vrot.lane.b32.xlu0 %v2093, 29
      %v2258 = vpop.permute.xlu0 %2257
      %2259 = vrot.lane.b32.xlu0 %v2094, 29
      %v2260 = vpop.permute.xlu0 %2259
      %v2261 = vsel %vm462, %v2258, %v2260
      %v2262 = vsel %vm462, %v2256, %v2258
      %2263 = vrot.lane.b32.xlu0 %v2092, 28
      %v2264 = vpop.permute.xlu0 %2263
      %2265 = vrot.lane.b32.xlu0 %v2093, 28
      %v2266 = vpop.permute.xlu0 %2265
      %2267 = vrot.lane.b32.xlu0 %v2094, 28
      %v2268 = vpop.permute.xlu0 %2267
      %v2269 = vsel %vm471, %v2266, %v2268
      %v2270 = vsel %vm471, %v2264, %v2266
      %2271 = vrot.lane.b32.xlu0 %v2092, 27
      %v2272 = vpop.permute.xlu0 %2271
      %2273 = vrot.lane.b32.xlu0 %v2093, 27
      %v2274 = vpop.permute.xlu0 %2273
      %2275 = vrot.lane.b32.xlu0 %v2094, 27
      %v2276 = vpop.permute.xlu0 %2275
      %v2277 = vsel %vm480, %v2274, %v2276
      %v2278 = vsel %vm480, %v2272, %v2274
      %2279 = vrot.lane.b32.xlu0 %v2092, 19
      %v2280 = vpop.permute.xlu0 %2279
      %2281 = vrot.lane.b32.xlu0 %v2093, 19
      %v2282 = vpop.permute.xlu0 %2281
      %2283 = vrot.lane.b32.xlu0 %v2094, 19
      %v2284 = vpop.permute.xlu0 %2283
      %v2285 = vsel %vm489, %v2282, %v2284
      %v2286 = vsel %vm489, %v2280, %v2282
      %2287 = vrot.lane.b32.xlu0 %v2092, 18
      %v2288 = vpop.permute.xlu0 %2287
      %2289 = vrot.lane.b32.xlu0 %v2093, 18
      %v2290 = vpop.permute.xlu0 %2289
      %2291 = vrot.lane.b32.xlu0 %v2094, 18
      %v2292 = vpop.permute.xlu0 %2291
      %v2293 = vsel %vm498, %v2290, %v2292
      %v2294 = vsel %vm498, %v2288, %v2290
      %2295 = vrot.lane.b32.xlu0 %v2092, 17
      %v2296 = vpop.permute.xlu0 %2295
      %2297 = vrot.lane.b32.xlu0 %v2093, 17
      %v2298 = vpop.permute.xlu0 %2297
      %2299 = vrot.lane.b32.xlu0 %v2094, 17
      %v2300 = vpop.permute.xlu0 %2299
      %v2301 = vsel %vm507, %v2298, %v2300
      %v2302 = vsel %vm507, %v2296, %v2298
      %2303 = vmatprep.subr.mxu0 %v2101
      %2304 = vmatpush1.msra.mxu0 %v2102
      %2305 = vmatprep.subr.mxu0 %v2109
      %2306 = vmatpush1.msra.mxu0 %v2110
      %2307 = vmatprep.subr.mxu0 %v2117
      %2308 = vmatpush1.msra.mxu0 %v2118
      %2309 = vmatprep.subr.mxu0 %v2125
      %2310 = vmatpush1.msra.mxu0 %v2126
      %2311 = vmatprep.subr.mxu0 %v2133
      %2312 = vmatpush1.msra.mxu0 %v2134
      %2313 = vmatprep.subr.mxu0 %v2141
      %2314 = vmatpush1.msra.mxu0 %v2142
      %2315 = vmatprep.subr.mxu0 %v2149
      %2316 = vmatpush1.msra.mxu0 %v2150
      %2317 = vmatprep.subr.mxu0 %v2157
      %2318 = vmatpush1.msra.mxu0 %v2158
      %2319 = vmatprep.subr.mxu0 %v2165
      %2320 = vmatpush1.msra.mxu0 %v2166
      %2321 = vmatprep.subr.mxu0 %v2173
      %2322 = vmatpush1.msra.mxu0 %v2174
      %2323 = vmatprep.subr.mxu0 %v2181
      %2324 = vmatpush1.msra.mxu0 %v2182
      %2325 = vmatprep.subr.mxu0 %v2189
      %2326 = vmatpush1.msra.mxu0 %v2190
      %2327 = vmatprep.subr.mxu0 %v2197
      %2328 = vmatpush1.msra.mxu0 %v2198
      %2329 = vmatprep.subr.mxu0 %v2093
      %2330 = vmatpush1.msra.mxu0 %v2092
      %2331 = vmatprep.subr.mxu0 %v2205
      %2332 = vmatpush1.msra.mxu0 %v2206
      %2333 = vmatprep.subr.mxu0 %v2213
      %2334 = vmatpush1.msra.mxu0 %v2214
      %2335 = vmatprep.subr.mxu0 %v2221
      %2336 = vmatpush1.msra.mxu0 %v2222
      %2337 = vmatprep.subr.mxu0 %v2229
      %2338 = vmatpush1.msra.mxu0 %v2230
      %2339 = vmatprep.subr.mxu0 %v2237
      %2340 = vmatpush1.msra.mxu0 %v2238
      %2341 = vmatprep.subr.mxu0 %v2245
      %2342 = vmatpush1.msra.mxu0 %v2246
      %2343 = vmatprep.subr.mxu0 %v2253
      %2344 = vmatpush1.msra.mxu0 %v2254
      %2345 = vmatprep.subr.mxu0 %v2261
      %2346 = vmatpush1.msra.mxu0 %v2262
      %2347 = vmatprep.subr.mxu0 %v2269
      %2348 = vmatpush1.msra.mxu0 %v2270
      %2349 = vmatprep.subr.mxu0 %v2277
      %2350 = vmatpush1.msra.mxu0 %v2278
      %2351 = vmatprep.subr.mxu0 %v2285
      %2352 = vmatpush1.msra.mxu0 %v2286
      %2353 = vmatprep.subr.mxu0 %v2293
      %2354 = vmatpush1.msra.mxu0 %v2294
      %2355 = vmatprep.subr.mxu0 %v2301
      %2356 = vmatpush1.msra.mxu0 %v2302
      %2357 = vmatprep.subr.mxu0 0.0
      %2358 = vmatpush1.msra.mxu0 0.0
      %2359 = vmatprep.subr.mxu0 0.0
      %2360 = vmatpush1.msra.mxu0 0.0
      %2361 = vmatprep.subr.mxu0 0.0
      %2362 = vmatpush1.msra.mxu0 0.0
      %2363 = vmatprep.subr.mxu0 0.0
      %2364 = vmatpush1.msra.mxu0 0.0
      %2365 = vmatprep.subr.mxu0 0.0
      %2366 = vmatpush1.msra.mxu0 0.0
      %2367 = vmatprep.mubr.f32.mxu0 %v1719
      %2368 = vmatmul.mubr.f32.gmra.mrb[0].mxu0 %v256
      %v2369 = vpop.f32.mrb[0].mxu0
      %v2370 = vadd.f32 %v268, %v2369
      %v2371 = vpop.f32.mrb[0].mxu0
      %v2372 = vadd.f32 %v268, %v2371
      %2373 = vdwg.mxu0
      %v2374 = vld [vmem:[%s246 + $0x28] sm:$0xff]
      %v2375 = vld [vmem:[%s246 + $0x30] sm:$0xff]
      %v2376 = vadd.f32 %v2370, %v2374
      %v2377 = vadd.f32 %v2372, %v2375
      %v2378 = vmax.f32 %v2376, 0.0
      %v2379 = vmax.f32 %v2377, 0.0
      %2380 = vst [vmem:[%s251 + $0x20] sm:$0xff] %v2378
      %2381 = vst [vmem:[%s251 + $0x28] sm:$0xff] %v2379
      %v2382 = vld [vmem:[#allocation2 + $0x30] sm:$0xff]
      %v2383 = vld [vmem:[#allocation2 + $0x38] sm:$0xff]
      %v2384 = vld [vmem:[#allocation2 + $0x40] sm:$0xff]
      %v2385 = vld [vmem:[#allocation2 + $0x48] sm:$0xff]
      %2386 = vrot.lane.b32.xlu0 %v2382, 111
      %v2387 = vpop.permute.xlu0 %2386
      %2388 = vrot.lane.b32.xlu0 %v2383, 111
      %v2389 = vpop.permute.xlu0 %2388
      %2390 = vrot.lane.b32.xlu0 %v2384, 111
      %v2391 = vpop.permute.xlu0 %2390
      %v2392 = vsel %vm282, %v2389, %v2391
      %v2393 = vsel %vm282, %v2387, %v2389
      %2394 = vrot.lane.b32.xlu0 %v2382, 110
      %v2395 = vpop.permute.xlu0 %2394
      %2396 = vrot.lane.b32.xlu0 %v2383, 110
      %v2397 = vpop.permute.xlu0 %2396
      %2398 = vrot.lane.b32.xlu0 %v2384, 110
      %v2399 = vpop.permute.xlu0 %2398
      %v2400 = vsel %vm291, %v2397, %v2399
      %v2401 = vsel %vm291, %v2395, %v2397
      %2402 = vrot.lane.b32.xlu0 %v2382, 109
      %v2403 = vpop.permute.xlu0 %2402
      %2404 = vrot.lane.b32.xlu0 %v2383, 109
      %v2405 = vpop.permute.xlu0 %2404
      %2406 = vrot.lane.b32.xlu0 %v2384, 109
      %v2407 = vpop.permute.xlu0 %2406
      %v2408 = vsel %vm300, %v2405, %v2407
      %v2409 = vsel %vm300, %v2403, %v2405
      %2410 = vrot.lane.b32.xlu0 %v2382, 101
      %v2411 = vpop.permute.xlu0 %2410
      %2412 = vrot.lane.b32.xlu0 %v2383, 101
      %v2413 = vpop.permute.xlu0 %2412
      %2414 = vrot.lane.b32.xlu0 %v2384, 101
      %v2415 = vpop.permute.xlu0 %2414
      %v2416 = vsel %vm309, %v2413, %v2415
      %v2417 = vsel %vm309, %v2411, %v2413
      %2418 = vrot.lane.b32.xlu0 %v2382, 100
      %v2419 = vpop.permute.xlu0 %2418
      %2420 = vrot.lane.b32.xlu0 %v2383, 100
      %v2421 = vpop.permute.xlu0 %2420
      %2422 = vrot.lane.b32.xlu0 %v2384, 100
      %v2423 = vpop.permute.xlu0 %2422
      %v2424 = vsel %vm318, %v2421, %v2423
      %v2425 = vsel %vm318, %v2419, %v2421
      %2426 = vrot.lane.b32.xlu0 %v2382, 99
      %v2427 = vpop.permute.xlu0 %2426
      %2428 = vrot.lane.b32.xlu0 %v2383, 99
      %v2429 = vpop.permute.xlu0 %2428
      %2430 = vrot.lane.b32.xlu0 %v2384, 99
      %v2431 = vpop.permute.xlu0 %2430
      %v2432 = vsel %vm327, %v2429, %v2431
      %v2433 = vsel %vm327, %v2427, %v2429
      %2434 = vrot.lane.b32.xlu0 %v2382, 91
      %v2435 = vpop.permute.xlu0 %2434
      %2436 = vrot.lane.b32.xlu0 %v2383, 91
      %v2437 = vpop.permute.xlu0 %2436
      %2438 = vrot.lane.b32.xlu0 %v2384, 91
      %v2439 = vpop.permute.xlu0 %2438
      %v2440 = vsel %vm336, %v2437, %v2439
      %v2441 = vsel %vm336, %v2435, %v2437
      %2442 = vrot.lane.b32.xlu0 %v2382, 90
      %v2443 = vpop.permute.xlu0 %2442
      %2444 = vrot.lane.b32.xlu0 %v2383, 90
      %v2445 = vpop.permute.xlu0 %2444
      %2446 = vrot.lane.b32.xlu0 %v2384, 90
      %v2447 = vpop.permute.xlu0 %2446
      %v2448 = vsel %vm345, %v2445, %v2447
      %v2449 = vsel %vm345, %v2443, %v2445
      %2450 = vrot.lane.b32.xlu0 %v2382, 89
      %v2451 = vpop.permute.xlu0 %2450
      %2452 = vrot.lane.b32.xlu0 %v2383, 89
      %v2453 = vpop.permute.xlu0 %2452
      %2454 = vrot.lane.b32.xlu0 %v2384, 89
      %v2455 = vpop.permute.xlu0 %2454
      %v2456 = vsel %vm354, %v2453, %v2455
      %v2457 = vsel %vm354, %v2451, %v2453
      %2458 = vrot.lane.b32.xlu0 %v2382, 11
      %v2459 = vpop.permute.xlu0 %2458
      %2460 = vrot.lane.b32.xlu0 %v2383, 11
      %v2461 = vpop.permute.xlu0 %2460
      %2462 = vrot.lane.b32.xlu0 %v2384, 11
      %v2463 = vpop.permute.xlu0 %2462
      %v2464 = vsel %vm363, %v2461, %v2463
      %v2465 = vsel %vm363, %v2459, %v2461
      %2466 = vrot.lane.b32.xlu0 %v2382, 10
      %v2467 = vpop.permute.xlu0 %2466
      %2468 = vrot.lane.b32.xlu0 %v2383, 10
      %v2469 = vpop.permute.xlu0 %2468
      %2470 = vrot.lane.b32.xlu0 %v2384, 10
      %v2471 = vpop.permute.xlu0 %2470
      %v2472 = vsel %vm372, %v2469, %v2471
      %v2473 = vsel %vm372, %v2467, %v2469
      %2474 = vrot.lane.b32.xlu0 %v2382, 9
      %v2475 = vpop.permute.xlu0 %2474
      %2476 = vrot.lane.b32.xlu0 %v2383, 9
      %v2477 = vpop.permute.xlu0 %2476
      %2478 = vrot.lane.b32.xlu0 %v2384, 9
      %v2479 = vpop.permute.xlu0 %2478
      %v2480 = vsel %vm381, %v2477, %v2479
      %v2481 = vsel %vm381, %v2475, %v2477
      %2482 = vrot.lane.b32.xlu0 %v2382, 1
      %v2483 = vpop.permute.xlu0 %2482
      %2484 = vrot.lane.b32.xlu0 %v2383, 1
      %v2485 = vpop.permute.xlu0 %2484
      %2486 = vrot.lane.b32.xlu0 %v2384, 1
      %v2487 = vpop.permute.xlu0 %2486
      %v2488 = vsel %vm390, %v2485, %v2487
      %v2489 = vsel %vm390, %v2483, %v2485
      %2490 = vrot.lane.b32.xlu0 %v2383, 127
      %v2491 = vpop.permute.xlu0 %2490
      %2492 = vrot.lane.b32.xlu0 %v2384, 127
      %v2493 = vpop.permute.xlu0 %2492
      %2494 = vrot.lane.b32.xlu0 %v2385, 127
      %v2495 = vpop.permute.xlu0 %2494
      %v2496 = vsel %vm399, %v2493, %v2495
      %v2497 = vsel %vm399, %v2491, %v2493
      %2498 = vrot.lane.b32.xlu0 %v2383, 119
      %v2499 = vpop.permute.xlu0 %2498
      %2500 = vrot.lane.b32.xlu0 %v2384, 119
      %v2501 = vpop.permute.xlu0 %2500
      %2502 = vrot.lane.b32.xlu0 %v2385, 119
      %v2503 = vpop.permute.xlu0 %2502
      %v2504 = vsel %vm408, %v2501, %v2503
      %v2505 = vsel %vm408, %v2499, %v2501
      %2506 = vrot.lane.b32.xlu0 %v2383, 118
      %v2507 = vpop.permute.xlu0 %2506
      %2508 = vrot.lane.b32.xlu0 %v2384, 118
      %v2509 = vpop.permute.xlu0 %2508
      %2510 = vrot.lane.b32.xlu0 %v2385, 118
      %v2511 = vpop.permute.xlu0 %2510
      %v2512 = vsel %vm417, %v2509, %v2511
      %v2513 = vsel %vm417, %v2507, %v2509
      %2514 = vrot.lane.b32.xlu0 %v2383, 117
      %v2515 = vpop.permute.xlu0 %2514
      %2516 = vrot.lane.b32.xlu0 %v2384, 117
      %v2517 = vpop.permute.xlu0 %2516
      %2518 = vrot.lane.b32.xlu0 %v2385, 117
      %v2519 = vpop.permute.xlu0 %2518
      %v2520 = vsel %vm426, %v2517, %v2519
      %v2521 = vsel %vm426, %v2515, %v2517
      %2522 = vrot.lane.b32.xlu0 %v2383, 39
      %v2523 = vpop.permute.xlu0 %2522
      %2524 = vrot.lane.b32.xlu0 %v2384, 39
      %v2525 = vpop.permute.xlu0 %2524
      %2526 = vrot.lane.b32.xlu0 %v2385, 39
      %v2527 = vpop.permute.xlu0 %2526
      %v2528 = vsel %vm435, %v2525, %v2527
      %v2529 = vsel %vm435, %v2523, %v2525
      %2530 = vrot.lane.b32.xlu0 %v2383, 38
      %v2531 = vpop.permute.xlu0 %2530
      %2532 = vrot.lane.b32.xlu0 %v2384, 38
      %v2533 = vpop.permute.xlu0 %2532
      %2534 = vrot.lane.b32.xlu0 %v2385, 38
      %v2535 = vpop.permute.xlu0 %2534
      %v2536 = vsel %vm444, %v2533, %v2535
      %v2537 = vsel %vm444, %v2531, %v2533
      %2538 = vrot.lane.b32.xlu0 %v2383, 37
      %v2539 = vpop.permute.xlu0 %2538
      %2540 = vrot.lane.b32.xlu0 %v2384, 37
      %v2541 = vpop.permute.xlu0 %2540
      %2542 = vrot.lane.b32.xlu0 %v2385, 37
      %v2543 = vpop.permute.xlu0 %2542
      %v2544 = vsel %vm453, %v2541, %v2543
      %v2545 = vsel %vm453, %v2539, %v2541
      %2546 = vrot.lane.b32.xlu0 %v2383, 29
      %v2547 = vpop.permute.xlu0 %2546
      %2548 = vrot.lane.b32.xlu0 %v2384, 29
      %v2549 = vpop.permute.xlu0 %2548
      %2550 = vrot.lane.b32.xlu0 %v2385, 29
      %v2551 = vpop.permute.xlu0 %2550
      %v2552 = vsel %vm462, %v2549, %v2551
      %v2553 = vsel %vm462, %v2547, %v2549
      %2554 = vrot.lane.b32.xlu0 %v2383, 28
      %v2555 = vpop.permute.xlu0 %2554
      %2556 = vrot.lane.b32.xlu0 %v2384, 28
      %v2557 = vpop.permute.xlu0 %2556
      %2558 = vrot.lane.b32.xlu0 %v2385, 28
      %v2559 = vpop.permute.xlu0 %2558
      %v2560 = vsel %vm471, %v2557, %v2559
      %v2561 = vsel %vm471, %v2555, %v2557
      %2562 = vrot.lane.b32.xlu0 %v2383, 27
      %v2563 = vpop.permute.xlu0 %2562
      %2564 = vrot.lane.b32.xlu0 %v2384, 27
      %v2565 = vpop.permute.xlu0 %2564
      %2566 = vrot.lane.b32.xlu0 %v2385, 27
      %v2567 = vpop.permute.xlu0 %2566
      %v2568 = vsel %vm480, %v2565, %v2567
      %v2569 = vsel %vm480, %v2563, %v2565
      %2570 = vrot.lane.b32.xlu0 %v2383, 19
      %v2571 = vpop.permute.xlu0 %2570
      %2572 = vrot.lane.b32.xlu0 %v2384, 19
      %v2573 = vpop.permute.xlu0 %2572
      %2574 = vrot.lane.b32.xlu0 %v2385, 19
      %v2575 = vpop.permute.xlu0 %2574
      %v2576 = vsel %vm489, %v2573, %v2575
      %v2577 = vsel %vm489, %v2571, %v2573
      %2578 = vrot.lane.b32.xlu0 %v2383, 18
      %v2579 = vpop.permute.xlu0 %2578
      %2580 = vrot.lane.b32.xlu0 %v2384, 18
      %v2581 = vpop.permute.xlu0 %2580
      %2582 = vrot.lane.b32.xlu0 %v2385, 18
      %v2583 = vpop.permute.xlu0 %2582
      %v2584 = vsel %vm498, %v2581, %v2583
      %v2585 = vsel %vm498, %v2579, %v2581
      %2586 = vrot.lane.b32.xlu0 %v2383, 17
      %v2587 = vpop.permute.xlu0 %2586
      %2588 = vrot.lane.b32.xlu0 %v2384, 17
      %v2589 = vpop.permute.xlu0 %2588
      %2590 = vrot.lane.b32.xlu0 %v2385, 17
      %v2591 = vpop.permute.xlu0 %2590
      %v2592 = vsel %vm507, %v2589, %v2591
      %v2593 = vsel %vm507, %v2587, %v2589
      %2594 = vmatprep.subr.mxu0 %v2392
      %2595 = vmatpush1.msra.mxu0 %v2393
      %2596 = vmatprep.subr.mxu0 %v2400
      %2597 = vmatpush1.msra.mxu0 %v2401
      %2598 = vmatprep.subr.mxu0 %v2408
      %2599 = vmatpush1.msra.mxu0 %v2409
      %2600 = vmatprep.subr.mxu0 %v2416
      %2601 = vmatpush1.msra.mxu0 %v2417
      %2602 = vmatprep.subr.mxu0 %v2424
      %2603 = vmatpush1.msra.mxu0 %v2425
      %2604 = vmatprep.subr.mxu0 %v2432
      %2605 = vmatpush1.msra.mxu0 %v2433
      %2606 = vmatprep.subr.mxu0 %v2440
      %2607 = vmatpush1.msra.mxu0 %v2441
      %2608 = vmatprep.subr.mxu0 %v2448
      %2609 = vmatpush1.msra.mxu0 %v2449
      %2610 = vmatprep.subr.mxu0 %v2456
      %2611 = vmatpush1.msra.mxu0 %v2457
      %2612 = vmatprep.subr.mxu0 %v2464
      %2613 = vmatpush1.msra.mxu0 %v2465
      %2614 = vmatprep.subr.mxu0 %v2472
      %2615 = vmatpush1.msra.mxu0 %v2473
      %2616 = vmatprep.subr.mxu0 %v2480
      %2617 = vmatpush1.msra.mxu0 %v2481
      %2618 = vmatprep.subr.mxu0 %v2488
      %2619 = vmatpush1.msra.mxu0 %v2489
      %2620 = vmatprep.subr.mxu0 %v2384
      %2621 = vmatpush1.msra.mxu0 %v2383
      %2622 = vmatprep.subr.mxu0 %v2496
      %2623 = vmatpush1.msra.mxu0 %v2497
      %2624 = vmatprep.subr.mxu0 %v2504
      %2625 = vmatpush1.msra.mxu0 %v2505
      %2626 = vmatprep.subr.mxu0 %v2512
      %2627 = vmatpush1.msra.mxu0 %v2513
      %2628 = vmatprep.subr.mxu0 %v2520
      %2629 = vmatpush1.msra.mxu0 %v2521
      %2630 = vmatprep.subr.mxu0 %v2528
      %2631 = vmatpush1.msra.mxu0 %v2529
      %2632 = vmatprep.subr.mxu0 %v2536
      %2633 = vmatpush1.msra.mxu0 %v2537
      %2634 = vmatprep.subr.mxu0 %v2544
      %2635 = vmatpush1.msra.mxu0 %v2545
      %2636 = vmatprep.subr.mxu0 %v2552
      %2637 = vmatpush1.msra.mxu0 %v2553
      %2638 = vmatprep.subr.mxu0 %v2560
      %2639 = vmatpush1.msra.mxu0 %v2561
      %2640 = vmatprep.subr.mxu0 %v2568
      %2641 = vmatpush1.msra.mxu0 %v2569
      %2642 = vmatprep.subr.mxu0 %v2576
      %2643 = vmatpush1.msra.mxu0 %v2577
      %2644 = vmatprep.subr.mxu0 %v2584
      %2645 = vmatpush1.msra.mxu0 %v2585
      %2646 = vmatprep.subr.mxu0 %v2592
      %2647 = vmatpush1.msra.mxu0 %v2593
      %2648 = vmatprep.subr.mxu0 0.0
      %2649 = vmatpush1.msra.mxu0 0.0
      %2650 = vmatprep.subr.mxu0 0.0
      %2651 = vmatpush1.msra.mxu0 0.0
      %2652 = vmatprep.subr.mxu0 0.0
      %2653 = vmatpush1.msra.mxu0 0.0
      %2654 = vmatprep.subr.mxu0 0.0
      %2655 = vmatpush1.msra.mxu0 0.0
      %2656 = vmatprep.subr.mxu0 0.0
      %2657 = vmatpush1.msra.mxu0 0.0
      %2658 = vmatprep.mubr.f32.mxu0 %v1719
      %2659 = vmatmul.mubr.f32.gmra.mrb[0].mxu0 %v256
      %v2660 = vpop.f32.mrb[0].mxu0
      %v2661 = vadd.f32 %v268, %v2660
      %v2662 = vpop.f32.mrb[0].mxu0
      %v2663 = vadd.f32 %v268, %v2662
      %2664 = vdwg.mxu0
      %v2665 = vld [vmem:[%s246 + $0x38] sm:$0xff]
      %v2666 = vld [vmem:[%s246 + $0x40] sm:$0xff]
      %v2667 = vadd.f32 %v2661, %v2665
      %v2668 = vadd.f32 %v2663, %v2666
      %v2669 = vmax.f32 %v2667, 0.0
      %v2670 = vmax.f32 %v2668, 0.0
      %2671 = vst [vmem:[%s251 + $0x30] sm:$0xff] %v2669
      %2672 = vst [vmem:[%s251 + $0x38] sm:$0xff] %v2670
      %p2673 = scmp.lt.s32.totalorder %s17, 1
      %s2674 = scalar_select %p2673, %s17, 1
      %s2675 = smul.addr %s2674, 8
      %s2676 = smul.addr %s2675, 8
      %s2677 = scalar_lea.vmem %s6, %s2676
      // Predicated region
      $region45: #{_lambda_.1} parent=43 // pred_check
        %p2678 = pneg %p166
      $region46: #{_lambda_.1} parent=43 // pred_check_branch
        %2680 = sbr.rel (%p2678) target = $region48
      $region47: #{_lambda_.1} parent=43 // pred_region
        _
      $region48: #{_lambda_.1} parent=43 // pred_fallthru
        _
    $region44: #{_lambda_.1} parent=5 // pred_fallthru
      _
    %p2681 = scmp.le.s32.totalorder 2, %s12
    // Predicated region
    $region49: #{_lambda_.1} parent=5 // pred_check
      %p2682 = pneg %p2681
    $region50: #{_lambda_.1} parent=5 // pred_check_branch
      %2684 = sbr.rel (%p2682) target = $region52
    $region51: #{_lambda_.1} parent=5 // pred_region
      %s2685 = ssub.s32 %s12, 2
      // Predicated region
      $region53: #{_lambda_.1} parent=51 // pred_check
        %p2686 = pneg %p172
      $region54: #{_lambda_.1} parent=51 // pred_check_branch
        %2688 = sbr.rel (%p2686) target = $region56
      $region55: #{_lambda_.1} parent=51 // pred_region
        %p2689 = scmp.lt.s32.totalorder %s18, 1
        %s2690 = scalar_select %p2689, %s18, 1
        %s2691 = smul.addr %s2690, 8
        %s2692 = smul.addr %s2691, 8
        %s2693 = scalar_lea.vmem %s6, %s2692
      $region56: #{_lambda_.1} parent=51 // pred_fallthru
        _
    $region52: #{_lambda_.1} parent=5 // pred_fallthru
      _
  $region6: #{_lambda_.1} parent=0 // loop_footer
    %s16 = sadd.s32 1, %s12
  $region7: #{_lambda_.1} parent=0 // loop_footer_branch
    %11 = sbr.rel target = $region3
  $region8: #{_lambda_.1} parent=0 // loop_exit
    _

</llo_original>
